<compile_context>
chip_gen: v5e
topology: v5e:2x2
jax: 0.10.0
libtpu: 0.0.40
codegen_flags: <defaults>
</compile_context>

<pallas_src>
import functools

import jax
import jax.numpy as jnp
from jax import lax
from jax.experimental import pallas as pl
from jax.experimental.pallas import tpu as pltpu


def _bottleneck_kernel(x_ref, w1_ref, b1_ref, w2_ref, b2_ref, w3_ref, b3_ref,
                       o_ref, *, h_tile):
    """Grid = (batch, H // h_tile).

    x_ref  : (1, H, W, Cin)      bf16  whole image, resident per batch element
    w1_ref : (Cin, P)            bf16  1x1 conv, BN1 scale folded in
    w2_ref : (9, P, P)           bf16  3x3 conv (kh*3+kw major), BN2 scale folded in
    w3_ref : (P, Cin)            bf16  1x1 conv, BN3 scale folded in
    b*_ref : (1, C)              f32   folded BatchNorm biases
    o_ref  : (1, h_tile, W, Cin) bf16
    """
    _, H, W, Cin = x_ref.shape
    P = w1_ref.shape[1]
    Ht = h_tile

    # First output row of this spatial tile.
    r0 = pl.multiple_of(pl.program_id(1) * Ht, Ht)

    # ---- tile rows + 1-row halo (clamped reads; invalid rows zeroed below) ----
    rt = jnp.maximum(r0 - 1, 0)          # clamped top-halo row (always in range)
    rb = jnp.minimum(r0 + Ht, H - 1)     # clamped bottom-halo row
    x_halo = jnp.concatenate(
        [x_ref[0, pl.ds(rt, 1), :, :],
         x_ref[0, pl.ds(r0, Ht), :, :],
         x_ref[0, pl.ds(rb, 1), :, :]], axis=0)             # (Ht+2, W, Cin) bf16

    # ---- conv1 (1x1, BN-folded) + bias + relu ---------------------------------
    a1 = jnp.dot(x_halo.reshape((Ht + 2) * W, Cin), w1_ref[...],
                 preferred_element_type=jnp.float32)
    a1 = jnp.maximum(a1 + b1_ref[...], 0.0).reshape(Ht + 2, W, P)

    # Rows outside the image must contribute exactly zero to conv2 (its SAME
    # padding), so zero them AFTER bias/relu.  grow = global row of each halo row.
    grow = r0 - 1 + lax.broadcasted_iota(jnp.int32, (Ht + 2, 1, 1), 0)
    a1 = jnp.where((grow >= 0) & (grow < H), a1, 0.0).astype(jnp.bfloat16)

    # ---- conv2 (3x3, stride 1, pad 1): 9 accumulating matmuls (no im2col) -----
    zcol = jnp.zeros((Ht + 2, 1, P), jnp.bfloat16)
    a1p = jnp.concatenate([zcol, a1, zcol], axis=1)          # (Ht+2, W+2, P)
    acc = jnp.zeros((Ht * W, P), jnp.float32)
    for ky in range(3):
        for kx in range(3):
            tap = a1p[ky:ky + Ht, kx:kx + W, :].reshape(Ht * W, P)
            acc = acc + jnp.dot(tap, w2_ref[ky * 3 + kx],
                                preferred_element_type=jnp.float32)
    o2 = jnp.maximum(acc + b2_ref[...], 0.0).astype(jnp.bfloat16)

    # ---- conv3 (1x1, BN-folded) + bias + residual add + relu ------------------
    o3 = jnp.dot(o2, w3_ref[...], preferred_element_type=jnp.float32)
    o3 = o3 + b3_ref[...]                                    # (Ht*W, Cin) f32
    # Residual re-read from the resident VMEM x block (keeps live ranges short).
    res = x_ref[0, pl.ds(r0, Ht), :, :].reshape(Ht * W, Cin).astype(jnp.float32)
    out = jnp.maximum(o3 + res, 0.0)
    o_ref[...] = out.reshape(1, Ht, W, Cin).astype(o_ref.dtype)


def _pick_h_tile(H, requested):
    """Largest divisor of H that is <= requested (never silently jumps to H)."""
    h = max(1, min(requested, H))
    while H % h != 0:
        h -= 1
    return h


def bottleneck_forward_nhwc(x_nhwc, params, *, h_tile=32):
    """x_nhwc: (N, H, W, Cin), Cin == 4 * planes.  Returns NHWC bf16."""
    w1b, b1, w2b, b2, w3b, b3 = params
    N, H, W, Cin = x_nhwc.shape
    P = w1b.shape[1]
    assert Cin == 4 * P, "identity residual requires inplanes == planes * 4"
    ht = _pick_h_tile(H, h_tile)

    x_bf = x_nhwc.astype(jnp.bfloat16)                 # bf16 activations in HBM
    w2_flat = w2b.reshape(9, P, P)                     # (kh*3+kw, Cin, Cout)

    kernel = functools.partial(_bottleneck_kernel, h_tile=ht)

    def full(a):
        nd = a.ndim
        return pl.BlockSpec(a.shape, lambda n, h, _nd=nd: (0,) * _nd)

    # Explicit VMEM budget (v5e scoped default 16 MiB; v7x physical 64 MiB).
    bf = 2
    est = (2 * H * W * Cin * bf                       # double-buffered resident x
           + 2 * ht * W * Cin * bf                    # double-buffered output tile
           + 2 * (Cin * P + 9 * P * P + P * Cin) * bf  # weights
           + 2 * (2 * P + Cin) * 4                    # biases
           + 4 * (ht + 2) * (W + 2) * P * 4           # straight-line intermediates
           + 3 * ht * W * Cin * 4)                    # o3 / residual / spill slack
    vmem_bytes = int(min(64 * 2 ** 20, max(32 * 2 ** 20, est)))

    # Megacore: shard batch when N>=2 (each core keeps only its own resident x);
    # fall back to sharding the h axis for N==1.
    semantics = ("parallel", "arbitrary") if N >= 2 else ("arbitrary", "parallel")

    out = pl.pallas_call(
        kernel,
        out_shape=jax.ShapeDtypeStruct((N, H, W, Cin), jnp.bfloat16),
        grid_spec=pltpu.PrefetchScalarGridSpec(
            num_scalar_prefetch=0,
            grid=(N, H // ht),
            in_specs=[
                # x stays resident across the h axis (constant block index),
                # re-DMA'd only when the batch index changes.
                pl.BlockSpec((1, H, W, Cin), lambda n, h: (n, 0, 0, 0)),
                full(w1b), full(b1),
                full(w2_flat), full(b2),
                full(w3b), full(b3),
            ],
            out_specs=pl.BlockSpec((1, ht, W, Cin), lambda n, h: (n, h, 0, 0)),
        ),
        compiler_params=pltpu.CompilerParams(
            dimension_semantics=semantics,
            vmem_limit_bytes=vmem_bytes),
    )(x_bf, w1b, b1, w2_flat, b2, w3b, b3)
    return out


def bottleneck_forward(x_nchw, params, *, h_tile=32):
    """PyTorch-layout (NCHW) adapter.  Prefer the NHWC entry point end-to-end:
    each transpose here is a full activation HBM round trip."""
    x_nhwc = jnp.transpose(x_nchw, (0, 2, 3, 1))
    y = bottleneck_forward_nhwc(x_nhwc, params, h_tile=h_tile)
    return jnp.transpose(y, (0, 3, 1, 2))


def make_params(key, inplanes, planes):
    """Deterministic synthetic weights + eval-mode BatchNorm statistics."""
    eps = 1e-5
    keys = jax.random.split(key, 12)

    def bn(kg, kb, km, kv, c):
        gamma = 1.0 + 0.1 * jax.random.normal(kg, (c,), jnp.float32)
        beta = 0.1 * jax.random.normal(kb, (c,), jnp.float32)
        mean = 0.1 * jax.random.normal(km, (c,), jnp.float32)
        var = 1.0 + 0.1 * jnp.abs(jax.random.normal(kv, (c,), jnp.float32))
        scale = gamma / jnp.sqrt(var + eps)
        bias = beta - mean * scale
        return scale.reshape(1, c), bias.reshape(1, c)

    c4 = planes * 4
    # Conv weights stored channels-last for matmul: (Cin,Cout) / (KH,KW,Cin,Cout).
    w1 = 0.05 * jax.random.normal(keys[0], (inplanes, planes), jnp.float32)
    w2 = 0.05 * jax.random.normal(keys[1], (3, 3, planes, planes), jnp.float32)
    w3 = 0.05 * jax.random.normal(keys[2], (planes, c4), jnp.float32)
    s1, b1 = bn(keys[3], keys[4], keys[5], keys[6], planes)
    s2, b2 = bn(keys[7], keys[8], keys[9], keys[10], planes)
    s3, b3 = bn(keys[11], keys[3], keys[7], keys[0], c4)
    return (w1, s1, b1, w2, s2, b2, w3, s3, b3)


def fold_bn_params(raw):
    """Fold eval-mode BN scales into the conv weights (f32 fold, then bf16 cast)."""
    w1, s1, b1, w2, s2, b2, w3, s3, b3 = raw
    w1b = (w1 * s1.reshape(1, -1)).astype(jnp.bfloat16)         # (Cin, P)
    w2b = (w2 * s2.reshape(1, 1, 1, -1)).astype(jnp.bfloat16)   # (3,3,P,P)
    w3b = (w3 * s3.reshape(1, -1)).astype(jnp.bfloat16)         # (P, 4P)
    return (w1b, b1, w2b, b2, w3b, b3)


def reference_forward_nhwc(x, folded):
    """Pure-JAX (XLA) reference of the same forward pass with the same folded
    bf16 weights and bf16 inter-stage activations (f32 accumulation), so the
    two paths differ only by f32 summation order."""
    w1b, b1, w2b, b2, w3b, b3 = folded
    Cin, P = w1b.shape
    dn = ("NHWC", "HWIO", "NHWC")

    def conv(a, w):
        return lax.conv_general_dilated(
            a, w, (1, 1), "SAME", dimension_numbers=dn,
            preferred_element_type=jnp.float32)

    xb = x.astype(jnp.bfloat16)
    o = conv(xb, w1b.reshape(1, 1, Cin, P))
    o = jnp.maximum(o + b1.reshape(1, 1, 1, -1), 0.0).astype(jnp.bfloat16)
    o = conv(o, w2b)
    o = jnp.maximum(o + b2.reshape(1, 1, 1, -1), 0.0).astype(jnp.bfloat16)
    o = conv(o, w3b.reshape(1, 1, P, Cin))
    o = o + b3.reshape(1, 1, 1, -1) + xb.astype(jnp.float32)
    return jnp.maximum(o, 0.0)


if __name__ == "__main__":
    # Small shapes: batch=2, planes=32 -> inplanes=128 (lane-dense channels),
    # spatial 16x16.  Run both the default (full-H) tiling and an 8-row tiling
    # so the interior-tile halo path is exercised.
    N, planes, H, W = 2, 32, 16, 16
    inplanes = planes * 4

    key = jax.random.PRNGKey(0)
    kx, kp = jax.random.split(key)
    x = jax.random.normal(kx, (N, H, W, inplanes), jnp.float32).astype(jnp.bfloat16)
    params = fold_bn_params(make_params(kp, inplanes, planes))

    fwd_full = jax.jit(functools.partial(bottleneck_forward_nhwc, params=params))
    fwd_tiled = jax.jit(functools.partial(bottleneck_forward_nhwc, params=params,
                                          h_tile=8))
    y_full = fwd_full(x)
    y_tiled = fwd_tiled(x)
    jax.block_until_ready((y_full, y_tiled))

    y_ref = reference_forward_nhwc(x, params)
    assert y_full.shape == (N, H, W, inplanes) and y_full.dtype == jnp.bfloat16
    for y in (y_full, y_tiled):
        yf = y.astype(jnp.float32)
        max_err = jnp.max(jnp.abs(yf - y_ref))
        assert jnp.allclose(yf, y_ref, atol=3e-2, rtol=3e-2), f"max err {max_err}"

    print("KERNEL_OK")
</pallas_src>

<mosaic_0001>
module attributes {stable_mosaic.version = 11 : i64} {
  func.func @_bottleneck_kernel(%arg0: i32, %arg1: i32, %arg2: memref<1x16x16x128xbf16, #tpu.memory_space<vmem>>, %arg3: memref<128x32xbf16, #tpu.memory_space<vmem>>, %arg4: memref<1x32xf32, #tpu.memory_space<vmem>>, %arg5: memref<9x32x32xbf16, #tpu.memory_space<vmem>>, %arg6: memref<1x32xf32, #tpu.memory_space<vmem>>, %arg7: memref<32x128xbf16, #tpu.memory_space<vmem>>, %arg8: memref<1x128xf32, #tpu.memory_space<vmem>>, %arg9: memref<1x16x16x128xbf16, #tpu.memory_space<vmem>>) attributes {dimension_semantics = [#tpu.dimension_semantics<parallel>, #tpu.dimension_semantics<arbitrary>], iteration_bounds = array<i64: 2, 1>, scalar_prefetch = 0 : i64, scratch_operands = 0 : i64, tpu.core_type = #tpu.core_type<tc>, window_params = [{transform_indices = @transform_0, window_bounds = array<i64: 1, 16, 16, 128>}, {pipeline_mode = #tpu.pipeline_mode<synchronous>, transform_indices = @transform_1, window_bounds = array<i64: 128, 32>}, {pipeline_mode = #tpu.pipeline_mode<synchronous>, transform_indices = @transform_2, window_bounds = array<i64: 1, 32>}, {pipeline_mode = #tpu.pipeline_mode<synchronous>, transform_indices = @transform_3, window_bounds = array<i64: 9, 32, 32>}, {pipeline_mode = #tpu.pipeline_mode<synchronous>, transform_indices = @transform_4, window_bounds = array<i64: 1, 32>}, {pipeline_mode = #tpu.pipeline_mode<synchronous>, transform_indices = @transform_5, window_bounds = array<i64: 32, 128>}, {pipeline_mode = #tpu.pipeline_mode<synchronous>, transform_indices = @transform_6, window_bounds = array<i64: 1, 128>}, {transform_indices = @transform_7, window_bounds = array<i64: 1, 16, 16, 128>}]} {
    %c16_i32 = arith.constant 16 : i32
    %0 = arith.muli %arg1, %c16_i32 : i32
    %1 = tpu.assume_multiple %0, 16 : i32
    %c1_i32 = arith.constant 1 : i32
    %2 = arith.subi %1, %c1_i32 : i32
    %c0_i32 = arith.constant 0 : i32
    %3 = arith.maxsi %2, %c0_i32 : i32
    %c16_i32_0 = arith.constant 16 : i32
    %4 = arith.addi %1, %c16_i32_0 : i32
    %c15_i32 = arith.constant 15 : i32
    %5 = arith.minsi %4, %c15_i32 : i32
    %c0 = arith.constant 0 : index
    %6 = arith.index_cast %3 : i32 to index
    %c0_1 = arith.constant 0 : index
    %c0_2 = arith.constant 0 : index
    %7 = vector.load %arg2[%c0, %6, %c0_1, %c0_2] : memref<1x16x16x128xbf16, #tpu.memory_space<vmem>>, vector<1x1x16x128xbf16>
    %8 = vector.shape_cast %7 : vector<1x1x16x128xbf16> to vector<1x16x128xbf16>
    %c0_3 = arith.constant 0 : index
    %9 = arith.index_cast %1 : i32 to index
    %c0_4 = arith.constant 0 : index
    %c0_5 = arith.constant 0 : index
    %10 = vector.load %arg2[%c0_3, %9, %c0_4, %c0_5] : memref<1x16x16x128xbf16, #tpu.memory_space<vmem>>, vector<1x16x16x128xbf16>
    %11 = vector.shape_cast %10 : vector<1x16x16x128xbf16> to vector<16x16x128xbf16>
    %c0_6 = arith.constant 0 : index
    %12 = arith.index_cast %5 : i32 to index
    %c0_7 = arith.constant 0 : index
    %c0_8 = arith.constant 0 : index
    %13 = vector.load %arg2[%c0_6, %12, %c0_7, %c0_8] : memref<1x16x16x128xbf16, #tpu.memory_space<vmem>>, vector<1x1x16x128xbf16>
    %14 = vector.shape_cast %13 : vector<1x1x16x128xbf16> to vector<1x16x128xbf16>
    %15 = tpu.concatenate %8, %11, %14 in 0 : vector<1x16x128xbf16>, vector<16x16x128xbf16>, vector<1x16x128xbf16> -> vector<18x16x128xbf16>
    %16 = vector.shape_cast %15 : vector<18x16x128xbf16> to vector<288x128xbf16>
    %c0_9 = arith.constant 0 : index
    %c0_10 = arith.constant 0 : index
    %17 = vector.load %arg3[%c0_9, %c0_10] : memref<128x32xbf16, #tpu.memory_space<vmem>>, vector<128x32xbf16>
    %cst = arith.constant dense<0.000000e+00> : vector<288x32xf32>
    %18 = tpu.matmul %16, %17, %cst {dimension_numbers = #tpu.dot_dimension_numbers<[1], [0], [0], [1], [0, 0, 1, 1], [], []>} : vector<288x128xbf16>, vector<128x32xbf16>, vector<288x32xf32> -> vector<288x32xf32>
    %c0_11 = arith.constant 0 : index
    %c0_12 = arith.constant 0 : index
    %19 = vector.load %arg4[%c0_11, %c0_12] : memref<1x32xf32, #tpu.memory_space<vmem>>, vector<1x32xf32>
    %20 = vector.broadcast %19 : vector<1x32xf32> to vector<288x32xf32>
    %21 = arith.addf %18, %20 : vector<288x32xf32>
    %cst_13 = arith.constant 0.000000e+00 : f32
    %22 = vector.broadcast %cst_13 : f32 to vector<288x32xf32>
    %23 = arith.maximumf %21, %22 : vector<288x32xf32>
    %24 = vector.shape_cast %23 : vector<288x32xf32> to vector<18x16x32xf32>
    %c1_i32_14 = arith.constant 1 : i32
    %25 = arith.subi %1, %c1_i32_14 : i32
    %26 = tpu.iota {dimensions = array<i32: 0>} : vector<18x1x1xi32>
    %27 = vector.broadcast %25 : i32 to vector<18x1x1xi32>
    %28 = arith.addi %27, %26 : vector<18x1x1xi32>
    %c0_i32_15 = arith.constant 0 : i32
    %29 = vector.broadcast %c0_i32_15 : i32 to vector<18x1x1xi32>
    %30 = arith.cmpi sge, %28, %29 : vector<18x1x1xi32>
    %c16_i32_16 = arith.constant 16 : i32
    %31 = vector.broadcast %c16_i32_16 : i32 to vector<18x1x1xi32>
    %32 = arith.cmpi slt, %28, %31 : vector<18x1x1xi32>
    %33 = arith.andi %30, %32 : vector<18x1x1xi1>
    %cst_17 = arith.constant 0.000000e+00 : f32
    %34 = vector.shape_cast %33 : vector<18x1x1xi1> to vector<18x1x1xi1>
    %35 = vector.broadcast %34 : vector<18x1x1xi1> to vector<18x16x32xi1>
    %36 = vector.broadcast %cst_17 : f32 to vector<18x16x32xf32>
    %37 = arith.select %35, %24, %36 : vector<18x16x32xi1>, vector<18x16x32xf32>
    %38 = arith.truncf %37 : vector<18x16x32xf32> to vector<18x16x32xbf16>
    %cst_18 = arith.constant 0.000000e+00 : bf16
    %39 = vector.broadcast %cst_18 : bf16 to vector<18x1x32xbf16>
    %40 = tpu.concatenate %39, %38, %39 in 1 : vector<18x1x32xbf16>, vector<18x16x32xbf16>, vector<18x1x32xbf16> -> vector<18x18x32xbf16>
    %cst_19 = arith.constant 0.000000e+00 : f32
    %41 = vector.broadcast %cst_19 : f32 to vector<256x32xf32>
    %42 = vector.extract_strided_slice %40 {offsets = [0, 0, 0], sizes = [16, 16, 32], strides = [1, 1, 1]} : vector<18x18x32xbf16> to vector<16x16x32xbf16>
    %43 = vector.shape_cast %42 : vector<16x16x32xbf16> to vector<256x32xbf16>
    %c0_20 = arith.constant 0 : index
    %c0_21 = arith.constant 0 : index
    %c0_22 = arith.constant 0 : index
    %44 = vector.load %arg5[%c0_20, %c0_21, %c0_22] : memref<9x32x32xbf16, #tpu.memory_space<vmem>>, vector<1x32x32xbf16>
    %45 = vector.shape_cast %44 : vector<1x32x32xbf16> to vector<32x32xbf16>
    %cst_23 = arith.constant dense<0.000000e+00> : vector<256x32xf32>
    %46 = tpu.matmul %43, %45, %cst_23 {dimension_numbers = #tpu.dot_dimension_numbers<[1], [0], [0], [1], [0, 0, 1, 1], [], []>} : vector<256x32xbf16>, vector<32x32xbf16>, vector<256x32xf32> -> vector<256x32xf32>
    %47 = arith.addf %41, %46 : vector<256x32xf32>
    %48 = vector.extract_strided_slice %40 {offsets = [0, 1, 0], sizes = [16, 16, 32], strides = [1, 1, 1]} : vector<18x18x32xbf16> to vector<16x16x32xbf16>
    %49 = vector.shape_cast %48 : vector<16x16x32xbf16> to vector<256x32xbf16>
    %c1 = arith.constant 1 : index
    %c0_24 = arith.constant 0 : index
    %c0_25 = arith.constant 0 : index
    %50 = vector.load %arg5[%c1, %c0_24, %c0_25] : memref<9x32x32xbf16, #tpu.memory_space<vmem>>, vector<1x32x32xbf16>
    %51 = vector.shape_cast %50 : vector<1x32x32xbf16> to vector<32x32xbf16>
    %cst_26 = arith.constant dense<0.000000e+00> : vector<256x32xf32>
    %52 = tpu.matmul %49, %51, %cst_26 {dimension_numbers = #tpu.dot_dimension_numbers<[1], [0], [0], [1], [0, 0, 1, 1], [], []>} : vector<256x32xbf16>, vector<32x32xbf16>, vector<256x32xf32> -> vector<256x32xf32>
    %53 = arith.addf %47, %52 : vector<256x32xf32>
    %54 = vector.extract_strided_slice %40 {offsets = [0, 2, 0], sizes = [16, 16, 32], strides = [1, 1, 1]} : vector<18x18x32xbf16> to vector<16x16x32xbf16>
    %55 = vector.shape_cast %54 : vector<16x16x32xbf16> to vector<256x32xbf16>
    %c2 = arith.constant 2 : index
    %c0_27 = arith.constant 0 : index
    %c0_28 = arith.constant 0 : index
    %56 = vector.load %arg5[%c2, %c0_27, %c0_28] : memref<9x32x32xbf16, #tpu.memory_space<vmem>>, vector<1x32x32xbf16>
    %57 = vector.shape_cast %56 : vector<1x32x32xbf16> to vector<32x32xbf16>
    %cst_29 = arith.constant dense<0.000000e+00> : vector<256x32xf32>
    %58 = tpu.matmul %55, %57, %cst_29 {dimension_numbers = #tpu.dot_dimension_numbers<[1], [0], [0], [1], [0, 0, 1, 1], [], []>} : vector<256x32xbf16>, vector<32x32xbf16>, vector<256x32xf32> -> vector<256x32xf32>
    %59 = arith.addf %53, %58 : vector<256x32xf32>
    %60 = vector.extract_strided_slice %40 {offsets = [1, 0, 0], sizes = [16, 16, 32], strides = [1, 1, 1]} : vector<18x18x32xbf16> to vector<16x16x32xbf16>
    %61 = vector.shape_cast %60 : vector<16x16x32xbf16> to vector<256x32xbf16>
    %c3 = arith.constant 3 : index
    %c0_30 = arith.constant 0 : index
    %c0_31 = arith.constant 0 : index
    %62 = vector.load %arg5[%c3, %c0_30, %c0_31] : memref<9x32x32xbf16, #tpu.memory_space<vmem>>, vector<1x32x32xbf16>
    %63 = vector.shape_cast %62 : vector<1x32x32xbf16> to vector<32x32xbf16>
    %cst_32 = arith.constant dense<0.000000e+00> : vector<256x32xf32>
    %64 = tpu.matmul %61, %63, %cst_32 {dimension_numbers = #tpu.dot_dimension_numbers<[1], [0], [0], [1], [0, 0, 1, 1], [], []>} : vector<256x32xbf16>, vector<32x32xbf16>, vector<256x32xf32> -> vector<256x32xf32>
    %65 = arith.addf %59, %64 : vector<256x32xf32>
    %66 = vector.extract_strided_slice %40 {offsets = [1, 1, 0], sizes = [16, 16, 32], strides = [1, 1, 1]} : vector<18x18x32xbf16> to vector<16x16x32xbf16>
    %67 = vector.shape_cast %66 : vector<16x16x32xbf16> to vector<256x32xbf16>
    %c4 = arith.constant 4 : index
    %c0_33 = arith.constant 0 : index
    %c0_34 = arith.constant 0 : index
    %68 = vector.load %arg5[%c4, %c0_33, %c0_34] : memref<9x32x32xbf16, #tpu.memory_space<vmem>>, vector<1x32x32xbf16>
    %69 = vector.shape_cast %68 : vector<1x32x32xbf16> to vector<32x32xbf16>
    %cst_35 = arith.constant dense<0.000000e+00> : vector<256x32xf32>
    %70 = tpu.matmul %67, %69, %cst_35 {dimension_numbers = #tpu.dot_dimension_numbers<[1], [0], [0], [1], [0, 0, 1, 1], [], []>} : vector<256x32xbf16>, vector<32x32xbf16>, vector<256x32xf32> -> vector<256x32xf32>
    %71 = arith.addf %65, %70 : vector<256x32xf32>
    %72 = vector.extract_strided_slice %40 {offsets = [1, 2, 0], sizes = [16, 16, 32], strides = [1, 1, 1]} : vector<18x18x32xbf16> to vector<16x16x32xbf16>
    %73 = vector.shape_cast %72 : vector<16x16x32xbf16> to vector<256x32xbf16>
    %c5 = arith.constant 5 : index
    %c0_36 = arith.constant 0 : index
    %c0_37 = arith.constant 0 : index
    %74 = vector.load %arg5[%c5, %c0_36, %c0_37] : memref<9x32x32xbf16, #tpu.memory_space<vmem>>, vector<1x32x32xbf16>
    %75 = vector.shape_cast %74 : vector<1x32x32xbf16> to vector<32x32xbf16>
    %cst_38 = arith.constant dense<0.000000e+00> : vector<256x32xf32>
    %76 = tpu.matmul %73, %75, %cst_38 {dimension_numbers = #tpu.dot_dimension_numbers<[1], [0], [0], [1], [0, 0, 1, 1], [], []>} : vector<256x32xbf16>, vector<32x32xbf16>, vector<256x32xf32> -> vector<256x32xf32>
    %77 = arith.addf %71, %76 : vector<256x32xf32>
    %78 = vector.extract_strided_slice %40 {offsets = [2, 0, 0], sizes = [16, 16, 32], strides = [1, 1, 1]} : vector<18x18x32xbf16> to vector<16x16x32xbf16>
    %79 = vector.shape_cast %78 : vector<16x16x32xbf16> to vector<256x32xbf16>
    %c6 = arith.constant 6 : index
    %c0_39 = arith.constant 0 : index
    %c0_40 = arith.constant 0 : index
    %80 = vector.load %arg5[%c6, %c0_39, %c0_40] : memref<9x32x32xbf16, #tpu.memory_space<vmem>>, vector<1x32x32xbf16>
    %81 = vector.shape_cast %80 : vector<1x32x32xbf16> to vector<32x32xbf16>
    %cst_41 = arith.constant dense<0.000000e+00> : vector<256x32xf32>
    %82 = tpu.matmul %79, %81, %cst_41 {dimension_numbers = #tpu.dot_dimension_numbers<[1], [0], [0], [1], [0, 0, 1, 1], [], []>} : vector<256x32xbf16>, vector<32x32xbf16>, vector<256x32xf32> -> vector<256x32xf32>
    %83 = arith.addf %77, %82 : vector<256x32xf32>
    %84 = vector.extract_strided_slice %40 {offsets = [2, 1, 0], sizes = [16, 16, 32], strides = [1, 1, 1]} : vector<18x18x32xbf16> to vector<16x16x32xbf16>
    %85 = vector.shape_cast %84 : vector<16x16x32xbf16> to vector<256x32xbf16>
    %c7 = arith.constant 7 : index
    %c0_42 = arith.constant 0 : index
    %c0_43 = arith.constant 0 : index
    %86 = vector.load %arg5[%c7, %c0_42, %c0_43] : memref<9x32x32xbf16, #tpu.memory_space<vmem>>, vector<1x32x32xbf16>
    %87 = vector.shape_cast %86 : vector<1x32x32xbf16> to vector<32x32xbf16>
    %cst_44 = arith.constant dense<0.000000e+00> : vector<256x32xf32>
    %88 = tpu.matmul %85, %87, %cst_44 {dimension_numbers = #tpu.dot_dimension_numbers<[1], [0], [0], [1], [0, 0, 1, 1], [], []>} : vector<256x32xbf16>, vector<32x32xbf16>, vector<256x32xf32> -> vector<256x32xf32>
    %89 = arith.addf %83, %88 : vector<256x32xf32>
    %90 = vector.extract_strided_slice %40 {offsets = [2, 2, 0], sizes = [16, 16, 32], strides = [1, 1, 1]} : vector<18x18x32xbf16> to vector<16x16x32xbf16>
    %91 = vector.shape_cast %90 : vector<16x16x32xbf16> to vector<256x32xbf16>
    %c8 = arith.constant 8 : index
    %c0_45 = arith.constant 0 : index
    %c0_46 = arith.constant 0 : index
    %92 = vector.load %arg5[%c8, %c0_45, %c0_46] : memref<9x32x32xbf16, #tpu.memory_space<vmem>>, vector<1x32x32xbf16>
    %93 = vector.shape_cast %92 : vector<1x32x32xbf16> to vector<32x32xbf16>
    %cst_47 = arith.constant dense<0.000000e+00> : vector<256x32xf32>
    %94 = tpu.matmul %91, %93, %cst_47 {dimension_numbers = #tpu.dot_dimension_numbers<[1], [0], [0], [1], [0, 0, 1, 1], [], []>} : vector<256x32xbf16>, vector<32x32xbf16>, vector<256x32xf32> -> vector<256x32xf32>
    %95 = arith.addf %89, %94 : vector<256x32xf32>
    %c0_48 = arith.constant 0 : index
    %c0_49 = arith.constant 0 : index
    %96 = vector.load %arg6[%c0_48, %c0_49] : memref<1x32xf32, #tpu.memory_space<vmem>>, vector<1x32xf32>
    %97 = vector.broadcast %96 : vector<1x32xf32> to vector<256x32xf32>
    %98 = arith.addf %95, %97 : vector<256x32xf32>
    %cst_50 = arith.constant 0.000000e+00 : f32
    %99 = vector.broadcast %cst_50 : f32 to vector<256x32xf32>
    %100 = arith.maximumf %98, %99 : vector<256x32xf32>
    %101 = arith.truncf %100 : vector<256x32xf32> to vector<256x32xbf16>
    %c0_51 = arith.constant 0 : index
    %c0_52 = arith.constant 0 : index
    %102 = vector.load %arg7[%c0_51, %c0_52] : memref<32x128xbf16, #tpu.memory_space<vmem>>, vector<32x128xbf16>
    %cst_53 = arith.constant dense<0.000000e+00> : vector<256x128xf32>
    %103 = tpu.matmul %101, %102, %cst_53 {dimension_numbers = #tpu.dot_dimension_numbers<[1], [0], [0], [1], [0, 0, 1, 1], [], []>} : vector<256x32xbf16>, vector<32x128xbf16>, vector<256x128xf32> -> vector<256x128xf32>
    %c0_54 = arith.constant 0 : index
    %c0_55 = arith.constant 0 : index
    %104 = vector.load %arg8[%c0_54, %c0_55] : memref<1x128xf32, #tpu.memory_space<vmem>>, vector<1x128xf32>
    %105 = vector.broadcast %104 : vector<1x128xf32> to vector<256x128xf32>
    %106 = arith.addf %103, %105 : vector<256x128xf32>
    %c0_56 = arith.constant 0 : index
    %107 = arith.index_cast %1 : i32 to index
    %c0_57 = arith.constant 0 : index
    %c0_58 = arith.constant 0 : index
    %108 = vector.load %arg2[%c0_56, %107, %c0_57, %c0_58] : memref<1x16x16x128xbf16, #tpu.memory_space<vmem>>, vector<1x16x16x128xbf16>
    %109 = vector.shape_cast %108 : vector<1x16x16x128xbf16> to vector<16x16x128xbf16>
    %110 = vector.shape_cast %109 : vector<16x16x128xbf16> to vector<256x128xbf16>
    %111 = arith.extf %110 : vector<256x128xbf16> to vector<256x128xf32>
    %112 = arith.addf %106, %111 : vector<256x128xf32>
    %cst_59 = arith.constant 0.000000e+00 : f32
    %113 = vector.broadcast %cst_59 : f32 to vector<256x128xf32>
    %114 = arith.maximumf %112, %113 : vector<256x128xf32>
    %115 = vector.shape_cast %114 : vector<256x128xf32> to vector<1x16x16x128xf32>
    %116 = arith.truncf %115 : vector<1x16x16x128xf32> to vector<1x16x16x128xbf16>
    %c0_60 = arith.constant 0 : index
    %c0_61 = arith.constant 0 : index
    %c0_62 = arith.constant 0 : index
    %c0_63 = arith.constant 0 : index
    %117 = vector.load %arg9[%c0_60, %c0_61, %c0_62, %c0_63] : memref<1x16x16x128xbf16, #tpu.memory_space<vmem>>, vector<1x16x16x128xbf16>
    tpu.vector_store %arg9[%c0_60, %c0_61, %c0_62, %c0_63], %116 {strides = array<i32>} : memref<1x16x16x128xbf16, #tpu.memory_space<vmem>>, vector<1x16x16x128xbf16>,
    return
  }
  func.func @transform_0(%arg0: i32, %arg1: i32) -> (i32, i32, i32, i32) {
    %c0_i32 = arith.constant 0 : i32
    %c0_i32_0 = arith.constant 0 : i32
    %c0_i32_1 = arith.constant 0 : i32
    %c0_i32_2 = arith.constant 0 : i32
    return %arg0, %c0_i32, %c0_i32_0, %c0_i32_1 : i32, i32, i32, i32
  }
  func.func @transform_1(%arg0: i32, %arg1: i32) -> (i32, i32) {
    %c0_i32 = arith.constant 0 : i32
    %c0_i32_0 = arith.constant 0 : i32
    %c0_i32_1 = arith.constant 0 : i32
    return %c0_i32, %c0_i32_0 : i32, i32
  }
  func.func @transform_2(%arg0: i32, %arg1: i32) -> (i32, i32) {
    %c0_i32 = arith.constant 0 : i32
    %c0_i32_0 = arith.constant 0 : i32
    %c0_i32_1 = arith.constant 0 : i32
    return %c0_i32, %c0_i32_0 : i32, i32
  }
  func.func @transform_3(%arg0: i32, %arg1: i32) -> (i32, i32, i32) {
    %c0_i32 = arith.constant 0 : i32
    %c0_i32_0 = arith.constant 0 : i32
    %c0_i32_1 = arith.constant 0 : i32
    %c0_i32_2 = arith.constant 0 : i32
    return %c0_i32, %c0_i32_0, %c0_i32_1 : i32, i32, i32
  }
  func.func @transform_4(%arg0: i32, %arg1: i32) -> (i32, i32) {
    %c0_i32 = arith.constant 0 : i32
    %c0_i32_0 = arith.constant 0 : i32
    %c0_i32_1 = arith.constant 0 : i32
    return %c0_i32, %c0_i32_0 : i32, i32
  }
  func.func @transform_5(%arg0: i32, %arg1: i32) -> (i32, i32) {
    %c0_i32 = arith.constant 0 : i32
    %c0_i32_0 = arith.constant 0 : i32
    %c0_i32_1 = arith.constant 0 : i32
    return %c0_i32, %c0_i32_0 : i32, i32
  }
  func.func @transform_6(%arg0: i32, %arg1: i32) -> (i32, i32) {
    %c0_i32 = arith.constant 0 : i32
    %c0_i32_0 = arith.constant 0 : i32
    %c0_i32_1 = arith.constant 0 : i32
    return %c0_i32, %c0_i32_0 : i32, i32
  }
  func.func @transform_7(%arg0: i32, %arg1: i32) -> (i32, i32, i32, i32) {
    %c0_i32 = arith.constant 0 : i32
    %c0_i32_0 = arith.constant 0 : i32
    %c0_i32_1 = arith.constant 0 : i32
    return %arg0, %arg1, %c0_i32, %c0_i32_0 : i32, i32, i32, i32
  }
}

</mosaic_0001>

<llo_original>
// kernel: bottleneck_forward_nhwc.1
$region0: #{bottleneck_forward_nhwc.1}
  #allocation0 [shape = 'u32[]', space=smem, size = 0x4, offset = 0x4, fixed_abs, tag = 'smem constant byte address 0x4 - core index']
  #allocation1 [shape = 'u32[72,128]{1,0:T(1,128)}', space=vmem, size = 0x9000, scoped, tag = 'internal scratch']
  %s0 = inlined_call_operand.hbm [shape: bf16[2,16,16,128], index: 0, kind: input, shape index: {}]
  %s1 = inlined_call_operand.hbm [shape: bf16[128,32], index: 1, kind: input, shape index: {}]
  %s2 = inlined_call_operand.hbm [shape: f32[1,32], index: 2, kind: input, shape index: {}]
  %s3 = inlined_call_operand.hbm [shape: bf16[9,32,32], index: 3, kind: input, shape index: {}]
  %s4 = inlined_call_operand.vmem [shape: f32[1,32], index: 4, kind: input, shape index: {}]
  %s5 = inlined_call_operand.hbm [shape: bf16[32,128], index: 5, kind: input, shape index: {}]
  %s6 = inlined_call_operand.vmem [shape: f32[1,128], index: 6, kind: input, shape index: {}]
  %s7 = inlined_call_operand.hbm [shape: bf16[2,16,16,128], index: 7, kind: output, shape index: {}]
  %s8 = sld [smem:[#allocation0]]
  $region81: #{bottleneck_forward_nhwc.1} parent=0
    _
  %s10 = ssub.s32 1, %s8
  %s11 = scalar_select 0, %s10, %s8
  $region1: #{bottleneck_forward_nhwc.1} parent=0
    #allocation2 [shape = 'u8[131072]{0}', space=vmem, size = 0x20000, scoped, tag = 'input window, operand 0']
    #allocation3 [shape = 's32[2]{0}', space=sflag, size = 0x8, scoped, tag = 'scoped memory for bottleneck_forward_nhwc.1']
    #allocation4 [shape = 's32[2]{0}', space=sflag, size = 0x8, scoped, tag = 'scoped memory for bottleneck_forward_nhwc.1']
    #allocation5 [shape = 'u8[32768]{0}', space=vmem, size = 0x8000, scoped, tag = 'input window, operand 1, single buffered']
    #allocation6 [shape = 's32[1]{0}', space=sflag, size = 0x4, scoped, tag = 'scoped memory for bottleneck_forward_nhwc.1']
    #allocation7 [shape = 'u8[512]{0}', space=vmem, size = 0x400, scoped, tag = 'input window, operand 2, single buffered']
    #allocation8 [shape = 'u8[73728]{0}', space=vmem, size = 0x12000, scoped, tag = 'input window, operand 3, single buffered']
    #allocation9 [shape = 's32[1]{0}', space=sflag, size = 0x4, scoped, tag = 'scoped memory for bottleneck_forward_nhwc.1']
    #allocation10 [shape = 'u8[8192]{0}', space=vmem, size = 0x2000, scoped, tag = 'input window, operand 5, single buffered']
    #allocation11 [shape = 'u8[131072]{0}', space=vmem, size = 0x20000, scoped, tag = 'output window, operand 0']
    %12 = vsyncpa [#allocation3], 0
    %s13 = scalar_lea.sflag [#allocation3], 1
    %14 = vsyncpa %s13, 0
    %15 = vsyncpa [#allocation6], 0
    %16 = vsyncpa [#allocation9], 0
    %17 = vsyncpa [#allocation4], 0
    %s18 = scalar_lea.sflag [#allocation4], 1
    %19 = vsyncpa %s18, 0
    loop: start=0, step=1, limit=4
    $region2: #{bottleneck_forward_nhwc.1} parent=1 // loop_pre_header
      _
    $region3: #{bottleneck_forward_nhwc.1} parent=1 // loop_header
      %s21 = sphi 0, %s25
      %p22 = scmp.ge.s32.totalorder %s21, 4
      %s28 = sphi 0, %s40
      %s29 = sphi 0, %s36
      %s30 = sphi 0, %s28
      %s31 = sphi 0, %s29
      %s32 = sphi 0, %s30
      %s33 = sphi 0, %s31
      %s43 = sphi 0, %s45
      %s46 = sphi 0, %s43
      %s47 = sphi 0, %s46
      %s63 = sphi 0, %s47
      %s67 = sphi 0, %s67
      %s69 = sphi 0, %s67
      %s70 = sphi 0, %s69
      %s84 = sphi 0, %s70
      %s88 = sphi 0, %s88
      %s90 = sphi 0, %s88
      %s91 = sphi 0, %s90
      %s105 = sphi 0, %s91
      %s109 = sphi 0, %s109
      %s111 = sphi 0, %s109
      %s112 = sphi 0, %s111
      %s126 = sphi 0, %s112
      %s130 = sphi 0, %s130
      %s132 = sphi 0, %s130
      %s133 = sphi 0, %s132
      %s147 = sphi 0, %s133
      %s151 = sphi 0, %s151
      %s153 = sphi 0, %s151
      %s154 = sphi 0, %s153
      %s168 = sphi 0, %s154
      %s172 = sphi 0, %s172
      %s174 = sphi 0, %s172
      %s175 = sphi 0, %s174
      %s189 = sphi 0, %s175
      %s197 = sphi 0, %s199
      %s200 = sphi 0, %s197
      %s201 = sphi 0, %s200
      %s217 = sphi 0, %s201
    $region4: #{bottleneck_forward_nhwc.1} parent=1 // loop_header_branch
      %24 = sbr.rel (%p22) target = $region8
    $region5: #{bottleneck_forward_nhwc.1} parent=1 // loop_body
      %s26 = ssub.s32 %s21, 1
      %s27 = ssub.s32 %s21, 2
      %s34 = sadd.s32 1, %s29
      %p35 = scmp.ge.s32.totalorder %s34, 1
      %s36 = scalar_select %p35, 0, %s34
      %s37 = sadd.s32 1, %s28
      %s38 = scalar_select %p35, %s37, %s28
      %p39 = scmp.ge.s32.totalorder %s38, 2
      %s40 = scalar_select %p39, 0, %s38
      %s41 = ssub.s32 %s28, %s40
      %p42 = scmp.eq.s32.totalorder %s41, 0
      %s44 = sadd.s32 %s43, 1
      %s45 = scalar_select %p42, %s43, %s44
      %p48 = pneg %p42
      %p49 = scmp.eq.s32.totalorder %s21, 1
      %p50 = por %p48, %p49
      %p51 = scmp.ne.s32.totalorder %s43, %s46
      %p52 = scmp.eq.s32.totalorder %s21, 0
      %p53 = por %p51, %p52
      %p54 = scmp.ne.s32.totalorder %s43, %s46
      %p55 = scmp.eq.s32.totalorder %s26, 1
      %p56 = por %p54, %p55
      %p57 = scmp.ne.s32.totalorder %s46, %s47
      %p58 = scmp.eq.s32.totalorder %s26, 0
      %p59 = por %p57, %p58
      %p60 = scmp.ne.s32.totalorder %s46, %s47
      %p61 = scmp.eq.s32.totalorder %s27, 1
      %p62 = por %p60, %p61
      %p64 = scmp.ne.s32.totalorder %s47, %s63
      %p65 = scmp.eq.s32.totalorder %s27, 0
      %p66 = por %p64, %p65
      %s68 = sadd.s32 %s67, 1
      %p71 = scmp.eq.s32.totalorder %s21, 1
      %p72 = scmp.ne.s32.totalorder %s67, %s69
      %p73 = scmp.eq.s32.totalorder %s21, 0
      %p74 = por %p72, %p73
      %p75 = scmp.ne.s32.totalorder %s67, %s69
      %p76 = scmp.eq.s32.totalorder %s26, 1
      %p77 = por %p75, %p76
      %p78 = scmp.ne.s32.totalorder %s69, %s70
      %p79 = scmp.eq.s32.totalorder %s26, 0
      %p80 = por %p78, %p79
      %p81 = scmp.ne.s32.totalorder %s69, %s70
      %p82 = scmp.eq.s32.totalorder %s27, 1
      %p83 = por %p81, %p82
      %p85 = scmp.ne.s32.totalorder %s70, %s84
      %p86 = scmp.eq.s32.totalorder %s27, 0
      %p87 = por %p85, %p86
      %s89 = sadd.s32 %s88, 1
      %p92 = scmp.eq.s32.totalorder %s21, 1
      %p93 = scmp.ne.s32.totalorder %s88, %s90
      %p94 = scmp.eq.s32.totalorder %s21, 0
      %p95 = por %p93, %p94
      %p96 = scmp.ne.s32.totalorder %s88, %s90
      %p97 = scmp.eq.s32.totalorder %s26, 1
      %p98 = por %p96, %p97
      %p99 = scmp.ne.s32.totalorder %s90, %s91
      %p100 = scmp.eq.s32.totalorder %s26, 0
      %p101 = por %p99, %p100
      %p102 = scmp.ne.s32.totalorder %s90, %s91
      %p103 = scmp.eq.s32.totalorder %s27, 1
      %p104 = por %p102, %p103
      %p106 = scmp.ne.s32.totalorder %s91, %s105
      %p107 = scmp.eq.s32.totalorder %s27, 0
      %p108 = por %p106, %p107
      %s110 = sadd.s32 %s109, 1
      %p113 = scmp.eq.s32.totalorder %s21, 1
      %p114 = scmp.ne.s32.totalorder %s109, %s111
      %p115 = scmp.eq.s32.totalorder %s21, 0
      %p116 = por %p114, %p115
      %p117 = scmp.ne.s32.totalorder %s109, %s111
      %p118 = scmp.eq.s32.totalorder %s26, 1
      %p119 = por %p117, %p118
      %p120 = scmp.ne.s32.totalorder %s111, %s112
      %p121 = scmp.eq.s32.totalorder %s26, 0
      %p122 = por %p120, %p121
      %p123 = scmp.ne.s32.totalorder %s111, %s112
      %p124 = scmp.eq.s32.totalorder %s27, 1
      %p125 = por %p123, %p124
      %p127 = scmp.ne.s32.totalorder %s112, %s126
      %p128 = scmp.eq.s32.totalorder %s27, 0
      %p129 = por %p127, %p128
      %s131 = sadd.s32 %s130, 1
      %p134 = scmp.eq.s32.totalorder %s21, 1
      %p135 = scmp.ne.s32.totalorder %s130, %s132
      %p136 = scmp.eq.s32.totalorder %s21, 0
      %p137 = por %p135, %p136
      %p138 = scmp.ne.s32.totalorder %s130, %s132
      %p139 = scmp.eq.s32.totalorder %s26, 1
      %p140 = por %p138, %p139
      %p141 = scmp.ne.s32.totalorder %s132, %s133
      %p142 = scmp.eq.s32.totalorder %s26, 0
      %p143 = por %p141, %p142
      %p144 = scmp.ne.s32.totalorder %s132, %s133
      %p145 = scmp.eq.s32.totalorder %s27, 1
      %p146 = por %p144, %p145
      %p148 = scmp.ne.s32.totalorder %s133, %s147
      %p149 = scmp.eq.s32.totalorder %s27, 0
      %p150 = por %p148, %p149
      %s152 = sadd.s32 %s151, 1
      %p155 = scmp.eq.s32.totalorder %s21, 1
      %p156 = scmp.ne.s32.totalorder %s151, %s153
      %p157 = scmp.eq.s32.totalorder %s21, 0
      %p158 = por %p156, %p157
      %p159 = scmp.ne.s32.totalorder %s151, %s153
      %p160 = scmp.eq.s32.totalorder %s26, 1
      %p161 = por %p159, %p160
      %p162 = scmp.ne.s32.totalorder %s153, %s154
      %p163 = scmp.eq.s32.totalorder %s26, 0
      %p164 = por %p162, %p163
      %p165 = scmp.ne.s32.totalorder %s153, %s154
      %p166 = scmp.eq.s32.totalorder %s27, 1
      %p167 = por %p165, %p166
      %p169 = scmp.ne.s32.totalorder %s154, %s168
      %p170 = scmp.eq.s32.totalorder %s27, 0
      %p171 = por %p169, %p170
      %s173 = sadd.s32 %s172, 1
      %p176 = scmp.eq.s32.totalorder %s21, 1
      %p177 = scmp.ne.s32.totalorder %s172, %s174
      %p178 = scmp.eq.s32.totalorder %s21, 0
      %p179 = por %p177, %p178
      %p180 = scmp.ne.s32.totalorder %s172, %s174
      %p181 = scmp.eq.s32.totalorder %s26, 1
      %p182 = por %p180, %p181
      %p183 = scmp.ne.s32.totalorder %s174, %s175
      %p184 = scmp.eq.s32.totalorder %s26, 0
      %p185 = por %p183, %p184
      %p186 = scmp.ne.s32.totalorder %s174, %s175
      %p187 = scmp.eq.s32.totalorder %s27, 1
      %p188 = por %p186, %p187
      %p190 = scmp.ne.s32.totalorder %s175, %s189
      %p191 = scmp.eq.s32.totalorder %s27, 0
      %p192 = por %p190, %p191
      %s193 = ssub.s32 %s28, %s40
      %s194 = ssub.s32 %s29, %s36
      %s195 = sor.u32 %s193, %s194
      %p196 = scmp.eq.s32.totalorder %s195, 0
      %s198 = sadd.s32 %s197, 1
      %s199 = scalar_select %p196, %s197, %s198
      %p202 = pneg %p196
      %p203 = scmp.eq.s32.totalorder %s21, 1
      %p204 = por %p202, %p203
      %p205 = scmp.ne.s32.totalorder %s197, %s200
      %p206 = scmp.eq.s32.totalorder %s21, 0
      %p207 = por %p205, %p206
      %p208 = scmp.ne.s32.totalorder %s197, %s200
      %p209 = scmp.eq.s32.totalorder %s26, 1
      %p210 = por %p208, %p209
      %p211 = scmp.ne.s32.totalorder %s200, %s201
      %p212 = scmp.eq.s32.totalorder %s26, 0
      %p213 = por %p211, %p212
      %p214 = scmp.ne.s32.totalorder %s200, %s201
      %p215 = scmp.eq.s32.totalorder %s27, 1
      %p216 = por %p214, %p215
      %p218 = scmp.ne.s32.totalorder %s201, %s217
      %p219 = scmp.eq.s32.totalorder %s27, 0
      %p220 = por %p218, %p219
      %p221 = scmp.le.s32.totalorder 1, %s21
      %p222 = scmp.lt.s32.totalorder %s21, 3
      %p223 = pnand %p221, %p222
      %p224 = pneg %p223
      // Predicated region
      $region9: #{bottleneck_forward_nhwc.1} parent=5 // pred_check
        _
      $region10: #{bottleneck_forward_nhwc.1} parent=5 // pred_check_branch
        %226 = sbr.rel (%p223) target = $region12
      $region11: #{bottleneck_forward_nhwc.1} parent=5 // pred_region
        %s227 = ssub.s32 %s21, 1
        // Predicated region
        $region13: #{bottleneck_forward_nhwc.1} parent=11 // pred_check
          %p228 = pneg %p80
        $region14: #{bottleneck_forward_nhwc.1} parent=11 // pred_check_branch
          %230 = sbr.rel (%p228) target = $region16
        $region15: #{bottleneck_forward_nhwc.1} parent=11 // pred_region
          %232 = vsyncadd [#allocation6], 0
          %s233 = sshll.u32 %s1, 4
          %s234 = int_to_ptr.hbm [resolvable:$true] %s233
          %s235 = sshll.u32 [#allocation5], 4
          %s236 = int_to_ptr.vmem [resolvable:$true] %s235
          %241 = dma.hbm_to_vmem [thread:$0]  %s234, 1024, %s236, [#allocation6], 64, 64, 4
        $region16: #{bottleneck_forward_nhwc.1} parent=11 // pred_fallthru
          _
        // Predicated region
        $region17: #{bottleneck_forward_nhwc.1} parent=11 // pred_check
          %p242 = pneg %p101
        $region18: #{bottleneck_forward_nhwc.1} parent=11 // pred_check_branch
          %244 = sbr.rel (%p242) target = $region20
        $region19: #{bottleneck_forward_nhwc.1} parent=11 // pred_region
          %246 = vsyncadd [#allocation6], 0
          %s248 = sshll.u32 %s2, 4
          %s249 = int_to_ptr.hbm [resolvable:$true] %s248
          %s250 = sshll.u32 [#allocation7], 4
          %s251 = int_to_ptr.vmem [resolvable:$true] %s250
          %253 = dma.hbm_to_vmem [thread:$0]  %s249, 16, %s251, [#allocation6]
        $region20: #{bottleneck_forward_nhwc.1} parent=11 // pred_fallthru
          _
        // Predicated region
        $region21: #{bottleneck_forward_nhwc.1} parent=11 // pred_check
          %p254 = pneg %p122
        $region22: #{bottleneck_forward_nhwc.1} parent=11 // pred_check_branch
          %256 = sbr.rel (%p254) target = $region24
        $region23: #{bottleneck_forward_nhwc.1} parent=11 // pred_region
          %258 = vsyncadd [#allocation9], 0
          %s259 = sshll.u32 %s3, 4
          %s260 = int_to_ptr.hbm [resolvable:$true] %s259
          %s261 = sshll.u32 [#allocation8], 4
          %s262 = int_to_ptr.vmem [resolvable:$true] %s261
          %267 = dma.hbm_to_vmem [thread:$0]  %s260, 2304, %s262, [#allocation9], 64, 64, 4
        $region24: #{bottleneck_forward_nhwc.1} parent=11 // pred_fallthru
          _
        // Predicated region
        $region25: #{bottleneck_forward_nhwc.1} parent=11 // pred_check
          %p268 = pneg %p143
        $region26: #{bottleneck_forward_nhwc.1} parent=11 // pred_check_branch
          %270 = sbr.rel (%p268) target = $region28
        $region27: #{bottleneck_forward_nhwc.1} parent=11 // pred_region
          _
        $region28: #{bottleneck_forward_nhwc.1} parent=11 // pred_fallthru
          _
        // Predicated region
        $region29: #{bottleneck_forward_nhwc.1} parent=11 // pred_check
          %p271 = pneg %p164
        $region30: #{bottleneck_forward_nhwc.1} parent=11 // pred_check_branch
          %273 = sbr.rel (%p271) target = $region32
        $region31: #{bottleneck_forward_nhwc.1} parent=11 // pred_region
          %275 = vsyncadd [#allocation9], 0
          %s276 = sshll.u32 %s5, 4
          %s277 = int_to_ptr.hbm [resolvable:$true] %s276
          %s278 = sshll.u32 [#allocation10], 4
          %s279 = int_to_ptr.vmem [resolvable:$true] %s278
          %284 = dma.hbm_to_vmem [thread:$0]  %s277, 256, %s279, [#allocation9], 64, 64, 4
        $region32: #{bottleneck_forward_nhwc.1} parent=11 // pred_fallthru
          _
        // Predicated region
        $region33: #{bottleneck_forward_nhwc.1} parent=11 // pred_check
          %p285 = pneg %p185
        $region34: #{bottleneck_forward_nhwc.1} parent=11 // pred_check_branch
          %287 = sbr.rel (%p285) target = $region36
        $region35: #{bottleneck_forward_nhwc.1} parent=11 // pred_region
          _
        $region36: #{bottleneck_forward_nhwc.1} parent=11 // pred_fallthru
          _
      $region12: #{bottleneck_forward_nhwc.1} parent=5 // pred_fallthru
        _
      %p288 = scmp.lt.s32.totalorder %s21, 2
      // Predicated region
      $region37: #{bottleneck_forward_nhwc.1} parent=5 // pred_check
        %p289 = pneg %p288
      $region38: #{bottleneck_forward_nhwc.1} parent=5 // pred_check_branch
        %291 = sbr.rel (%p289) target = $region40
      $region39: #{bottleneck_forward_nhwc.1} parent=5 // pred_region
        // Predicated region
        $region41: #{bottleneck_forward_nhwc.1} parent=39 // pred_check
          %p292 = pneg %p53
        $region42: #{bottleneck_forward_nhwc.1} parent=39 // pred_check_branch
          %294 = sbr.rel (%p292) target = $region44
        $region43: #{bottleneck_forward_nhwc.1} parent=39 // pred_region
          %s295 = sand.u32 %s43, 1
          %s296 = scalar_lea.sflag [#allocation3], %s295
          %s297 = sand.u32 %s43, 1
          %s298 = smul.addr %s297, 128
          %s299 = scalar_lea.vmem [#allocation2], %s298
          %301 = vsyncadd %s296, 0
          %s302 = smul.addr %s28, 32
          %s303 = smul.addr %s302, 4
          %s304 = scalar_lea.hbm %s0, %s303
          %s305 = sshll.u32 %s304, 4
          %s306 = int_to_ptr.hbm [resolvable:$true] %s305
          %s307 = sshll.u32 %s299, 4
          %s308 = int_to_ptr.vmem [resolvable:$true] %s307
          %313 = dma.hbm_to_vmem [thread:$0]  %s306, 2048, %s308, %s296, 64, 64, 4
        $region44: #{bottleneck_forward_nhwc.1} parent=39 // pred_fallthru
          _
      $region40: #{bottleneck_forward_nhwc.1} parent=5 // pred_fallthru
        _
      %p314 = scmp.le.s32.totalorder 1, %s21
      %p315 = scmp.lt.s32.totalorder %s21, 3
      %p316 = pnand %p314, %p315
      %p317 = pneg %p316
      // Predicated region
      $region45: #{bottleneck_forward_nhwc.1} parent=5 // pred_check
        _
      $region46: #{bottleneck_forward_nhwc.1} parent=5 // pred_check_branch
        %319 = sbr.rel (%p316) target = $region48
      $region47: #{bottleneck_forward_nhwc.1} parent=5 // pred_region
        %s320 = ssub.s32 %s21, 1
        %s321 = sand.u32 %s46, 1
        %s322 = scalar_lea.sflag [#allocation3], %s321
        %s323 = sand.u32 %s46, 1
        %s324 = smul.addr %s323, 128
        %s325 = scalar_lea.vmem [#allocation2], %s324
        // Predicated region
        $region49: #{bottleneck_forward_nhwc.1} parent=47 // pred_check
          %p326 = pneg %p59
        $region50: #{bottleneck_forward_nhwc.1} parent=47 // pred_check_branch
          %328 = sbr.rel (%p326) target = $region52
        $region51: #{bottleneck_forward_nhwc.1} parent=47 // pred_region
          %330 = dma.done %s322, 2048
        $region52: #{bottleneck_forward_nhwc.1} parent=47 // pred_fallthru
          _
        // Predicated region
        $region53: #{bottleneck_forward_nhwc.1} parent=47 // pred_check
          %p331 = pneg %p80
        $region54: #{bottleneck_forward_nhwc.1} parent=47 // pred_check_branch
          %333 = sbr.rel (%p331) target = $region56
        $region55: #{bottleneck_forward_nhwc.1} parent=47 // pred_region
          %335 = dma.done [#allocation6], 1024
        $region56: #{bottleneck_forward_nhwc.1} parent=47 // pred_fallthru
          _
        // Predicated region
        $region57: #{bottleneck_forward_nhwc.1} parent=47 // pred_check
          %p336 = pneg %p101
        $region58: #{bottleneck_forward_nhwc.1} parent=47 // pred_check_branch
          %338 = sbr.rel (%p336) target = $region60
        $region59: #{bottleneck_forward_nhwc.1} parent=47 // pred_region
          %340 = dma.done [#allocation6], 16
        $region60: #{bottleneck_forward_nhwc.1} parent=47 // pred_fallthru
          _
        // Predicated region
        $region61: #{bottleneck_forward_nhwc.1} parent=47 // pred_check
          %p341 = pneg %p122
        $region62: #{bottleneck_forward_nhwc.1} parent=47 // pred_check_branch
          %343 = sbr.rel (%p341) target = $region64
        $region63: #{bottleneck_forward_nhwc.1} parent=47 // pred_region
          %345 = dma.done [#allocation9], 2304
        $region64: #{bottleneck_forward_nhwc.1} parent=47 // pred_fallthru
          _
        // Predicated region
        $region65: #{bottleneck_forward_nhwc.1} parent=47 // pred_check
          %p346 = pneg %p164
        $region66: #{bottleneck_forward_nhwc.1} parent=47 // pred_check_branch
          %348 = sbr.rel (%p346) target = $region68
        $region67: #{bottleneck_forward_nhwc.1} parent=47 // pred_region
          %350 = dma.done [#allocation9], 256
        $region68: #{bottleneck_forward_nhwc.1} parent=47 // pred_fallthru
          _
        %s351 = sand.u32 %s46, 1
        %s352 = scalar_lea.sflag [#allocation3], %s351
        %s353 = sand.u32 %s46, 1
        %s354 = smul.addr %s353, 128
        %s355 = scalar_lea.vmem [#allocation2], %s354
        %p356 = pneg %p59
        %p357 = pneg %p56
        %p358 = pneg %p80
        %p359 = pneg %p77
        %p360 = pneg %p101
        %p361 = pneg %p98
        %p362 = pneg %p122
        %p363 = pneg %p119
        %p364 = pneg %p143
        %p365 = pneg %p140
        %p366 = pneg %p164
        %p367 = pneg %p161
        %p368 = pneg %p185
        %p369 = pneg %p182
        %p370 = pneg %p213
        %p371 = pneg %p210
        %s372 = sand.u32 %s200, 1
        %s373 = scalar_lea.sflag [#allocation4], %s372
        %s374 = sand.u32 %s200, 1
        %s375 = smul.addr %s374, 128
        %s376 = scalar_lea.vmem [#allocation11], %s375
        %s377 = smul.u32 16, %s31
        %s379 = smul.u32 %s31, 16
        %s380 = ssub.s32 %s379, 1
        %p381 = scmp.gt.s32.totalorder %s380, 0
        %s382 = scalar_select %p381, %s380, 0
        %s383 = sadd.s32 %s379, 16
        %p384 = scmp.lt.s32.totalorder %s383, 15
        %s385 = scalar_select %p384, %s383, 15
        %s386 = smul.u32 %s382, 2
        %s387 = smul.addr %s386, 4
        %s388 = scalar_lea.vmem %s325, %s387 [#allocation2]
        %v389 = vld [vmem:[%s388] sm:$0xf]
        %v390 = vld [vmem:[%s388 + $0x4] sm:$0xf]
        %s391 = smul.u32 %s379, 2
        %s392 = smul.addr %s391, 4
        %s393 = scalar_lea.vmem %s325, %s392 [#allocation2]
        %v394 = vld [vmem:[%s393] sm:$0xf]
        %v395 = vld [vmem:[%s393 + $0x4] sm:$0xf]
        %v396 = vld [vmem:[%s393 + $0x8] sm:$0xf]
        %v397 = vld [vmem:[%s393 + $0xc] sm:$0xf]
        %v398 = vld [vmem:[%s393 + $0x10] sm:$0xf]
        %v399 = vld [vmem:[%s393 + $0x14] sm:$0xf]
        %v400 = vld [vmem:[%s393 + $0x18] sm:$0xf]
        %v401 = vld [vmem:[%s393 + $0x1c] sm:$0xf]
        %v402 = vld [vmem:[%s393 + $0x20] sm:$0xf]
        %v403 = vld [vmem:[%s393 + $0x24] sm:$0xf]
        %v404 = vld [vmem:[%s393 + $0x28] sm:$0xf]
        %v405 = vld [vmem:[%s393 + $0x2c] sm:$0xf]
        %v406 = vld [vmem:[%s393 + $0x30] sm:$0xf]
        %v407 = vld [vmem:[%s393 + $0x34] sm:$0xf]
        %v408 = vld [vmem:[%s393 + $0x38] sm:$0xf]
        %v409 = vld [vmem:[%s393 + $0x3c] sm:$0xf]
        %v410 = vld [vmem:[%s393 + $0x40] sm:$0xf]
        %v411 = vld [vmem:[%s393 + $0x44] sm:$0xf]
        %v412 = vld [vmem:[%s393 + $0x48] sm:$0xf]
        %v413 = vld [vmem:[%s393 + $0x4c] sm:$0xf]
        %v414 = vld [vmem:[%s393 + $0x50] sm:$0xf]
        %v415 = vld [vmem:[%s393 + $0x54] sm:$0xf]
        %v416 = vld [vmem:[%s393 + $0x58] sm:$0xf]
        %v417 = vld [vmem:[%s393 + $0x5c] sm:$0xf]
        %v418 = vld [vmem:[%s393 + $0x60] sm:$0xf]
        %v419 = vld [vmem:[%s393 + $0x64] sm:$0xf]
        %v420 = vld [vmem:[%s393 + $0x68] sm:$0xf]
        %v421 = vld [vmem:[%s393 + $0x6c] sm:$0xf]
        %v422 = vld [vmem:[%s393 + $0x70] sm:$0xf]
        %v423 = vld [vmem:[%s393 + $0x74] sm:$0xf]
        %v424 = vld [vmem:[%s393 + $0x78] sm:$0xf]
        %v425 = vld [vmem:[%s393 + $0x7c] sm:$0xf]
        %s426 = smul.u32 %s385, 2
        %s427 = smul.addr %s426, 4
        %s428 = scalar_lea.vmem %s325, %s427 [#allocation2]
        %v429 = vld [vmem:[%s428] sm:$0xf]
        %v430 = vld [vmem:[%s428 + $0x4] sm:$0xf]
        %v431 = vld [vmem:[#allocation5] sm:$0xf]
        %v432 = vld [vmem:[#allocation5 + $0x4] sm:$0xf]
        %v433 = vld [vmem:[#allocation5 + $0x8] sm:$0xf]
        %v434 = vld [vmem:[#allocation5 + $0xc] sm:$0xf]
        %v435 = vld [vmem:[#allocation5 + $0x10] sm:$0xf]
        %v436 = vld [vmem:[#allocation5 + $0x14] sm:$0xf]
        %v437 = vld [vmem:[#allocation5 + $0x18] sm:$0xf]
        %v438 = vld [vmem:[#allocation5 + $0x1c] sm:$0xf]
        %v439 = vld [vmem:[#allocation5 + $0x20] sm:$0xf]
        %v440 = vld [vmem:[#allocation5 + $0x24] sm:$0xf]
        %v441 = vld [vmem:[#allocation5 + $0x28] sm:$0xf]
        %v442 = vld [vmem:[#allocation5 + $0x2c] sm:$0xf]
        %v443 = vld [vmem:[#allocation5 + $0x30] sm:$0xf]
        %v444 = vld [vmem:[#allocation5 + $0x34] sm:$0xf]
        %v445 = vld [vmem:[#allocation5 + $0x38] sm:$0xf]
        %v446 = vld [vmem:[#allocation5 + $0x3c] sm:$0xf]
        %v447 = vld [vmem:[#allocation7] sm:$0x1]
        %v449 = vperm.slane %v447, 0
        %v487 = vunpack.c.l.b16 %v389
        %v488 = vunpack.c.l.b16 %v390
        %v489 = vunpack.c.l.b16 %v394
        %v490 = vunpack.c.l.b16 %v395
        %v491 = vunpack.c.l.b16 %v396
        %v492 = vunpack.c.l.b16 %v397
        %v493 = vunpack.c.l.b16 %v398
        %v494 = vunpack.c.l.b16 %v399
        %v495 = vunpack.c.l.b16 %v400
        %v496 = vunpack.c.l.b16 %v401
        %v497 = vunpack.c.l.b16 %v402
        %v498 = vunpack.c.l.b16 %v403
        %v499 = vunpack.c.l.b16 %v404
        %v500 = vunpack.c.l.b16 %v405
        %v501 = vunpack.c.l.b16 %v406
        %v502 = vunpack.c.l.b16 %v407
        %v503 = vunpack.c.l.b16 %v408
        %v504 = vunpack.c.l.b16 %v409
        %v505 = vunpack.c.l.b16 %v410
        %v506 = vunpack.c.l.b16 %v411
        %v507 = vunpack.c.l.b16 %v412
        %v508 = vunpack.c.l.b16 %v413
        %v509 = vunpack.c.l.b16 %v414
        %v510 = vunpack.c.l.b16 %v415
        %v511 = vunpack.c.l.b16 %v416
        %v512 = vunpack.c.l.b16 %v417
        %v513 = vunpack.c.l.b16 %v418
        %v514 = vunpack.c.l.b16 %v419
        %v515 = vunpack.c.l.b16 %v420
        %v516 = vunpack.c.l.b16 %v421
        %v517 = vunpack.c.l.b16 %v422
        %v518 = vunpack.c.l.b16 %v423
        %v519 = vunpack.c.l.b16 %v424
        %v520 = vunpack.c.l.b16 %v425
        %v521 = vunpack.c.l.b16 %v429
        %v522 = vunpack.c.l.b16 %v430
        %v523 = vpack.c.b16 %v488, %v487
        %v524 = vpack.c.b16 %v490, %v489
        %v525 = vpack.c.b16 %v492, %v491
        %v526 = vpack.c.b16 %v494, %v493
        %v527 = vpack.c.b16 %v496, %v495
        %v528 = vpack.c.b16 %v498, %v497
        %v529 = vpack.c.b16 %v500, %v499
        %v530 = vpack.c.b16 %v502, %v501
        %v531 = vpack.c.b16 %v504, %v503
        %v532 = vpack.c.b16 %v506, %v505
        %v533 = vpack.c.b16 %v508, %v507
        %v534 = vpack.c.b16 %v510, %v509
        %v535 = vpack.c.b16 %v512, %v511
        %v536 = vpack.c.b16 %v514, %v513
        %v537 = vpack.c.b16 %v516, %v515
        %v538 = vpack.c.b16 %v518, %v517
        %v539 = vpack.c.b16 %v520, %v519
        %v540 = vpack.c.b16 %v522, %v521
        %v575 = vunpack.c.l.b16 %v431
        %v576 = vunpack.c.l.b16 %v432
        %v577 = vunpack.c.l.b16 %v433
        %v578 = vunpack.c.l.b16 %v434
        %v579 = vunpack.c.l.b16 %v435
        %v580 = vunpack.c.l.b16 %v436
        %v581 = vunpack.c.l.b16 %v437
        %v582 = vunpack.c.l.b16 %v438
        %v583 = vunpack.c.l.b16 %v439
        %v584 = vunpack.c.l.b16 %v440
        %v585 = vunpack.c.l.b16 %v441
        %v586 = vunpack.c.l.b16 %v442
        %v587 = vunpack.c.l.b16 %v443
        %v588 = vunpack.c.l.b16 %v444
        %v589 = vunpack.c.l.b16 %v445
        %v590 = vunpack.c.l.b16 %v446
        %v591 = vpack.c.b16 %v576, %v575
        %v592 = vpack.c.b16 %v578, %v577
        %v593 = vpack.c.b16 %v580, %v579
        %v594 = vpack.c.b16 %v582, %v581
        %v595 = vpack.c.b16 %v584, %v583
        %v596 = vpack.c.b16 %v586, %v585
        %v597 = vpack.c.b16 %v588, %v587
        %v598 = vpack.c.b16 %v590, %v589
        %607 = vmatpush.bf16.msra.mxu0 %v598
        %608 = vmatpush.bf16.msra.mxu0 %v597
        %609 = vmatpush.bf16.msra.mxu0 %v596
        %610 = vmatpush.bf16.msra.mxu0 %v595
        %611 = vmatpush.bf16.msra.mxu0 %v594
        %612 = vmatpush.bf16.msra.mxu0 %v593
        %613 = vmatpush.bf16.msra.mxu0 %v592
        %614 = vmatpush.bf16.msra.mxu0 %v591
        %615 = vmatmul.bf16.gmra.mxu0 %v523
        %v616 = vpop.f32.mrf.mxu0
        %v617 = vadd.f32 %v449, %v616
        %v618 = vpop.f32.mrf.mxu0
        %v619 = vadd.f32 %v449, %v618
        %620 = vmatmul.bf16.gmra.mxu0 %v524
        %v621 = vpop.f32.mrf.mxu0
        %v622 = vadd.f32 %v449, %v621
        %v623 = vpop.f32.mrf.mxu0
        %v624 = vadd.f32 %v449, %v623
        %625 = vmatmul.bf16.gmra.mxu0 %v525
        %v626 = vpop.f32.mrf.mxu0
        %v627 = vadd.f32 %v449, %v626
        %v628 = vpop.f32.mrf.mxu0
        %v629 = vadd.f32 %v449, %v628
        %630 = vmatmul.bf16.gmra.mxu0 %v526
        %v631 = vpop.f32.mrf.mxu0
        %v632 = vadd.f32 %v449, %v631
        %v633 = vpop.f32.mrf.mxu0
        %v634 = vadd.f32 %v449, %v633
        %635 = vmatmul.bf16.gmra.mxu0 %v527
        %v636 = vpop.f32.mrf.mxu0
        %v637 = vadd.f32 %v449, %v636
        %v638 = vpop.f32.mrf.mxu0
        %v639 = vadd.f32 %v449, %v638
        %640 = vmatmul.bf16.gmra.mxu0 %v528
        %v641 = vpop.f32.mrf.mxu0
        %v642 = vadd.f32 %v449, %v641
        %v643 = vpop.f32.mrf.mxu0
        %v644 = vadd.f32 %v449, %v643
        %645 = vmatmul.bf16.gmra.mxu0 %v529
        %v646 = vpop.f32.mrf.mxu0
        %v647 = vadd.f32 %v449, %v646
        %v648 = vpop.f32.mrf.mxu0
        %v649 = vadd.f32 %v449, %v648
        %650 = vmatmul.bf16.gmra.mxu0 %v530
        %v651 = vpop.f32.mrf.mxu0
        %v652 = vadd.f32 %v449, %v651
        %v653 = vpop.f32.mrf.mxu0
        %v654 = vadd.f32 %v449, %v653
        %655 = vmatmul.bf16.gmra.mxu0 %v531
        %v656 = vpop.f32.mrf.mxu0
        %v657 = vadd.f32 %v449, %v656
        %v658 = vpop.f32.mrf.mxu0
        %v659 = vadd.f32 %v449, %v658
        %660 = vmatmul.bf16.gmra.mxu0 %v532
        %v661 = vpop.f32.mrf.mxu0
        %v662 = vadd.f32 %v449, %v661
        %v663 = vpop.f32.mrf.mxu0
        %v664 = vadd.f32 %v449, %v663
        %665 = vmatmul.bf16.gmra.mxu0 %v533
        %v666 = vpop.f32.mrf.mxu0
        %v667 = vadd.f32 %v449, %v666
        %v668 = vpop.f32.mrf.mxu0
        %v669 = vadd.f32 %v449, %v668
        %670 = vmatmul.bf16.gmra.mxu0 %v534
        %v671 = vpop.f32.mrf.mxu0
        %v672 = vadd.f32 %v449, %v671
        %v673 = vpop.f32.mrf.mxu0
        %v674 = vadd.f32 %v449, %v673
        %675 = vmatmul.bf16.gmra.mxu0 %v535
        %v676 = vpop.f32.mrf.mxu0
        %v677 = vadd.f32 %v449, %v676
        %v678 = vpop.f32.mrf.mxu0
        %v679 = vadd.f32 %v449, %v678
        %680 = vmatmul.bf16.gmra.mxu0 %v536
        %v681 = vpop.f32.mrf.mxu0
        %v682 = vadd.f32 %v449, %v681
        %v683 = vpop.f32.mrf.mxu0
        %v684 = vadd.f32 %v449, %v683
        %685 = vmatmul.bf16.gmra.mxu0 %v537
        %v686 = vpop.f32.mrf.mxu0
        %v687 = vadd.f32 %v449, %v686
        %v688 = vpop.f32.mrf.mxu0
        %v689 = vadd.f32 %v449, %v688
        %690 = vmatmul.bf16.gmra.mxu0 %v538
        %v691 = vpop.f32.mrf.mxu0
        %v692 = vadd.f32 %v449, %v691
        %v693 = vpop.f32.mrf.mxu0
        %v694 = vadd.f32 %v449, %v693
        %695 = vmatmul.bf16.gmra.mxu0 %v539
        %v696 = vpop.f32.mrf.mxu0
        %v697 = vadd.f32 %v449, %v696
        %v698 = vpop.f32.mrf.mxu0
        %v699 = vadd.f32 %v449, %v698
        %700 = vmatmul.bf16.gmra.mxu0 %v540
        %v701 = vpop.f32.mrf.mxu0
        %v702 = vadd.f32 %v449, %v701
        %v703 = vpop.f32.mrf.mxu0
        %v704 = vadd.f32 %v449, %v703
        %705 = vdwg.mxu0
        %v706 = vmax.f32 %v617, 0.0
        %v707 = vmax.f32 %v619, 0.0
        %v708 = vmax.f32 %v622, 0.0
        %v709 = vmax.f32 %v624, 0.0
        %v710 = vmax.f32 %v627, 0.0
        %v711 = vmax.f32 %v629, 0.0
        %v712 = vmax.f32 %v632, 0.0
        %v713 = vmax.f32 %v634, 0.0
        %v714 = vmax.f32 %v637, 0.0
        %v715 = vmax.f32 %v639, 0.0
        %v716 = vmax.f32 %v642, 0.0
        %v717 = vmax.f32 %v644, 0.0
        %v718 = vmax.f32 %v647, 0.0
        %v719 = vmax.f32 %v649, 0.0
        %v720 = vmax.f32 %v652, 0.0
        %v721 = vmax.f32 %v654, 0.0
        %v722 = vmax.f32 %v657, 0.0
        %v723 = vmax.f32 %v659, 0.0
        %v724 = vmax.f32 %v662, 0.0
        %v725 = vmax.f32 %v664, 0.0
        %v726 = vmax.f32 %v667, 0.0
        %v727 = vmax.f32 %v669, 0.0
        %v728 = vmax.f32 %v672, 0.0
        %v729 = vmax.f32 %v674, 0.0
        %v730 = vmax.f32 %v677, 0.0
        %v731 = vmax.f32 %v679, 0.0
        %v732 = vmax.f32 %v682, 0.0
        %v733 = vmax.f32 %v684, 0.0
        %v734 = vmax.f32 %v687, 0.0
        %v735 = vmax.f32 %v689, 0.0
        %v736 = vmax.f32 %v692, 0.0
        %v737 = vmax.f32 %v694, 0.0
        %v738 = vmax.f32 %v697, 0.0
        %v739 = vmax.f32 %v699, 0.0
        %v740 = vmax.f32 %v702, 0.0
        %v741 = vmax.f32 %v704, 0.0
        %v742 = vstv %s380
        %v743 = vadd.s32 %v742, 1
        %v744 = vadd.s32 %v742, 2
        %v745 = vadd.s32 %v742, 3
        %v746 = vadd.s32 %v742, 4
        %v747 = vadd.s32 %v742, 5
        %v748 = vadd.s32 %v742, 6
        %v749 = vadd.s32 %v742, 7
        %v750 = vadd.s32 %v742, 8
        %v751 = vadd.s32 %v742, 9
        %v752 = vadd.s32 %v742, 10
        %v753 = vadd.s32 %v742, 11
        %v754 = vadd.s32 %v742, 12
        %v755 = vadd.s32 %v742, 13
        %v756 = vadd.s32 %v742, 14
        %v757 = vadd.s32 %v742, 15
        %v758 = vadd.s32 %v742, 16
        %v759 = vadd.s32 %v742, 17
        %vm760 = vcmp.ge.s32.totalorder %v742, 0
        %vm761 = vcmp.ge.s32.totalorder %v743, 0
        %vm762 = vcmp.ge.s32.totalorder %v744, 0
        %vm763 = vcmp.ge.s32.totalorder %v745, 0
        %vm764 = vcmp.ge.s32.totalorder %v746, 0
        %vm765 = vcmp.ge.s32.totalorder %v747, 0
        %vm766 = vcmp.ge.s32.totalorder %v748, 0
        %vm767 = vcmp.ge.s32.totalorder %v749, 0
        %vm768 = vcmp.ge.s32.totalorder %v750, 0
        %vm769 = vcmp.ge.s32.totalorder %v751, 0
        %vm770 = vcmp.ge.s32.totalorder %v752, 0
        %vm771 = vcmp.ge.s32.totalorder %v753, 0
        %vm772 = vcmp.ge.s32.totalorder %v754, 0
        %vm773 = vcmp.ge.s32.totalorder %v755, 0
        %vm774 = vcmp.ge.s32.totalorder %v756, 0
        %vm775 = vcmp.ge.s32.totalorder %v757, 0
        %vm776 = vcmp.ge.s32.totalorder %v758, 0
        %vm777 = vcmp.ge.s32.totalorder %v759, 0
        %vm778 = vcmp.lt.s32.totalorder %v742, 16
        %vm779 = vcmp.lt.s32.totalorder %v743, 16
        %vm780 = vcmp.lt.s32.totalorder %v744, 16
        %vm781 = vcmp.lt.s32.totalorder %v745, 16
        %vm782 = vcmp.lt.s32.totalorder %v746, 16
        %vm783 = vcmp.lt.s32.totalorder %v747, 16
        %vm784 = vcmp.lt.s32.totalorder %v748, 16
        %vm785 = vcmp.lt.s32.totalorder %v749, 16
        %vm786 = vcmp.lt.s32.totalorder %v750, 16
        %vm787 = vcmp.lt.s32.totalorder %v751, 16
        %vm788 = vcmp.lt.s32.totalorder %v752, 16
        %vm789 = vcmp.lt.s32.totalorder %v753, 16
        %vm790 = vcmp.lt.s32.totalorder %v754, 16
        %vm791 = vcmp.lt.s32.totalorder %v755, 16
        %vm792 = vcmp.lt.s32.totalorder %v756, 16
        %vm793 = vcmp.lt.s32.totalorder %v757, 16
        %vm794 = vcmp.lt.s32.totalorder %v758, 16
        %vm795 = vcmp.lt.s32.totalorder %v759, 16
        %vm796 = vmand %vm760, %vm778
        %vm797 = vmand %vm761, %vm779
        %vm798 = vmand %vm762, %vm780
        %vm799 = vmand %vm763, %vm781
        %vm800 = vmand %vm764, %vm782
        %vm801 = vmand %vm765, %vm783
        %vm802 = vmand %vm766, %vm784
        %vm803 = vmand %vm767, %vm785
        %vm804 = vmand %vm768, %vm786
        %vm805 = vmand %vm769, %vm787
        %vm806 = vmand %vm770, %vm788
        %vm807 = vmand %vm771, %vm789
        %vm808 = vmand %vm772, %vm790
        %vm809 = vmand %vm773, %vm791
        %vm810 = vmand %vm774, %vm792
        %vm811 = vmand %vm775, %vm793
        %vm812 = vmand %vm776, %vm794
        %vm813 = vmand %vm777, %vm795
        %v814 = vsel %vm796, 1, 0
        %v815 = vsel %vm797, 1, 0
        %v816 = vsel %vm798, 1, 0
        %v817 = vsel %vm799, 1, 0
        %v818 = vsel %vm800, 1, 0
        %v819 = vsel %vm801, 1, 0
        %v820 = vsel %vm802, 1, 0
        %v821 = vsel %vm803, 1, 0
        %v822 = vsel %vm804, 1, 0
        %v823 = vsel %vm805, 1, 0
        %v824 = vsel %vm806, 1, 0
        %v825 = vsel %vm807, 1, 0
        %v826 = vsel %vm808, 1, 0
        %v827 = vsel %vm809, 1, 0
        %v828 = vsel %vm810, 1, 0
        %v829 = vsel %vm811, 1, 0
        %v830 = vsel %vm812, 1, 0
        %v831 = vsel %vm813, 1, 0
        %vm832 = vcmp.eq.s32.totalorder %v814, 1
        %vm833 = vcmp.eq.s32.totalorder %v815, 1
        %vm834 = vcmp.eq.s32.totalorder %v816, 1
        %vm835 = vcmp.eq.s32.totalorder %v817, 1
        %vm836 = vcmp.eq.s32.totalorder %v818, 1
        %vm837 = vcmp.eq.s32.totalorder %v819, 1
        %vm838 = vcmp.eq.s32.totalorder %v820, 1
        %vm839 = vcmp.eq.s32.totalorder %v821, 1
        %vm840 = vcmp.eq.s32.totalorder %v822, 1
        %vm841 = vcmp.eq.s32.totalorder %v823, 1
        %vm842 = vcmp.eq.s32.totalorder %v824, 1
        %vm843 = vcmp.eq.s32.totalorder %v825, 1
        %vm844 = vcmp.eq.s32.totalorder %v826, 1
        %vm845 = vcmp.eq.s32.totalorder %v827, 1
        %vm846 = vcmp.eq.s32.totalorder %v828, 1
        %vm847 = vcmp.eq.s32.totalorder %v829, 1
        %vm848 = vcmp.eq.s32.totalorder %v830, 1
        %vm849 = vcmp.eq.s32.totalorder %v831, 1
        %v850 = vsel %vm832, %v706, 0.0
        %v851 = vsel %vm832, %v707, 0.0
        %v852 = vsel %vm833, %v708, 0.0
        %v853 = vsel %vm833, %v709, 0.0
        %v854 = vsel %vm834, %v710, 0.0
        %v855 = vsel %vm834, %v711, 0.0
        %v856 = vsel %vm835, %v712, 0.0
        %v857 = vsel %vm835, %v713, 0.0
        %v858 = vsel %vm836, %v714, 0.0
        %v859 = vsel %vm836, %v715, 0.0
        %v860 = vsel %vm837, %v716, 0.0
        %v861 = vsel %vm837, %v717, 0.0
        %v862 = vsel %vm838, %v718, 0.0
        %v863 = vsel %vm838, %v719, 0.0
        %v864 = vsel %vm839, %v720, 0.0
        %v865 = vsel %vm839, %v721, 0.0
        %v866 = vsel %vm840, %v722, 0.0
        %v867 = vsel %vm840, %v723, 0.0
        %v868 = vsel %vm841, %v724, 0.0
        %v869 = vsel %vm841, %v725, 0.0
        %v870 = vsel %vm842, %v726, 0.0
        %v871 = vsel %vm842, %v727, 0.0
        %v872 = vsel %vm843, %v728, 0.0
        %v873 = vsel %vm843, %v729, 0.0
        %v874 = vsel %vm844, %v730, 0.0
        %v875 = vsel %vm844, %v731, 0.0
        %v876 = vsel %vm845, %v732, 0.0
        %v877 = vsel %vm845, %v733, 0.0
        %v878 = vsel %vm846, %v734, 0.0
        %v879 = vsel %vm846, %v735, 0.0
        %v880 = vsel %vm847, %v736, 0.0
        %v881 = vsel %vm847, %v737, 0.0
        %v882 = vsel %vm848, %v738, 0.0
        %v883 = vsel %vm848, %v739, 0.0
        %v884 = vsel %vm849, %v740, 0.0
        %v885 = vsel %vm849, %v741, 0.0
        %v886 = vpack.c.bf16 %v850, %v850
        %v887 = vpack.c.bf16 %v851, %v851
        %v888 = vpack.c.bf16 %v852, %v852
        %v889 = vpack.c.bf16 %v853, %v853
        %v890 = vpack.c.bf16 %v854, %v854
        %v891 = vpack.c.bf16 %v855, %v855
        %v892 = vpack.c.bf16 %v856, %v856
        %v893 = vpack.c.bf16 %v857, %v857
        %v894 = vpack.c.bf16 %v858, %v858
        %v895 = vpack.c.bf16 %v859, %v859
        %v896 = vpack.c.bf16 %v860, %v860
        %v897 = vpack.c.bf16 %v861, %v861
        %v898 = vpack.c.bf16 %v862, %v862
        %v899 = vpack.c.bf16 %v863, %v863
        %v900 = vpack.c.bf16 %v864, %v864
        %v901 = vpack.c.bf16 %v865, %v865
        %v902 = vpack.c.bf16 %v866, %v866
        %v903 = vpack.c.bf16 %v867, %v867
        %v904 = vpack.c.bf16 %v868, %v868
        %v905 = vpack.c.bf16 %v869, %v869
        %v906 = vpack.c.bf16 %v870, %v870
        %v907 = vpack.c.bf16 %v871, %v871
        %v908 = vpack.c.bf16 %v872, %v872
        %v909 = vpack.c.bf16 %v873, %v873
        %v910 = vpack.c.bf16 %v874, %v874
        %v911 = vpack.c.bf16 %v875, %v875
        %v912 = vpack.c.bf16 %v876, %v876
        %v913 = vpack.c.bf16 %v877, %v877
        %v914 = vpack.c.bf16 %v878, %v878
        %v915 = vpack.c.bf16 %v879, %v879
        %v916 = vpack.c.bf16 %v880, %v880
        %v917 = vpack.c.bf16 %v881, %v881
        %v918 = vpack.c.bf16 %v882, %v882
        %v919 = vpack.c.bf16 %v883, %v883
        %v920 = vpack.c.bf16 %v884, %v884
        %v921 = vpack.c.bf16 %v885, %v885
        %v958 = vunpack.c.l.b16 %v886
        %v959 = vunpack.c.l.b16 %v887
        %v960 = vunpack.c.l.b16 %v888
        %v961 = vunpack.c.l.b16 %v889
        %v962 = vunpack.c.l.b16 %v890
        %v963 = vunpack.c.l.b16 %v891
        %v964 = vunpack.c.l.b16 %v892
        %v965 = vunpack.c.l.b16 %v893
        %v966 = vunpack.c.l.b16 %v894
        %v967 = vunpack.c.l.b16 %v895
        %v968 = vunpack.c.l.b16 %v896
        %v969 = vunpack.c.l.b16 %v897
        %v970 = vunpack.c.l.b16 %v898
        %v971 = vunpack.c.l.b16 %v899
        %v972 = vunpack.c.l.b16 %v900
        %v973 = vunpack.c.l.b16 %v901
        %v974 = vunpack.c.l.b16 %v902
        %v975 = vunpack.c.l.b16 %v903
        %v976 = vunpack.c.l.b16 %v904
        %v977 = vunpack.c.l.b16 %v905
        %v978 = vunpack.c.l.b16 %v906
        %v979 = vunpack.c.l.b16 %v907
        %v980 = vunpack.c.l.b16 %v908
        %v981 = vunpack.c.l.b16 %v909
        %v982 = vunpack.c.l.b16 %v910
        %v983 = vunpack.c.l.b16 %v911
        %v984 = vunpack.c.l.b16 %v912
        %v985 = vunpack.c.l.b16 %v913
        %v986 = vunpack.c.l.b16 %v914
        %v987 = vunpack.c.l.b16 %v915
        %v988 = vunpack.c.l.b16 %v916
        %v989 = vunpack.c.l.b16 %v917
        %v990 = vunpack.c.l.b16 %v918
        %v991 = vunpack.c.l.b16 %v919
        %v992 = vunpack.c.l.b16 %v920
        %v993 = vunpack.c.l.b16 %v921
        %v994 = vpack.c.b16 %v959, %v958
        %v995 = vpack.c.b16 %v961, %v960
        %v996 = vpack.c.b16 %v963, %v962
        %v997 = vpack.c.b16 %v965, %v964
        %v998 = vpack.c.b16 %v967, %v966
        %v999 = vpack.c.b16 %v969, %v968
        %v1000 = vpack.c.b16 %v971, %v970
        %v1001 = vpack.c.b16 %v973, %v972
        %v1002 = vpack.c.b16 %v975, %v974
        %v1003 = vpack.c.b16 %v977, %v976
        %v1004 = vpack.c.b16 %v979, %v978
        %v1005 = vpack.c.b16 %v981, %v980
        %v1006 = vpack.c.b16 %v983, %v982
        %v1007 = vpack.c.b16 %v985, %v984
        %v1008 = vpack.c.b16 %v987, %v986
        %v1009 = vpack.c.b16 %v989, %v988
        %v1010 = vpack.c.b16 %v991, %v990
        %v1011 = vpack.c.b16 %v993, %v992
        %v1013 = vshrl.u32 %v994, 16
        %v1015 = vrot.slane %v1013, 7
        %v1016 = vshll.u32 %v994, 16
        %v1018 = vor.u32 %v1015, %v1016
        %v1020 = vshrl.u32 %v995, 16
        %v1022 = vrot.slane %v1020, 7
        %v1023 = vshll.u32 %v995, 16
        %v1025 = vor.u32 %v1022, %v1023
        %v1027 = vshrl.u32 %v996, 16
        %v1029 = vrot.slane %v1027, 7
        %v1030 = vshll.u32 %v996, 16
        %v1032 = vor.u32 %v1029, %v1030
        %v1034 = vshrl.u32 %v997, 16
        %v1036 = vrot.slane %v1034, 7
        %v1037 = vshll.u32 %v997, 16
        %v1039 = vor.u32 %v1036, %v1037
        %v1041 = vshrl.u32 %v998, 16
        %v1043 = vrot.slane %v1041, 7
        %v1044 = vshll.u32 %v998, 16
        %v1046 = vor.u32 %v1043, %v1044
        %v1048 = vshrl.u32 %v999, 16
        %v1050 = vrot.slane %v1048, 7
        %v1051 = vshll.u32 %v999, 16
        %v1053 = vor.u32 %v1050, %v1051
        %v1055 = vshrl.u32 %v1000, 16
        %v1057 = vrot.slane %v1055, 7
        %v1058 = vshll.u32 %v1000, 16
        %v1060 = vor.u32 %v1057, %v1058
        %v1062 = vshrl.u32 %v1001, 16
        %v1064 = vrot.slane %v1062, 7
        %v1065 = vshll.u32 %v1001, 16
        %v1067 = vor.u32 %v1064, %v1065
        %v1069 = vshrl.u32 %v1002, 16
        %v1071 = vrot.slane %v1069, 7
        %v1072 = vshll.u32 %v1002, 16
        %v1074 = vor.u32 %v1071, %v1072
        %v1076 = vshrl.u32 %v1003, 16
        %v1078 = vrot.slane %v1076, 7
        %v1079 = vshll.u32 %v1003, 16
        %v1081 = vor.u32 %v1078, %v1079
        %v1083 = vshrl.u32 %v1004, 16
        %v1085 = vrot.slane %v1083, 7
        %v1086 = vshll.u32 %v1004, 16
        %v1088 = vor.u32 %v1085, %v1086
        %v1090 = vshrl.u32 %v1005, 16
        %v1092 = vrot.slane %v1090, 7
        %v1093 = vshll.u32 %v1005, 16
        %v1095 = vor.u32 %v1092, %v1093
        %v1097 = vshrl.u32 %v1006, 16
        %v1099 = vrot.slane %v1097, 7
        %v1100 = vshll.u32 %v1006, 16
        %v1102 = vor.u32 %v1099, %v1100
        %v1104 = vshrl.u32 %v1007, 16
        %v1106 = vrot.slane %v1104, 7
        %v1107 = vshll.u32 %v1007, 16
        %v1109 = vor.u32 %v1106, %v1107
        %v1111 = vshrl.u32 %v1008, 16
        %v1113 = vrot.slane %v1111, 7
        %v1114 = vshll.u32 %v1008, 16
        %v1116 = vor.u32 %v1113, %v1114
        %v1118 = vshrl.u32 %v1009, 16
        %v1120 = vrot.slane %v1118, 7
        %v1121 = vshll.u32 %v1009, 16
        %v1123 = vor.u32 %v1120, %v1121
        %v1125 = vshrl.u32 %v1010, 16
        %v1127 = vrot.slane %v1125, 7
        %v1128 = vshll.u32 %v1010, 16
        %v1130 = vor.u32 %v1127, %v1128
        %v1132 = vshrl.u32 %v1011, 16
        %v1134 = vrot.slane %v1132, 7
        %v1135 = vshll.u32 %v1011, 16
        %v1137 = vor.u32 %v1134, %v1135
        %vm1174 = vcmask 1040384
        %vm1175 = vsmask.f32 256
        %vm1176 = vmand %vm1174, %vm1175
        %v1177 = vsel %vm1176, 0, %v1018
        %v1178 = vsel %vm1176, 0, %v1025
        %v1179 = vsel %vm1176, 0, %v1032
        %v1180 = vsel %vm1176, 0, %v1039
        %v1181 = vsel %vm1176, 0, %v1046
        %v1182 = vsel %vm1176, 0, %v1053
        %v1183 = vsel %vm1176, 0, %v1060
        %v1184 = vsel %vm1176, 0, %v1067
        %v1185 = vsel %vm1176, 0, %v1074
        %v1186 = vsel %vm1176, 0, %v1081
        %v1187 = vsel %vm1176, 0, %v1088
        %v1188 = vsel %vm1176, 0, %v1095
        %v1189 = vsel %vm1176, 0, %v1102
        %v1190 = vsel %vm1176, 0, %v1109
        %v1191 = vsel %vm1176, 0, %v1116
        %v1192 = vsel %vm1176, 0, %v1123
        %v1193 = vsel %vm1176, 0, %v1130
        %v1194 = vsel %vm1176, 0, %v1137
        %v1195 = vsel %vm1176, %v1015, 0
        %v1196 = vsel %vm1176, %v1022, 0
        %v1197 = vsel %vm1176, %v1029, 0
        %v1198 = vsel %vm1176, %v1036, 0
        %v1199 = vsel %vm1176, %v1043, 0
        %v1200 = vsel %vm1176, %v1050, 0
        %v1201 = vsel %vm1176, %v1057, 0
        %v1202 = vsel %vm1176, %v1064, 0
        %v1203 = vsel %vm1176, %v1071, 0
        %v1204 = vsel %vm1176, %v1078, 0
        %v1205 = vsel %vm1176, %v1085, 0
        %v1206 = vsel %vm1176, %v1092, 0
        %v1207 = vsel %vm1176, %v1099, 0
        %v1208 = vsel %vm1176, %v1106, 0
        %v1209 = vsel %vm1176, %v1113, 0
        %v1210 = vsel %vm1176, %v1120, 0
        %v1211 = vsel %vm1176, %v1127, 0
        %v1212 = vsel %vm1176, %v1134, 0
        %v1213 = vld [vmem:[#allocation8] sm:$0xf]
        %v1214 = vld [vmem:[#allocation8 + $0x4] sm:$0xf]
        %v1215 = vld [vmem:[#allocation8 + $0x8] sm:$0xf]
        %v1216 = vld [vmem:[#allocation8 + $0xc] sm:$0xf]
        %vm1217 = vsmask.f32 7424
        %v1219 = vshrl.u32 %v1177, 16
        %v1221 = vshll.u32 %v1177, 16
        %v1223 = vrot.slane %v1221, 1
        %v1224 = vor.u32 %v1219, %v1223
        %v1226 = vshll.u32 %v1195, 16
        %v1228 = vrot.slane %v1226, 1
        %v1229 = vsel %vm1217, %v1224, %v1228
        %v1231 = vshrl.u32 %v1178, 16
        %v1233 = vshll.u32 %v1178, 16
        %v1235 = vrot.slane %v1233, 1
        %v1236 = vor.u32 %v1231, %v1235
        %v1238 = vshll.u32 %v1196, 16
        %v1240 = vrot.slane %v1238, 1
        %v1241 = vsel %vm1217, %v1236, %v1240
        %v1243 = vshrl.u32 %v1179, 16
        %v1245 = vshll.u32 %v1179, 16
        %v1247 = vrot.slane %v1245, 1
        %v1248 = vor.u32 %v1243, %v1247
        %v1250 = vshll.u32 %v1197, 16
        %v1252 = vrot.slane %v1250, 1
        %v1253 = vsel %vm1217, %v1248, %v1252
        %v1255 = vshrl.u32 %v1180, 16
        %v1257 = vshll.u32 %v1180, 16
        %v1259 = vrot.slane %v1257, 1
        %v1260 = vor.u32 %v1255, %v1259
        %v1262 = vshll.u32 %v1198, 16
        %v1264 = vrot.slane %v1262, 1
        %v1265 = vsel %vm1217, %v1260, %v1264
        %v1267 = vshrl.u32 %v1181, 16
        %v1269 = vshll.u32 %v1181, 16
        %v1271 = vrot.slane %v1269, 1
        %v1272 = vor.u32 %v1267, %v1271
        %v1274 = vshll.u32 %v1199, 16
        %v1276 = vrot.slane %v1274, 1
        %v1277 = vsel %vm1217, %v1272, %v1276
        %v1279 = vshrl.u32 %v1182, 16
        %v1281 = vshll.u32 %v1182, 16
        %v1283 = vrot.slane %v1281, 1
        %v1284 = vor.u32 %v1279, %v1283
        %v1286 = vshll.u32 %v1200, 16
        %v1288 = vrot.slane %v1286, 1
        %v1289 = vsel %vm1217, %v1284, %v1288
        %v1291 = vshrl.u32 %v1183, 16
        %v1293 = vshll.u32 %v1183, 16
        %v1295 = vrot.slane %v1293, 1
        %v1296 = vor.u32 %v1291, %v1295
        %v1298 = vshll.u32 %v1201, 16
        %v1300 = vrot.slane %v1298, 1
        %v1301 = vsel %vm1217, %v1296, %v1300
        %v1303 = vshrl.u32 %v1184, 16
        %v1305 = vshll.u32 %v1184, 16
        %v1307 = vrot.slane %v1305, 1
        %v1308 = vor.u32 %v1303, %v1307
        %v1310 = vshll.u32 %v1202, 16
        %v1312 = vrot.slane %v1310, 1
        %v1313 = vsel %vm1217, %v1308, %v1312
        %v1315 = vshrl.u32 %v1185, 16
        %v1317 = vshll.u32 %v1185, 16
        %v1319 = vrot.slane %v1317, 1
        %v1320 = vor.u32 %v1315, %v1319
        %v1322 = vshll.u32 %v1203, 16
        %v1324 = vrot.slane %v1322, 1
        %v1325 = vsel %vm1217, %v1320, %v1324
        %v1327 = vshrl.u32 %v1186, 16
        %v1329 = vshll.u32 %v1186, 16
        %v1331 = vrot.slane %v1329, 1
        %v1332 = vor.u32 %v1327, %v1331
        %v1334 = vshll.u32 %v1204, 16
        %v1336 = vrot.slane %v1334, 1
        %v1337 = vsel %vm1217, %v1332, %v1336
        %v1339 = vshrl.u32 %v1187, 16
        %v1341 = vshll.u32 %v1187, 16
        %v1343 = vrot.slane %v1341, 1
        %v1344 = vor.u32 %v1339, %v1343
        %v1346 = vshll.u32 %v1205, 16
        %v1348 = vrot.slane %v1346, 1
        %v1349 = vsel %vm1217, %v1344, %v1348
        %v1351 = vshrl.u32 %v1188, 16
        %v1353 = vshll.u32 %v1188, 16
        %v1355 = vrot.slane %v1353, 1
        %v1356 = vor.u32 %v1351, %v1355
        %v1358 = vshll.u32 %v1206, 16
        %v1360 = vrot.slane %v1358, 1
        %v1361 = vsel %vm1217, %v1356, %v1360
        %v1363 = vshrl.u32 %v1189, 16
        %v1365 = vshll.u32 %v1189, 16
        %v1367 = vrot.slane %v1365, 1
        %v1368 = vor.u32 %v1363, %v1367
        %v1370 = vshll.u32 %v1207, 16
        %v1372 = vrot.slane %v1370, 1
        %v1373 = vsel %vm1217, %v1368, %v1372
        %v1375 = vshrl.u32 %v1190, 16
        %v1377 = vshll.u32 %v1190, 16
        %v1379 = vrot.slane %v1377, 1
        %v1380 = vor.u32 %v1375, %v1379
        %v1382 = vshll.u32 %v1208, 16
        %v1384 = vrot.slane %v1382, 1
        %v1385 = vsel %vm1217, %v1380, %v1384
        %v1387 = vshrl.u32 %v1191, 16
        %v1389 = vshll.u32 %v1191, 16
        %v1391 = vrot.slane %v1389, 1
        %v1392 = vor.u32 %v1387, %v1391
        %v1394 = vshll.u32 %v1209, 16
        %v1396 = vrot.slane %v1394, 1
        %v1397 = vsel %vm1217, %v1392, %v1396
        %v1399 = vshrl.u32 %v1192, 16
        %v1401 = vshll.u32 %v1192, 16
        %v1403 = vrot.slane %v1401, 1
        %v1404 = vor.u32 %v1399, %v1403
        %v1406 = vshll.u32 %v1210, 16
        %v1408 = vrot.slane %v1406, 1
        %v1409 = vsel %vm1217, %v1404, %v1408
        %s1410 = scalar_lea.vmem [#allocation8], 16
        %v1411 = vld [vmem:[%s1410] sm:$0xf]
        %v1412 = vld [vmem:[%s1410 + $0x4] sm:$0xf]
        %v1413 = vld [vmem:[%s1410 + $0x8] sm:$0xf]
        %v1414 = vld [vmem:[%s1410 + $0xc] sm:$0xf]
        %v1419 = vunpack.c.l.b16 %v1411
        %v1420 = vunpack.c.l.b16 %v1412
        %v1421 = vunpack.c.l.b16 %v1413
        %v1422 = vunpack.c.l.b16 %v1414
        %v1423 = vpack.c.b16 %v1420, %v1419
        %v1424 = vpack.c.b16 %v1422, %v1421
        %vm1427 = vcmask 261120
        %v1429 = vsel %vm1427, %v1229, 0
        %v1432 = vsel %vm1427, %v1241, 0
        %v1435 = vsel %vm1427, %v1253, 0
        %v1438 = vsel %vm1427, %v1265, 0
        %v1441 = vsel %vm1427, %v1277, 0
        %v1444 = vsel %vm1427, %v1289, 0
        %v1447 = vsel %vm1427, %v1301, 0
        %v1450 = vsel %vm1427, %v1313, 0
        %v1453 = vsel %vm1427, %v1325, 0
        %v1456 = vsel %vm1427, %v1337, 0
        %v1459 = vsel %vm1427, %v1349, 0
        %v1462 = vsel %vm1427, %v1361, 0
        %v1465 = vsel %vm1427, %v1373, 0
        %v1468 = vsel %vm1427, %v1385, 0
        %v1471 = vsel %vm1427, %v1397, 0
        %v1474 = vsel %vm1427, %v1409, 0
        %1476 = vmatpush.bf16.msra.mxu0 0
        %1477 = vmatpush.bf16.msra.mxu0 0
        %1478 = vmatpush.bf16.msra.mxu0 0
        %1479 = vmatpush.bf16.msra.mxu0 0
        %1480 = vmatpush.bf16.msra.mxu0 0
        %1481 = vmatpush.bf16.msra.mxu0 0
        %1482 = vmatpush.bf16.msra.mxu0 %v1424
        %1483 = vmatpush.bf16.msra.mxu0 %v1423
        %1484 = vmatmul.bf16.gmra.mxu0 %v1429
        %v1485 = vpop.f32.mrf.mxu0
        %v1486 = vadd.f32 0.0, %v1485
        %v1487 = vpop.f32.mrf.mxu0
        %v1488 = vadd.f32 0.0, %v1487
        %1489 = vmatmul.bf16.gmra.mxu0 %v1432
        %v1490 = vpop.f32.mrf.mxu0
        %v1491 = vadd.f32 0.0, %v1490
        %v1492 = vpop.f32.mrf.mxu0
        %v1493 = vadd.f32 0.0, %v1492
        %1494 = vmatmul.bf16.gmra.mxu0 %v1435
        %v1495 = vpop.f32.mrf.mxu0
        %v1496 = vadd.f32 0.0, %v1495
        %v1497 = vpop.f32.mrf.mxu0
        %v1498 = vadd.f32 0.0, %v1497
        %1499 = vmatmul.bf16.gmra.mxu0 %v1438
        %v1500 = vpop.f32.mrf.mxu0
        %v1501 = vadd.f32 0.0, %v1500
        %v1502 = vpop.f32.mrf.mxu0
        %v1503 = vadd.f32 0.0, %v1502
        %1504 = vmatmul.bf16.gmra.mxu0 %v1441
        %v1505 = vpop.f32.mrf.mxu0
        %v1506 = vadd.f32 0.0, %v1505
        %v1507 = vpop.f32.mrf.mxu0
        %v1508 = vadd.f32 0.0, %v1507
        %1509 = vmatmul.bf16.gmra.mxu0 %v1444
        %v1510 = vpop.f32.mrf.mxu0
        %v1511 = vadd.f32 0.0, %v1510
        %v1512 = vpop.f32.mrf.mxu0
        %v1513 = vadd.f32 0.0, %v1512
        %1514 = vmatmul.bf16.gmra.mxu0 %v1447
        %v1515 = vpop.f32.mrf.mxu0
        %v1516 = vadd.f32 0.0, %v1515
        %v1517 = vpop.f32.mrf.mxu0
        %v1518 = vadd.f32 0.0, %v1517
        %1519 = vmatmul.bf16.gmra.mxu0 %v1450
        %v1520 = vpop.f32.mrf.mxu0
        %v1521 = vadd.f32 0.0, %v1520
        %v1522 = vpop.f32.mrf.mxu0
        %v1523 = vadd.f32 0.0, %v1522
        %1524 = vmatmul.bf16.gmra.mxu0 %v1453
        %v1525 = vpop.f32.mrf.mxu0
        %v1526 = vadd.f32 0.0, %v1525
        %v1527 = vpop.f32.mrf.mxu0
        %v1528 = vadd.f32 0.0, %v1527
        %1529 = vmatmul.bf16.gmra.mxu0 %v1456
        %v1530 = vpop.f32.mrf.mxu0
        %v1531 = vadd.f32 0.0, %v1530
        %v1532 = vpop.f32.mrf.mxu0
        %v1533 = vadd.f32 0.0, %v1532
        %1534 = vmatmul.bf16.gmra.mxu0 %v1459
        %v1535 = vpop.f32.mrf.mxu0
        %v1536 = vadd.f32 0.0, %v1535
        %v1537 = vpop.f32.mrf.mxu0
        %v1538 = vadd.f32 0.0, %v1537
        %1539 = vmatmul.bf16.gmra.mxu0 %v1462
        %v1540 = vpop.f32.mrf.mxu0
        %v1541 = vadd.f32 0.0, %v1540
        %v1542 = vpop.f32.mrf.mxu0
        %v1543 = vadd.f32 0.0, %v1542
        %1544 = vmatmul.bf16.gmra.mxu0 %v1465
        %v1545 = vpop.f32.mrf.mxu0
        %v1546 = vadd.f32 0.0, %v1545
        %v1547 = vpop.f32.mrf.mxu0
        %v1548 = vadd.f32 0.0, %v1547
        %1549 = vmatmul.bf16.gmra.mxu0 %v1468
        %v1550 = vpop.f32.mrf.mxu0
        %v1551 = vadd.f32 0.0, %v1550
        %v1552 = vpop.f32.mrf.mxu0
        %v1553 = vadd.f32 0.0, %v1552
        %1554 = vmatmul.bf16.gmra.mxu0 %v1471
        %v1555 = vpop.f32.mrf.mxu0
        %v1556 = vadd.f32 0.0, %v1555
        %v1557 = vpop.f32.mrf.mxu0
        %v1558 = vadd.f32 0.0, %v1557
        %1559 = vmatmul.bf16.gmra.mxu0 %v1474
        %v1560 = vpop.f32.mrf.mxu0
        %v1561 = vadd.f32 0.0, %v1560
        %v1562 = vpop.f32.mrf.mxu0
        %v1563 = vadd.f32 0.0, %v1562
        %1564 = vdwg.mxu0
        %v1569 = vunpack.c.l.b16 %v1213
        %v1570 = vunpack.c.l.b16 %v1214
        %v1571 = vunpack.c.l.b16 %v1215
        %v1572 = vunpack.c.l.b16 %v1216
        %v1573 = vpack.c.b16 %v1570, %v1569
        %v1574 = vpack.c.b16 %v1572, %v1571
        %v1577 = vsel %vm1427, %v1177, 0
        %v1579 = vsel %vm1427, %v1178, 0
        %v1581 = vsel %vm1427, %v1179, 0
        %v1583 = vsel %vm1427, %v1180, 0
        %v1585 = vsel %vm1427, %v1181, 0
        %v1587 = vsel %vm1427, %v1182, 0
        %v1589 = vsel %vm1427, %v1183, 0
        %v1591 = vsel %vm1427, %v1184, 0
        %v1593 = vsel %vm1427, %v1185, 0
        %v1595 = vsel %vm1427, %v1186, 0
        %v1597 = vsel %vm1427, %v1187, 0
        %v1599 = vsel %vm1427, %v1188, 0
        %v1601 = vsel %vm1427, %v1189, 0
        %v1603 = vsel %vm1427, %v1190, 0
        %v1605 = vsel %vm1427, %v1191, 0
        %v1607 = vsel %vm1427, %v1192, 0
        %1609 = vmatpush.bf16.msra.mxu0 0
        %1610 = vmatpush.bf16.msra.mxu0 0
        %1611 = vmatpush.bf16.msra.mxu0 0
        %1612 = vmatpush.bf16.msra.mxu0 0
        %1613 = vmatpush.bf16.msra.mxu0 0
        %1614 = vmatpush.bf16.msra.mxu0 0
        %1615 = vmatpush.bf16.msra.mxu0 %v1574
        %1616 = vmatpush.bf16.msra.mxu0 %v1573
        %1617 = vmatmul.bf16.gmra.mxu0 %v1577
        %v1618 = vpop.f32.mrf.mxu0
        %v1619 = vadd.f32 %v1486, %v1618
        %v1620 = vpop.f32.mrf.mxu0
        %v1621 = vadd.f32 %v1488, %v1620
        %1622 = vmatmul.bf16.gmra.mxu0 %v1579
        %v1623 = vpop.f32.mrf.mxu0
        %v1624 = vadd.f32 %v1491, %v1623
        %v1625 = vpop.f32.mrf.mxu0
        %v1626 = vadd.f32 %v1493, %v1625
        %1627 = vmatmul.bf16.gmra.mxu0 %v1581
        %v1628 = vpop.f32.mrf.mxu0
        %v1629 = vadd.f32 %v1496, %v1628
        %v1630 = vpop.f32.mrf.mxu0
        %v1631 = vadd.f32 %v1498, %v1630
        %1632 = vmatmul.bf16.gmra.mxu0 %v1583
        %v1633 = vpop.f32.mrf.mxu0
        %v1634 = vadd.f32 %v1501, %v1633
        %v1635 = vpop.f32.mrf.mxu0
        %v1636 = vadd.f32 %v1503, %v1635
        %1637 = vmatmul.bf16.gmra.mxu0 %v1585
        %v1638 = vpop.f32.mrf.mxu0
        %v1639 = vadd.f32 %v1506, %v1638
        %v1640 = vpop.f32.mrf.mxu0
        %v1641 = vadd.f32 %v1508, %v1640
        %1642 = vmatmul.bf16.gmra.mxu0 %v1587
        %v1643 = vpop.f32.mrf.mxu0
        %v1644 = vadd.f32 %v1511, %v1643
        %v1645 = vpop.f32.mrf.mxu0
        %v1646 = vadd.f32 %v1513, %v1645
        %1647 = vmatmul.bf16.gmra.mxu0 %v1589
        %v1648 = vpop.f32.mrf.mxu0
        %v1649 = vadd.f32 %v1516, %v1648
        %v1650 = vpop.f32.mrf.mxu0
        %v1651 = vadd.f32 %v1518, %v1650
        %1652 = vmatmul.bf16.gmra.mxu0 %v1591
        %v1653 = vpop.f32.mrf.mxu0
        %v1654 = vadd.f32 %v1521, %v1653
        %v1655 = vpop.f32.mrf.mxu0
        %v1656 = vadd.f32 %v1523, %v1655
        %1657 = vmatmul.bf16.gmra.mxu0 %v1593
        %v1658 = vpop.f32.mrf.mxu0
        %v1659 = vadd.f32 %v1526, %v1658
        %v1660 = vpop.f32.mrf.mxu0
        %v1661 = vadd.f32 %v1528, %v1660
        %1662 = vmatmul.bf16.gmra.mxu0 %v1595
        %v1663 = vpop.f32.mrf.mxu0
        %v1664 = vadd.f32 %v1531, %v1663
        %v1665 = vpop.f32.mrf.mxu0
        %v1666 = vadd.f32 %v1533, %v1665
        %1667 = vmatmul.bf16.gmra.mxu0 %v1597
        %v1668 = vpop.f32.mrf.mxu0
        %v1669 = vadd.f32 %v1536, %v1668
        %v1670 = vpop.f32.mrf.mxu0
        %v1671 = vadd.f32 %v1538, %v1670
        %1672 = vmatmul.bf16.gmra.mxu0 %v1599
        %v1673 = vpop.f32.mrf.mxu0
        %v1674 = vadd.f32 %v1541, %v1673
        %v1675 = vpop.f32.mrf.mxu0
        %v1676 = vadd.f32 %v1543, %v1675
        %1677 = vmatmul.bf16.gmra.mxu0 %v1601
        %v1678 = vpop.f32.mrf.mxu0
        %v1679 = vadd.f32 %v1546, %v1678
        %v1680 = vpop.f32.mrf.mxu0
        %v1681 = vadd.f32 %v1548, %v1680
        %1682 = vmatmul.bf16.gmra.mxu0 %v1603
        %v1683 = vpop.f32.mrf.mxu0
        %v1684 = vadd.f32 %v1551, %v1683
        %v1685 = vpop.f32.mrf.mxu0
        %v1686 = vadd.f32 %v1553, %v1685
        %1687 = vmatmul.bf16.gmra.mxu0 %v1605
        %v1688 = vpop.f32.mrf.mxu0
        %v1689 = vadd.f32 %v1556, %v1688
        %v1690 = vpop.f32.mrf.mxu0
        %v1691 = vadd.f32 %v1558, %v1690
        %1692 = vmatmul.bf16.gmra.mxu0 %v1607
        %v1693 = vpop.f32.mrf.mxu0
        %v1694 = vadd.f32 %v1561, %v1693
        %v1695 = vpop.f32.mrf.mxu0
        %v1696 = vadd.f32 %v1563, %v1695
        %1697 = vdwg.mxu0
        %vm1730 = vcmask 1046528
        %v1731 = vrot.slane %v1177, 1
        %v1732 = vrot.slane %v1195, 1
        %v1733 = vsel %vm1730, %v1731, %v1732
        %v1734 = vrot.slane %v1178, 1
        %v1735 = vrot.slane %v1196, 1
        %v1736 = vsel %vm1730, %v1734, %v1735
        %v1737 = vrot.slane %v1179, 1
        %v1738 = vrot.slane %v1197, 1
        %v1739 = vsel %vm1730, %v1737, %v1738
        %v1740 = vrot.slane %v1180, 1
        %v1741 = vrot.slane %v1198, 1
        %v1742 = vsel %vm1730, %v1740, %v1741
        %v1743 = vrot.slane %v1181, 1
        %v1744 = vrot.slane %v1199, 1
        %v1745 = vsel %vm1730, %v1743, %v1744
        %v1746 = vrot.slane %v1182, 1
        %v1747 = vrot.slane %v1200, 1
        %v1748 = vsel %vm1730, %v1746, %v1747
        %v1749 = vrot.slane %v1183, 1
        %v1750 = vrot.slane %v1201, 1
        %v1751 = vsel %vm1730, %v1749, %v1750
        %v1752 = vrot.slane %v1184, 1
        %v1753 = vrot.slane %v1202, 1
        %v1754 = vsel %vm1730, %v1752, %v1753
        %v1755 = vrot.slane %v1185, 1
        %v1756 = vrot.slane %v1203, 1
        %v1757 = vsel %vm1730, %v1755, %v1756
        %v1758 = vrot.slane %v1186, 1
        %v1759 = vrot.slane %v1204, 1
        %v1760 = vsel %vm1730, %v1758, %v1759
        %v1761 = vrot.slane %v1187, 1
        %v1762 = vrot.slane %v1205, 1
        %v1763 = vsel %vm1730, %v1761, %v1762
        %v1764 = vrot.slane %v1188, 1
        %v1765 = vrot.slane %v1206, 1
        %v1766 = vsel %vm1730, %v1764, %v1765
        %v1767 = vrot.slane %v1189, 1
        %v1768 = vrot.slane %v1207, 1
        %v1769 = vsel %vm1730, %v1767, %v1768
        %v1770 = vrot.slane %v1190, 1
        %v1771 = vrot.slane %v1208, 1
        %v1772 = vsel %vm1730, %v1770, %v1771
        %v1773 = vrot.slane %v1191, 1
        %v1774 = vrot.slane %v1209, 1
        %v1775 = vsel %vm1730, %v1773, %v1774
        %v1776 = vrot.slane %v1192, 1
        %v1777 = vrot.slane %v1210, 1
        %v1778 = vsel %vm1730, %v1776, %v1777
        %s1779 = scalar_lea.vmem [#allocation8], 32
        %v1780 = vld [vmem:[%s1779] sm:$0xf]
        %v1781 = vld [vmem:[%s1779 + $0x4] sm:$0xf]
        %v1782 = vld [vmem:[%s1779 + $0x8] sm:$0xf]
        %v1783 = vld [vmem:[%s1779 + $0xc] sm:$0xf]
        %v1788 = vunpack.c.l.b16 %v1780
        %v1789 = vunpack.c.l.b16 %v1781
        %v1790 = vunpack.c.l.b16 %v1782
        %v1791 = vunpack.c.l.b16 %v1783
        %v1792 = vpack.c.b16 %v1789, %v1788
        %v1793 = vpack.c.b16 %v1791, %v1790
        %v1797 = vsel %vm1427, %v1733, 0
        %v1800 = vsel %vm1427, %v1736, 0
        %v1803 = vsel %vm1427, %v1739, 0
        %v1806 = vsel %vm1427, %v1742, 0
        %v1809 = vsel %vm1427, %v1745, 0
        %v1812 = vsel %vm1427, %v1748, 0
        %v1815 = vsel %vm1427, %v1751, 0
        %v1818 = vsel %vm1427, %v1754, 0
        %v1821 = vsel %vm1427, %v1757, 0
        %v1824 = vsel %vm1427, %v1760, 0
        %v1827 = vsel %vm1427, %v1763, 0
        %v1830 = vsel %vm1427, %v1766, 0
        %v1833 = vsel %vm1427, %v1769, 0
        %v1836 = vsel %vm1427, %v1772, 0
        %v1839 = vsel %vm1427, %v1775, 0
        %v1842 = vsel %vm1427, %v1778, 0
        %1844 = vmatpush.bf16.msra.mxu0 0
        %1845 = vmatpush.bf16.msra.mxu0 0
        %1846 = vmatpush.bf16.msra.mxu0 0
        %1847 = vmatpush.bf16.msra.mxu0 0
        %1848 = vmatpush.bf16.msra.mxu0 0
        %1849 = vmatpush.bf16.msra.mxu0 0
        %1850 = vmatpush.bf16.msra.mxu0 %v1793
        %1851 = vmatpush.bf16.msra.mxu0 %v1792
        %1852 = vmatmul.bf16.gmra.mxu0 %v1797
        %v1853 = vpop.f32.mrf.mxu0
        %v1854 = vadd.f32 0.0, %v1853
        %v1855 = vpop.f32.mrf.mxu0
        %v1856 = vadd.f32 0.0, %v1855
        %1857 = vmatmul.bf16.gmra.mxu0 %v1800
        %v1858 = vpop.f32.mrf.mxu0
        %v1859 = vadd.f32 0.0, %v1858
        %v1860 = vpop.f32.mrf.mxu0
        %v1861 = vadd.f32 0.0, %v1860
        %1862 = vmatmul.bf16.gmra.mxu0 %v1803
        %v1863 = vpop.f32.mrf.mxu0
        %v1864 = vadd.f32 0.0, %v1863
        %v1865 = vpop.f32.mrf.mxu0
        %v1866 = vadd.f32 0.0, %v1865
        %1867 = vmatmul.bf16.gmra.mxu0 %v1806
        %v1868 = vpop.f32.mrf.mxu0
        %v1869 = vadd.f32 0.0, %v1868
        %v1870 = vpop.f32.mrf.mxu0
        %v1871 = vadd.f32 0.0, %v1870
        %1872 = vmatmul.bf16.gmra.mxu0 %v1809
        %v1873 = vpop.f32.mrf.mxu0
        %v1874 = vadd.f32 0.0, %v1873
        %v1875 = vpop.f32.mrf.mxu0
        %v1876 = vadd.f32 0.0, %v1875
        %1877 = vmatmul.bf16.gmra.mxu0 %v1812
        %v1878 = vpop.f32.mrf.mxu0
        %v1879 = vadd.f32 0.0, %v1878
        %v1880 = vpop.f32.mrf.mxu0
        %v1881 = vadd.f32 0.0, %v1880
        %1882 = vmatmul.bf16.gmra.mxu0 %v1815
        %v1883 = vpop.f32.mrf.mxu0
        %v1884 = vadd.f32 0.0, %v1883
        %v1885 = vpop.f32.mrf.mxu0
        %v1886 = vadd.f32 0.0, %v1885
        %1887 = vmatmul.bf16.gmra.mxu0 %v1818
        %v1888 = vpop.f32.mrf.mxu0
        %v1889 = vadd.f32 0.0, %v1888
        %v1890 = vpop.f32.mrf.mxu0
        %v1891 = vadd.f32 0.0, %v1890
        %1892 = vmatmul.bf16.gmra.mxu0 %v1821
        %v1893 = vpop.f32.mrf.mxu0
        %v1894 = vadd.f32 0.0, %v1893
        %v1895 = vpop.f32.mrf.mxu0
        %v1896 = vadd.f32 0.0, %v1895
        %1897 = vmatmul.bf16.gmra.mxu0 %v1824
        %v1898 = vpop.f32.mrf.mxu0
        %v1899 = vadd.f32 0.0, %v1898
        %v1900 = vpop.f32.mrf.mxu0
        %v1901 = vadd.f32 0.0, %v1900
        %1902 = vmatmul.bf16.gmra.mxu0 %v1827
        %v1903 = vpop.f32.mrf.mxu0
        %v1904 = vadd.f32 0.0, %v1903
        %v1905 = vpop.f32.mrf.mxu0
        %v1906 = vadd.f32 0.0, %v1905
        %1907 = vmatmul.bf16.gmra.mxu0 %v1830
        %v1908 = vpop.f32.mrf.mxu0
        %v1909 = vadd.f32 0.0, %v1908
        %v1910 = vpop.f32.mrf.mxu0
        %v1911 = vadd.f32 0.0, %v1910
        %1912 = vmatmul.bf16.gmra.mxu0 %v1833
        %v1913 = vpop.f32.mrf.mxu0
        %v1914 = vadd.f32 0.0, %v1913
        %v1915 = vpop.f32.mrf.mxu0
        %v1916 = vadd.f32 0.0, %v1915
        %1917 = vmatmul.bf16.gmra.mxu0 %v1836
        %v1918 = vpop.f32.mrf.mxu0
        %v1919 = vadd.f32 0.0, %v1918
        %v1920 = vpop.f32.mrf.mxu0
        %v1921 = vadd.f32 0.0, %v1920
        %1922 = vmatmul.bf16.gmra.mxu0 %v1839
        %v1923 = vpop.f32.mrf.mxu0
        %v1924 = vadd.f32 0.0, %v1923
        %v1925 = vpop.f32.mrf.mxu0
        %v1926 = vadd.f32 0.0, %v1925
        %1927 = vmatmul.bf16.gmra.mxu0 %v1842
        %v1928 = vpop.f32.mrf.mxu0
        %v1929 = vadd.f32 0.0, %v1928
        %v1930 = vpop.f32.mrf.mxu0
        %v1931 = vadd.f32 0.0, %v1930
        %1932 = vdwg.mxu0
        %v1933 = vadd.f32 %v1619, %v1854
        %v1934 = vadd.f32 %v1621, %v1856
        %v1935 = vadd.f32 %v1624, %v1859
        %v1936 = vadd.f32 %v1626, %v1861
        %v1937 = vadd.f32 %v1629, %v1864
        %v1938 = vadd.f32 %v1631, %v1866
        %v1939 = vadd.f32 %v1634, %v1869
        %v1940 = vadd.f32 %v1636, %v1871
        %v1941 = vadd.f32 %v1639, %v1874
        %v1942 = vadd.f32 %v1641, %v1876
        %v1943 = vadd.f32 %v1644, %v1879
        %v1944 = vadd.f32 %v1646, %v1881
        %v1945 = vadd.f32 %v1649, %v1884
        %v1946 = vadd.f32 %v1651, %v1886
        %v1947 = vadd.f32 %v1654, %v1889
        %v1948 = vadd.f32 %v1656, %v1891
        %v1949 = vadd.f32 %v1659, %v1894
        %v1950 = vadd.f32 %v1661, %v1896
        %v1951 = vadd.f32 %v1664, %v1899
        %v1952 = vadd.f32 %v1666, %v1901
        %v1953 = vadd.f32 %v1669, %v1904
        %v1954 = vadd.f32 %v1671, %v1906
        %v1955 = vadd.f32 %v1674, %v1909
        %v1956 = vadd.f32 %v1676, %v1911
        %v1957 = vadd.f32 %v1679, %v1914
        %v1958 = vadd.f32 %v1681, %v1916
        %v1959 = vadd.f32 %v1684, %v1919
        %v1960 = vadd.f32 %v1686, %v1921
        %v1961 = vadd.f32 %v1689, %v1924
        %v1962 = vadd.f32 %v1691, %v1926
        %v1963 = vadd.f32 %v1694, %v1929
        %v1964 = vadd.f32 %v1696, %v1931
        %s1965 = scalar_lea.vmem [#allocation8], 48
        %v1966 = vld [vmem:[%s1965] sm:$0xf]
        %v1967 = vld [vmem:[%s1965 + $0x4] sm:$0xf]
        %v1968 = vld [vmem:[%s1965 + $0x8] sm:$0xf]
        %v1969 = vld [vmem:[%s1965 + $0xc] sm:$0xf]
        %v1974 = vunpack.c.l.b16 %v1966
        %v1975 = vunpack.c.l.b16 %v1967
        %v1976 = vunpack.c.l.b16 %v1968
        %v1977 = vunpack.c.l.b16 %v1969
        %v1978 = vpack.c.b16 %v1975, %v1974
        %v1979 = vpack.c.b16 %v1977, %v1976
        %v1983 = vsel %vm1427, %v1193, 0
        %1985 = vmatpush.bf16.msra.mxu0 0
        %1986 = vmatpush.bf16.msra.mxu0 0
        %1987 = vmatpush.bf16.msra.mxu0 0
        %1988 = vmatpush.bf16.msra.mxu0 0
        %1989 = vmatpush.bf16.msra.mxu0 0
        %1990 = vmatpush.bf16.msra.mxu0 0
        %1991 = vmatpush.bf16.msra.mxu0 %v1979
        %1992 = vmatpush.bf16.msra.mxu0 %v1978
        %1993 = vmatmul.bf16.gmra.mxu0 %v1579
        %v1994 = vpop.f32.mrf.mxu0
        %v1995 = vadd.f32 0.0, %v1994
        %v1996 = vpop.f32.mrf.mxu0
        %v1997 = vadd.f32 0.0, %v1996
        %1998 = vmatmul.bf16.gmra.mxu0 %v1581
        %v1999 = vpop.f32.mrf.mxu0
        %v2000 = vadd.f32 0.0, %v1999
        %v2001 = vpop.f32.mrf.mxu0
        %v2002 = vadd.f32 0.0, %v2001
        %2003 = vmatmul.bf16.gmra.mxu0 %v1583
        %v2004 = vpop.f32.mrf.mxu0
        %v2005 = vadd.f32 0.0, %v2004
        %v2006 = vpop.f32.mrf.mxu0
        %v2007 = vadd.f32 0.0, %v2006
        %2008 = vmatmul.bf16.gmra.mxu0 %v1585
        %v2009 = vpop.f32.mrf.mxu0
        %v2010 = vadd.f32 0.0, %v2009
        %v2011 = vpop.f32.mrf.mxu0
        %v2012 = vadd.f32 0.0, %v2011
        %2013 = vmatmul.bf16.gmra.mxu0 %v1587
        %v2014 = vpop.f32.mrf.mxu0
        %v2015 = vadd.f32 0.0, %v2014
        %v2016 = vpop.f32.mrf.mxu0
        %v2017 = vadd.f32 0.0, %v2016
        %2018 = vmatmul.bf16.gmra.mxu0 %v1589
        %v2019 = vpop.f32.mrf.mxu0
        %v2020 = vadd.f32 0.0, %v2019
        %v2021 = vpop.f32.mrf.mxu0
        %v2022 = vadd.f32 0.0, %v2021
        %2023 = vmatmul.bf16.gmra.mxu0 %v1591
        %v2024 = vpop.f32.mrf.mxu0
        %v2025 = vadd.f32 0.0, %v2024
        %v2026 = vpop.f32.mrf.mxu0
        %v2027 = vadd.f32 0.0, %v2026
        %2028 = vmatmul.bf16.gmra.mxu0 %v1593
        %v2029 = vpop.f32.mrf.mxu0
        %v2030 = vadd.f32 0.0, %v2029
        %v2031 = vpop.f32.mrf.mxu0
        %v2032 = vadd.f32 0.0, %v2031
        %2033 = vmatmul.bf16.gmra.mxu0 %v1595
        %v2034 = vpop.f32.mrf.mxu0
        %v2035 = vadd.f32 0.0, %v2034
        %v2036 = vpop.f32.mrf.mxu0
        %v2037 = vadd.f32 0.0, %v2036
        %2038 = vmatmul.bf16.gmra.mxu0 %v1597
        %v2039 = vpop.f32.mrf.mxu0
        %v2040 = vadd.f32 0.0, %v2039
        %v2041 = vpop.f32.mrf.mxu0
        %v2042 = vadd.f32 0.0, %v2041
        %2043 = vmatmul.bf16.gmra.mxu0 %v1599
        %v2044 = vpop.f32.mrf.mxu0
        %v2045 = vadd.f32 0.0, %v2044
        %v2046 = vpop.f32.mrf.mxu0
        %v2047 = vadd.f32 0.0, %v2046
        %2048 = vmatmul.bf16.gmra.mxu0 %v1601
        %v2049 = vpop.f32.mrf.mxu0
        %v2050 = vadd.f32 0.0, %v2049
        %v2051 = vpop.f32.mrf.mxu0
        %v2052 = vadd.f32 0.0, %v2051
        %2053 = vmatmul.bf16.gmra.mxu0 %v1603
        %v2054 = vpop.f32.mrf.mxu0
        %v2055 = vadd.f32 0.0, %v2054
        %v2056 = vpop.f32.mrf.mxu0
        %v2057 = vadd.f32 0.0, %v2056
        %2058 = vmatmul.bf16.gmra.mxu0 %v1605
        %v2059 = vpop.f32.mrf.mxu0
        %v2060 = vadd.f32 0.0, %v2059
        %v2061 = vpop.f32.mrf.mxu0
        %v2062 = vadd.f32 0.0, %v2061
        %2063 = vmatmul.bf16.gmra.mxu0 %v1607
        %v2064 = vpop.f32.mrf.mxu0
        %v2065 = vadd.f32 0.0, %v2064
        %v2066 = vpop.f32.mrf.mxu0
        %v2067 = vadd.f32 0.0, %v2066
        %2068 = vmatmul.bf16.gmra.mxu0 %v1983
        %v2069 = vpop.f32.mrf.mxu0
        %v2070 = vadd.f32 0.0, %v2069
        %v2071 = vpop.f32.mrf.mxu0
        %v2072 = vadd.f32 0.0, %v2071
        %2073 = vdwg.mxu0
        %v2074 = vadd.f32 %v1933, %v1995
        %v2075 = vadd.f32 %v1934, %v1997
        %v2076 = vadd.f32 %v1935, %v2000
        %v2077 = vadd.f32 %v1936, %v2002
        %v2078 = vadd.f32 %v1937, %v2005
        %v2079 = vadd.f32 %v1938, %v2007
        %v2080 = vadd.f32 %v1939, %v2010
        %v2081 = vadd.f32 %v1940, %v2012
        %v2082 = vadd.f32 %v1941, %v2015
        %v2083 = vadd.f32 %v1942, %v2017
        %v2084 = vadd.f32 %v1943, %v2020
        %v2085 = vadd.f32 %v1944, %v2022
        %v2086 = vadd.f32 %v1945, %v2025
        %v2087 = vadd.f32 %v1946, %v2027
        %v2088 = vadd.f32 %v1947, %v2030
        %v2089 = vadd.f32 %v1948, %v2032
        %v2090 = vadd.f32 %v1949, %v2035
        %v2091 = vadd.f32 %v1950, %v2037
        %v2092 = vadd.f32 %v1951, %v2040
        %v2093 = vadd.f32 %v1952, %v2042
        %v2094 = vadd.f32 %v1953, %v2045
        %v2095 = vadd.f32 %v1954, %v2047
        %v2096 = vadd.f32 %v1955, %v2050
        %v2097 = vadd.f32 %v1956, %v2052
        %v2098 = vadd.f32 %v1957, %v2055
        %v2099 = vadd.f32 %v1958, %v2057
        %v2100 = vadd.f32 %v1959, %v2060
        %v2101 = vadd.f32 %v1960, %v2062
        %v2102 = vadd.f32 %v1961, %v2065
        %v2103 = vadd.f32 %v1962, %v2067
        %v2104 = vadd.f32 %v1963, %v2070
        %v2105 = vadd.f32 %v1964, %v2072
        %v2106 = vshrl.u32 %v1193, 16
        %v2108 = vshll.u32 %v1193, 16
        %v2110 = vrot.slane %v2108, 1
        %v2111 = vor.u32 %v2106, %v2110
        %v2113 = vshll.u32 %v1211, 16
        %v2115 = vrot.slane %v2113, 1
        %v2116 = vsel %vm1217, %v2111, %v2115
        %s2117 = scalar_lea.vmem [#allocation8], 64
        %v2118 = vld [vmem:[%s2117] sm:$0xf]
        %v2119 = vld [vmem:[%s2117 + $0x4] sm:$0xf]
        %v2120 = vld [vmem:[%s2117 + $0x8] sm:$0xf]
        %v2121 = vld [vmem:[%s2117 + $0xc] sm:$0xf]
        %v2126 = vunpack.c.l.b16 %v2118
        %v2127 = vunpack.c.l.b16 %v2119
        %v2128 = vunpack.c.l.b16 %v2120
        %v2129 = vunpack.c.l.b16 %v2121
        %v2130 = vpack.c.b16 %v2127, %v2126
        %v2131 = vpack.c.b16 %v2129, %v2128
        %v2135 = vsel %vm1427, %v2116, 0
        %2137 = vmatpush.bf16.msra.mxu0 0
        %2138 = vmatpush.bf16.msra.mxu0 0
        %2139 = vmatpush.bf16.msra.mxu0 0
        %2140 = vmatpush.bf16.msra.mxu0 0
        %2141 = vmatpush.bf16.msra.mxu0 0
        %2142 = vmatpush.bf16.msra.mxu0 0
        %2143 = vmatpush.bf16.msra.mxu0 %v2131
        %2144 = vmatpush.bf16.msra.mxu0 %v2130
        %2145 = vmatmul.bf16.gmra.mxu0 %v1432
        %v2146 = vpop.f32.mrf.mxu0
        %v2147 = vadd.f32 0.0, %v2146
        %v2148 = vpop.f32.mrf.mxu0
        %v2149 = vadd.f32 0.0, %v2148
        %2150 = vmatmul.bf16.gmra.mxu0 %v1435
        %v2151 = vpop.f32.mrf.mxu0
        %v2152 = vadd.f32 0.0, %v2151
        %v2153 = vpop.f32.mrf.mxu0
        %v2154 = vadd.f32 0.0, %v2153
        %2155 = vmatmul.bf16.gmra.mxu0 %v1438
        %v2156 = vpop.f32.mrf.mxu0
        %v2157 = vadd.f32 0.0, %v2156
        %v2158 = vpop.f32.mrf.mxu0
        %v2159 = vadd.f32 0.0, %v2158
        %2160 = vmatmul.bf16.gmra.mxu0 %v1441
        %v2161 = vpop.f32.mrf.mxu0
        %v2162 = vadd.f32 0.0, %v2161
        %v2163 = vpop.f32.mrf.mxu0
        %v2164 = vadd.f32 0.0, %v2163
        %2165 = vmatmul.bf16.gmra.mxu0 %v1444
        %v2166 = vpop.f32.mrf.mxu0
        %v2167 = vadd.f32 0.0, %v2166
        %v2168 = vpop.f32.mrf.mxu0
        %v2169 = vadd.f32 0.0, %v2168
        %2170 = vmatmul.bf16.gmra.mxu0 %v1447
        %v2171 = vpop.f32.mrf.mxu0
        %v2172 = vadd.f32 0.0, %v2171
        %v2173 = vpop.f32.mrf.mxu0
        %v2174 = vadd.f32 0.0, %v2173
        %2175 = vmatmul.bf16.gmra.mxu0 %v1450
        %v2176 = vpop.f32.mrf.mxu0
        %v2177 = vadd.f32 0.0, %v2176
        %v2178 = vpop.f32.mrf.mxu0
        %v2179 = vadd.f32 0.0, %v2178
        %2180 = vmatmul.bf16.gmra.mxu0 %v1453
        %v2181 = vpop.f32.mrf.mxu0
        %v2182 = vadd.f32 0.0, %v2181
        %v2183 = vpop.f32.mrf.mxu0
        %v2184 = vadd.f32 0.0, %v2183
        %2185 = vmatmul.bf16.gmra.mxu0 %v1456
        %v2186 = vpop.f32.mrf.mxu0
        %v2187 = vadd.f32 0.0, %v2186
        %v2188 = vpop.f32.mrf.mxu0
        %v2189 = vadd.f32 0.0, %v2188
        %2190 = vmatmul.bf16.gmra.mxu0 %v1459
        %v2191 = vpop.f32.mrf.mxu0
        %v2192 = vadd.f32 0.0, %v2191
        %v2193 = vpop.f32.mrf.mxu0
        %v2194 = vadd.f32 0.0, %v2193
        %2195 = vmatmul.bf16.gmra.mxu0 %v1462
        %v2196 = vpop.f32.mrf.mxu0
        %v2197 = vadd.f32 0.0, %v2196
        %v2198 = vpop.f32.mrf.mxu0
        %v2199 = vadd.f32 0.0, %v2198
        %2200 = vmatmul.bf16.gmra.mxu0 %v1465
        %v2201 = vpop.f32.mrf.mxu0
        %v2202 = vadd.f32 0.0, %v2201
        %v2203 = vpop.f32.mrf.mxu0
        %v2204 = vadd.f32 0.0, %v2203
        %2205 = vmatmul.bf16.gmra.mxu0 %v1468
        %v2206 = vpop.f32.mrf.mxu0
        %v2207 = vadd.f32 0.0, %v2206
        %v2208 = vpop.f32.mrf.mxu0
        %v2209 = vadd.f32 0.0, %v2208
        %2210 = vmatmul.bf16.gmra.mxu0 %v1471
        %v2211 = vpop.f32.mrf.mxu0
        %v2212 = vadd.f32 0.0, %v2211
        %v2213 = vpop.f32.mrf.mxu0
        %v2214 = vadd.f32 0.0, %v2213
        %2215 = vmatmul.bf16.gmra.mxu0 %v1474
        %v2216 = vpop.f32.mrf.mxu0
        %v2217 = vadd.f32 0.0, %v2216
        %v2218 = vpop.f32.mrf.mxu0
        %v2219 = vadd.f32 0.0, %v2218
        %2220 = vmatmul.bf16.gmra.mxu0 %v2135
        %v2221 = vpop.f32.mrf.mxu0
        %v2222 = vadd.f32 0.0, %v2221
        %v2223 = vpop.f32.mrf.mxu0
        %v2224 = vadd.f32 0.0, %v2223
        %2225 = vdwg.mxu0
        %v2226 = vadd.f32 %v2074, %v2147
        %v2227 = vadd.f32 %v2075, %v2149
        %v2228 = vadd.f32 %v2076, %v2152
        %v2229 = vadd.f32 %v2077, %v2154
        %v2230 = vadd.f32 %v2078, %v2157
        %v2231 = vadd.f32 %v2079, %v2159
        %v2232 = vadd.f32 %v2080, %v2162
        %v2233 = vadd.f32 %v2081, %v2164
        %v2234 = vadd.f32 %v2082, %v2167
        %v2235 = vadd.f32 %v2083, %v2169
        %v2236 = vadd.f32 %v2084, %v2172
        %v2237 = vadd.f32 %v2085, %v2174
        %v2238 = vadd.f32 %v2086, %v2177
        %v2239 = vadd.f32 %v2087, %v2179
        %v2240 = vadd.f32 %v2088, %v2182
        %v2241 = vadd.f32 %v2089, %v2184
        %v2242 = vadd.f32 %v2090, %v2187
        %v2243 = vadd.f32 %v2091, %v2189
        %v2244 = vadd.f32 %v2092, %v2192
        %v2245 = vadd.f32 %v2093, %v2194
        %v2246 = vadd.f32 %v2094, %v2197
        %v2247 = vadd.f32 %v2095, %v2199
        %v2248 = vadd.f32 %v2096, %v2202
        %v2249 = vadd.f32 %v2097, %v2204
        %v2250 = vadd.f32 %v2098, %v2207
        %v2251 = vadd.f32 %v2099, %v2209
        %v2252 = vadd.f32 %v2100, %v2212
        %v2253 = vadd.f32 %v2101, %v2214
        %v2254 = vadd.f32 %v2102, %v2217
        %v2255 = vadd.f32 %v2103, %v2219
        %v2256 = vadd.f32 %v2104, %v2222
        %v2257 = vadd.f32 %v2105, %v2224
        %v2260 = vrot.slane %v1193, 1
        %v2261 = vrot.slane %v1211, 1
        %v2262 = vsel %vm1730, %v2260, %v2261
        %s2263 = scalar_lea.vmem [#allocation8], 80
        %v2264 = vld [vmem:[%s2263] sm:$0xf]
        %v2265 = vld [vmem:[%s2263 + $0x4] sm:$0xf]
        %v2266 = vld [vmem:[%s2263 + $0x8] sm:$0xf]
        %v2267 = vld [vmem:[%s2263 + $0xc] sm:$0xf]
        %v2272 = vunpack.c.l.b16 %v2264
        %v2273 = vunpack.c.l.b16 %v2265
        %v2274 = vunpack.c.l.b16 %v2266
        %v2275 = vunpack.c.l.b16 %v2267
        %v2276 = vpack.c.b16 %v2273, %v2272
        %v2277 = vpack.c.b16 %v2275, %v2274
        %v2281 = vsel %vm1427, %v2262, 0
        %2283 = vmatpush.bf16.msra.mxu0 0
        %2284 = vmatpush.bf16.msra.mxu0 0
        %2285 = vmatpush.bf16.msra.mxu0 0
        %2286 = vmatpush.bf16.msra.mxu0 0
        %2287 = vmatpush.bf16.msra.mxu0 0
        %2288 = vmatpush.bf16.msra.mxu0 0
        %2289 = vmatpush.bf16.msra.mxu0 %v2277
        %2290 = vmatpush.bf16.msra.mxu0 %v2276
        %2291 = vmatmul.bf16.gmra.mxu0 %v1800
        %v2292 = vpop.f32.mrf.mxu0
        %v2293 = vadd.f32 0.0, %v2292
        %v2294 = vpop.f32.mrf.mxu0
        %v2295 = vadd.f32 0.0, %v2294
        %2296 = vmatmul.bf16.gmra.mxu0 %v1803
        %v2297 = vpop.f32.mrf.mxu0
        %v2298 = vadd.f32 0.0, %v2297
        %v2299 = vpop.f32.mrf.mxu0
        %v2300 = vadd.f32 0.0, %v2299
        %2301 = vmatmul.bf16.gmra.mxu0 %v1806
        %v2302 = vpop.f32.mrf.mxu0
        %v2303 = vadd.f32 0.0, %v2302
        %v2304 = vpop.f32.mrf.mxu0
        %v2305 = vadd.f32 0.0, %v2304
        %2306 = vmatmul.bf16.gmra.mxu0 %v1809
        %v2307 = vpop.f32.mrf.mxu0
        %v2308 = vadd.f32 0.0, %v2307
        %v2309 = vpop.f32.mrf.mxu0
        %v2310 = vadd.f32 0.0, %v2309
        %2311 = vmatmul.bf16.gmra.mxu0 %v1812
        %v2312 = vpop.f32.mrf.mxu0
        %v2313 = vadd.f32 0.0, %v2312
        %v2314 = vpop.f32.mrf.mxu0
        %v2315 = vadd.f32 0.0, %v2314
        %2316 = vmatmul.bf16.gmra.mxu0 %v1815
        %v2317 = vpop.f32.mrf.mxu0
        %v2318 = vadd.f32 0.0, %v2317
        %v2319 = vpop.f32.mrf.mxu0
        %v2320 = vadd.f32 0.0, %v2319
        %2321 = vmatmul.bf16.gmra.mxu0 %v1818
        %v2322 = vpop.f32.mrf.mxu0
        %v2323 = vadd.f32 0.0, %v2322
        %v2324 = vpop.f32.mrf.mxu0
        %v2325 = vadd.f32 0.0, %v2324
        %2326 = vmatmul.bf16.gmra.mxu0 %v1821
        %v2327 = vpop.f32.mrf.mxu0
        %v2328 = vadd.f32 0.0, %v2327
        %v2329 = vpop.f32.mrf.mxu0
        %v2330 = vadd.f32 0.0, %v2329
        %2331 = vmatmul.bf16.gmra.mxu0 %v1824
        %v2332 = vpop.f32.mrf.mxu0
        %v2333 = vadd.f32 0.0, %v2332
        %v2334 = vpop.f32.mrf.mxu0
        %v2335 = vadd.f32 0.0, %v2334
        %2336 = vmatmul.bf16.gmra.mxu0 %v1827
        %v2337 = vpop.f32.mrf.mxu0
        %v2338 = vadd.f32 0.0, %v2337
        %v2339 = vpop.f32.mrf.mxu0
        %v2340 = vadd.f32 0.0, %v2339
        %2341 = vmatmul.bf16.gmra.mxu0 %v1830
        %v2342 = vpop.f32.mrf.mxu0
        %v2343 = vadd.f32 0.0, %v2342
        %v2344 = vpop.f32.mrf.mxu0
        %v2345 = vadd.f32 0.0, %v2344
        %2346 = vmatmul.bf16.gmra.mxu0 %v1833
        %v2347 = vpop.f32.mrf.mxu0
        %v2348 = vadd.f32 0.0, %v2347
        %v2349 = vpop.f32.mrf.mxu0
        %v2350 = vadd.f32 0.0, %v2349
        %2351 = vmatmul.bf16.gmra.mxu0 %v1836
        %v2352 = vpop.f32.mrf.mxu0
        %v2353 = vadd.f32 0.0, %v2352
        %v2354 = vpop.f32.mrf.mxu0
        %v2355 = vadd.f32 0.0, %v2354
        %2356 = vmatmul.bf16.gmra.mxu0 %v1839
        %v2357 = vpop.f32.mrf.mxu0
        %v2358 = vadd.f32 0.0, %v2357
        %v2359 = vpop.f32.mrf.mxu0
        %v2360 = vadd.f32 0.0, %v2359
        %2361 = vmatmul.bf16.gmra.mxu0 %v1842
        %v2362 = vpop.f32.mrf.mxu0
        %v2363 = vadd.f32 0.0, %v2362
        %v2364 = vpop.f32.mrf.mxu0
        %v2365 = vadd.f32 0.0, %v2364
        %2366 = vmatmul.bf16.gmra.mxu0 %v2281
        %v2367 = vpop.f32.mrf.mxu0
        %v2368 = vadd.f32 0.0, %v2367
        %v2369 = vpop.f32.mrf.mxu0
        %v2370 = vadd.f32 0.0, %v2369
        %2371 = vdwg.mxu0
        %v2372 = vadd.f32 %v2226, %v2293
        %v2373 = vadd.f32 %v2227, %v2295
        %v2374 = vadd.f32 %v2228, %v2298
        %v2375 = vadd.f32 %v2229, %v2300
        %v2376 = vadd.f32 %v2230, %v2303
        %v2377 = vadd.f32 %v2231, %v2305
        %v2378 = vadd.f32 %v2232, %v2308
        %v2379 = vadd.f32 %v2233, %v2310
        %v2380 = vadd.f32 %v2234, %v2313
        %v2381 = vadd.f32 %v2235, %v2315
        %v2382 = vadd.f32 %v2236, %v2318
        %v2383 = vadd.f32 %v2237, %v2320
        %v2384 = vadd.f32 %v2238, %v2323
        %v2385 = vadd.f32 %v2239, %v2325
        %v2386 = vadd.f32 %v2240, %v2328
        %v2387 = vadd.f32 %v2241, %v2330
        %v2388 = vadd.f32 %v2242, %v2333
        %v2389 = vadd.f32 %v2243, %v2335
        %v2390 = vadd.f32 %v2244, %v2338
        %v2391 = vadd.f32 %v2245, %v2340
        %v2392 = vadd.f32 %v2246, %v2343
        %v2393 = vadd.f32 %v2247, %v2345
        %v2394 = vadd.f32 %v2248, %v2348
        %v2395 = vadd.f32 %v2249, %v2350
        %v2396 = vadd.f32 %v2250, %v2353
        %v2397 = vadd.f32 %v2251, %v2355
        %v2398 = vadd.f32 %v2252, %v2358
        %v2399 = vadd.f32 %v2253, %v2360
        %v2400 = vadd.f32 %v2254, %v2363
        %v2401 = vadd.f32 %v2255, %v2365
        %v2402 = vadd.f32 %v2256, %v2368
        %v2403 = vadd.f32 %v2257, %v2370
        %s2404 = scalar_lea.vmem [#allocation8], 96
        %v2405 = vld [vmem:[%s2404] sm:$0xf]
        %v2406 = vld [vmem:[%s2404 + $0x4] sm:$0xf]
        %v2407 = vld [vmem:[%s2404 + $0x8] sm:$0xf]
        %v2408 = vld [vmem:[%s2404 + $0xc] sm:$0xf]
        %v2413 = vunpack.c.l.b16 %v2405
        %v2414 = vunpack.c.l.b16 %v2406
        %v2415 = vunpack.c.l.b16 %v2407
        %v2416 = vunpack.c.l.b16 %v2408
        %v2417 = vpack.c.b16 %v2414, %v2413
        %v2418 = vpack.c.b16 %v2416, %v2415
        %v2422 = vsel %vm1427, %v1194, 0
        %2424 = vmatpush.bf16.msra.mxu0 0
        %2425 = vmatpush.bf16.msra.mxu0 0
        %2426 = vmatpush.bf16.msra.mxu0 0
        %2427 = vmatpush.bf16.msra.mxu0 0
        %2428 = vmatpush.bf16.msra.mxu0 0
        %2429 = vmatpush.bf16.msra.mxu0 0
        %2430 = vmatpush.bf16.msra.mxu0 %v2418
        %2431 = vmatpush.bf16.msra.mxu0 %v2417
        %2432 = vmatmul.bf16.gmra.mxu0 %v1581
        %v2433 = vpop.f32.mrf.mxu0
        %v2434 = vadd.f32 0.0, %v2433
        %v2435 = vpop.f32.mrf.mxu0
        %v2436 = vadd.f32 0.0, %v2435
        %2437 = vmatmul.bf16.gmra.mxu0 %v1583
        %v2438 = vpop.f32.mrf.mxu0
        %v2439 = vadd.f32 0.0, %v2438
        %v2440 = vpop.f32.mrf.mxu0
        %v2441 = vadd.f32 0.0, %v2440
        %2442 = vmatmul.bf16.gmra.mxu0 %v1585
        %v2443 = vpop.f32.mrf.mxu0
        %v2444 = vadd.f32 0.0, %v2443
        %v2445 = vpop.f32.mrf.mxu0
        %v2446 = vadd.f32 0.0, %v2445
        %2447 = vmatmul.bf16.gmra.mxu0 %v1587
        %v2448 = vpop.f32.mrf.mxu0
        %v2449 = vadd.f32 0.0, %v2448
        %v2450 = vpop.f32.mrf.mxu0
        %v2451 = vadd.f32 0.0, %v2450
        %2452 = vmatmul.bf16.gmra.mxu0 %v1589
        %v2453 = vpop.f32.mrf.mxu0
        %v2454 = vadd.f32 0.0, %v2453
        %v2455 = vpop.f32.mrf.mxu0
        %v2456 = vadd.f32 0.0, %v2455
        %2457 = vmatmul.bf16.gmra.mxu0 %v1591
        %v2458 = vpop.f32.mrf.mxu0
        %v2459 = vadd.f32 0.0, %v2458
        %v2460 = vpop.f32.mrf.mxu0
        %v2461 = vadd.f32 0.0, %v2460
        %2462 = vmatmul.bf16.gmra.mxu0 %v1593
        %v2463 = vpop.f32.mrf.mxu0
        %v2464 = vadd.f32 0.0, %v2463
        %v2465 = vpop.f32.mrf.mxu0
        %v2466 = vadd.f32 0.0, %v2465
        %2467 = vmatmul.bf16.gmra.mxu0 %v1595
        %v2468 = vpop.f32.mrf.mxu0
        %v2469 = vadd.f32 0.0, %v2468
        %v2470 = vpop.f32.mrf.mxu0
        %v2471 = vadd.f32 0.0, %v2470
        %2472 = vmatmul.bf16.gmra.mxu0 %v1597
        %v2473 = vpop.f32.mrf.mxu0
        %v2474 = vadd.f32 0.0, %v2473
        %v2475 = vpop.f32.mrf.mxu0
        %v2476 = vadd.f32 0.0, %v2475
        %2477 = vmatmul.bf16.gmra.mxu0 %v1599
        %v2478 = vpop.f32.mrf.mxu0
        %v2479 = vadd.f32 0.0, %v2478
        %v2480 = vpop.f32.mrf.mxu0
        %v2481 = vadd.f32 0.0, %v2480
        %2482 = vmatmul.bf16.gmra.mxu0 %v1601
        %v2483 = vpop.f32.mrf.mxu0
        %v2484 = vadd.f32 0.0, %v2483
        %v2485 = vpop.f32.mrf.mxu0
        %v2486 = vadd.f32 0.0, %v2485
        %2487 = vmatmul.bf16.gmra.mxu0 %v1603
        %v2488 = vpop.f32.mrf.mxu0
        %v2489 = vadd.f32 0.0, %v2488
        %v2490 = vpop.f32.mrf.mxu0
        %v2491 = vadd.f32 0.0, %v2490
        %2492 = vmatmul.bf16.gmra.mxu0 %v1605
        %v2493 = vpop.f32.mrf.mxu0
        %v2494 = vadd.f32 0.0, %v2493
        %v2495 = vpop.f32.mrf.mxu0
        %v2496 = vadd.f32 0.0, %v2495
        %2497 = vmatmul.bf16.gmra.mxu0 %v1607
        %v2498 = vpop.f32.mrf.mxu0
        %v2499 = vadd.f32 0.0, %v2498
        %v2500 = vpop.f32.mrf.mxu0
        %v2501 = vadd.f32 0.0, %v2500
        %2502 = vmatmul.bf16.gmra.mxu0 %v1983
        %v2503 = vpop.f32.mrf.mxu0
        %v2504 = vadd.f32 0.0, %v2503
        %v2505 = vpop.f32.mrf.mxu0
        %v2506 = vadd.f32 0.0, %v2505
        %2507 = vmatmul.bf16.gmra.mxu0 %v2422
        %v2508 = vpop.f32.mrf.mxu0
        %v2509 = vadd.f32 0.0, %v2508
        %v2510 = vpop.f32.mrf.mxu0
        %v2511 = vadd.f32 0.0, %v2510
        %2512 = vdwg.mxu0
        %v2513 = vadd.f32 %v2372, %v2434
        %v2514 = vadd.f32 %v2373, %v2436
        %v2515 = vadd.f32 %v2374, %v2439
        %v2516 = vadd.f32 %v2375, %v2441
        %v2517 = vadd.f32 %v2376, %v2444
        %v2518 = vadd.f32 %v2377, %v2446
        %v2519 = vadd.f32 %v2378, %v2449
        %v2520 = vadd.f32 %v2379, %v2451
        %v2521 = vadd.f32 %v2380, %v2454
        %v2522 = vadd.f32 %v2381, %v2456
        %v2523 = vadd.f32 %v2382, %v2459
        %v2524 = vadd.f32 %v2383, %v2461
        %v2525 = vadd.f32 %v2384, %v2464
        %v2526 = vadd.f32 %v2385, %v2466
        %v2527 = vadd.f32 %v2386, %v2469
        %v2528 = vadd.f32 %v2387, %v2471
        %v2529 = vadd.f32 %v2388, %v2474
        %v2530 = vadd.f32 %v2389, %v2476
        %v2531 = vadd.f32 %v2390, %v2479
        %v2532 = vadd.f32 %v2391, %v2481
        %v2533 = vadd.f32 %v2392, %v2484
        %v2534 = vadd.f32 %v2393, %v2486
        %v2535 = vadd.f32 %v2394, %v2489
        %v2536 = vadd.f32 %v2395, %v2491
        %v2537 = vadd.f32 %v2396, %v2494
        %v2538 = vadd.f32 %v2397, %v2496
        %v2539 = vadd.f32 %v2398, %v2499
        %v2540 = vadd.f32 %v2399, %v2501
        %v2541 = vadd.f32 %v2400, %v2504
        %v2542 = vadd.f32 %v2401, %v2506
        %v2543 = vadd.f32 %v2402, %v2509
        %v2544 = vadd.f32 %v2403, %v2511
        %v2545 = vshrl.u32 %v1194, 16
        %v2547 = vshll.u32 %v1194, 16
        %v2549 = vrot.slane %v2547, 1
        %v2550 = vor.u32 %v2545, %v2549
        %v2552 = vshll.u32 %v1212, 16
        %v2554 = vrot.slane %v2552, 1
        %v2555 = vsel %vm1217, %v2550, %v2554
        %s2556 = scalar_lea.vmem [#allocation8], 112
        %v2557 = vld [vmem:[%s2556] sm:$0xf]
        %v2558 = vld [vmem:[%s2556 + $0x4] sm:$0xf]
        %v2559 = vld [vmem:[%s2556 + $0x8] sm:$0xf]
        %v2560 = vld [vmem:[%s2556 + $0xc] sm:$0xf]
        %v2565 = vunpack.c.l.b16 %v2557
        %v2566 = vunpack.c.l.b16 %v2558
        %v2567 = vunpack.c.l.b16 %v2559
        %v2568 = vunpack.c.l.b16 %v2560
        %v2569 = vpack.c.b16 %v2566, %v2565
        %v2570 = vpack.c.b16 %v2568, %v2567
        %v2574 = vsel %vm1427, %v2555, 0
        %2576 = vmatpush.bf16.msra.mxu0 0
        %2577 = vmatpush.bf16.msra.mxu0 0
        %2578 = vmatpush.bf16.msra.mxu0 0
        %2579 = vmatpush.bf16.msra.mxu0 0
        %2580 = vmatpush.bf16.msra.mxu0 0
        %2581 = vmatpush.bf16.msra.mxu0 0
        %2582 = vmatpush.bf16.msra.mxu0 %v2570
        %2583 = vmatpush.bf16.msra.mxu0 %v2569
        %2584 = vmatmul.bf16.gmra.mxu0 %v1435
        %v2585 = vpop.f32.mrf.mxu0
        %v2586 = vadd.f32 0.0, %v2585
        %v2587 = vpop.f32.mrf.mxu0
        %v2588 = vadd.f32 0.0, %v2587
        %2589 = vmatmul.bf16.gmra.mxu0 %v1438
        %v2590 = vpop.f32.mrf.mxu0
        %v2591 = vadd.f32 0.0, %v2590
        %v2592 = vpop.f32.mrf.mxu0
        %v2593 = vadd.f32 0.0, %v2592
        %2594 = vmatmul.bf16.gmra.mxu0 %v1441
        %v2595 = vpop.f32.mrf.mxu0
        %v2596 = vadd.f32 0.0, %v2595
        %v2597 = vpop.f32.mrf.mxu0
        %v2598 = vadd.f32 0.0, %v2597
        %2599 = vmatmul.bf16.gmra.mxu0 %v1444
        %v2600 = vpop.f32.mrf.mxu0
        %v2601 = vadd.f32 0.0, %v2600
        %v2602 = vpop.f32.mrf.mxu0
        %v2603 = vadd.f32 0.0, %v2602
        %2604 = vmatmul.bf16.gmra.mxu0 %v1447
        %v2605 = vpop.f32.mrf.mxu0
        %v2606 = vadd.f32 0.0, %v2605
        %v2607 = vpop.f32.mrf.mxu0
        %v2608 = vadd.f32 0.0, %v2607
        %2609 = vmatmul.bf16.gmra.mxu0 %v1450
        %v2610 = vpop.f32.mrf.mxu0
        %v2611 = vadd.f32 0.0, %v2610
        %v2612 = vpop.f32.mrf.mxu0
        %v2613 = vadd.f32 0.0, %v2612
        %2614 = vmatmul.bf16.gmra.mxu0 %v1453
        %v2615 = vpop.f32.mrf.mxu0
        %v2616 = vadd.f32 0.0, %v2615
        %v2617 = vpop.f32.mrf.mxu0
        %v2618 = vadd.f32 0.0, %v2617
        %2619 = vmatmul.bf16.gmra.mxu0 %v1456
        %v2620 = vpop.f32.mrf.mxu0
        %v2621 = vadd.f32 0.0, %v2620
        %v2622 = vpop.f32.mrf.mxu0
        %v2623 = vadd.f32 0.0, %v2622
        %2624 = vmatmul.bf16.gmra.mxu0 %v1459
        %v2625 = vpop.f32.mrf.mxu0
        %v2626 = vadd.f32 0.0, %v2625
        %v2627 = vpop.f32.mrf.mxu0
        %v2628 = vadd.f32 0.0, %v2627
        %2629 = vmatmul.bf16.gmra.mxu0 %v1462
        %v2630 = vpop.f32.mrf.mxu0
        %v2631 = vadd.f32 0.0, %v2630
        %v2632 = vpop.f32.mrf.mxu0
        %v2633 = vadd.f32 0.0, %v2632
        %2634 = vmatmul.bf16.gmra.mxu0 %v1465
        %v2635 = vpop.f32.mrf.mxu0
        %v2636 = vadd.f32 0.0, %v2635
        %v2637 = vpop.f32.mrf.mxu0
        %v2638 = vadd.f32 0.0, %v2637
        %2639 = vmatmul.bf16.gmra.mxu0 %v1468
        %v2640 = vpop.f32.mrf.mxu0
        %v2641 = vadd.f32 0.0, %v2640
        %v2642 = vpop.f32.mrf.mxu0
        %v2643 = vadd.f32 0.0, %v2642
        %2644 = vmatmul.bf16.gmra.mxu0 %v1471
        %v2645 = vpop.f32.mrf.mxu0
        %v2646 = vadd.f32 0.0, %v2645
        %v2647 = vpop.f32.mrf.mxu0
        %v2648 = vadd.f32 0.0, %v2647
        %2649 = vmatmul.bf16.gmra.mxu0 %v1474
        %v2650 = vpop.f32.mrf.mxu0
        %v2651 = vadd.f32 0.0, %v2650
        %v2652 = vpop.f32.mrf.mxu0
        %v2653 = vadd.f32 0.0, %v2652
        %2654 = vmatmul.bf16.gmra.mxu0 %v2135
        %v2655 = vpop.f32.mrf.mxu0
        %v2656 = vadd.f32 0.0, %v2655
        %v2657 = vpop.f32.mrf.mxu0
        %v2658 = vadd.f32 0.0, %v2657
        %2659 = vmatmul.bf16.gmra.mxu0 %v2574
        %v2660 = vpop.f32.mrf.mxu0
        %v2661 = vadd.f32 0.0, %v2660
        %v2662 = vpop.f32.mrf.mxu0
        %v2663 = vadd.f32 0.0, %v2662
        %2664 = vdwg.mxu0
        %v2665 = vadd.f32 %v2513, %v2586
        %v2666 = vadd.f32 %v2514, %v2588
        %v2667 = vadd.f32 %v2515, %v2591
        %v2668 = vadd.f32 %v2516, %v2593
        %v2669 = vadd.f32 %v2517, %v2596
        %v2670 = vadd.f32 %v2518, %v2598
        %v2671 = vadd.f32 %v2519, %v2601
        %v2672 = vadd.f32 %v2520, %v2603
        %v2673 = vadd.f32 %v2521, %v2606
        %v2674 = vadd.f32 %v2522, %v2608
        %v2675 = vadd.f32 %v2523, %v2611
        %v2676 = vadd.f32 %v2524, %v2613
        %v2677 = vadd.f32 %v2525, %v2616
        %v2678 = vadd.f32 %v2526, %v2618
        %v2679 = vadd.f32 %v2527, %v2621
        %v2680 = vadd.f32 %v2528, %v2623
        %v2681 = vadd.f32 %v2529, %v2626
        %v2682 = vadd.f32 %v2530, %v2628
        %v2683 = vadd.f32 %v2531, %v2631
        %v2684 = vadd.f32 %v2532, %v2633
        %v2685 = vadd.f32 %v2533, %v2636
        %v2686 = vadd.f32 %v2534, %v2638
        %v2687 = vadd.f32 %v2535, %v2641
        %v2688 = vadd.f32 %v2536, %v2643
        %v2689 = vadd.f32 %v2537, %v2646
        %v2690 = vadd.f32 %v2538, %v2648
        %v2691 = vadd.f32 %v2539, %v2651
        %v2692 = vadd.f32 %v2540, %v2653
        %v2693 = vadd.f32 %v2541, %v2656
        %v2694 = vadd.f32 %v2542, %v2658
        %v2695 = vadd.f32 %v2543, %v2661
        %v2696 = vadd.f32 %v2544, %v2663
        %v2699 = vrot.slane %v1194, 1
        %v2700 = vrot.slane %v1212, 1
        %v2701 = vsel %vm1730, %v2699, %v2700
        %s2702 = scalar_lea.vmem [#allocation8], 128
        %v2703 = vld [vmem:[%s2702] sm:$0xf]
        %v2704 = vld [vmem:[%s2702 + $0x4] sm:$0xf]
        %v2705 = vld [vmem:[%s2702 + $0x8] sm:$0xf]
        %v2706 = vld [vmem:[%s2702 + $0xc] sm:$0xf]
        %v2711 = vunpack.c.l.b16 %v2703
        %v2712 = vunpack.c.l.b16 %v2704
        %v2713 = vunpack.c.l.b16 %v2705
        %v2714 = vunpack.c.l.b16 %v2706
        %v2715 = vpack.c.b16 %v2712, %v2711
        %v2716 = vpack.c.b16 %v2714, %v2713
        %v2720 = vsel %vm1427, %v2701, 0
        %2722 = vmatpush.bf16.msra.mxu0 0
        %2723 = vmatpush.bf16.msra.mxu0 0
        %2724 = vmatpush.bf16.msra.mxu0 0
        %2725 = vmatpush.bf16.msra.mxu0 0
        %2726 = vmatpush.bf16.msra.mxu0 0
        %2727 = vmatpush.bf16.msra.mxu0 0
        %2728 = vmatpush.bf16.msra.mxu0 %v2716
        %2729 = vmatpush.bf16.msra.mxu0 %v2715
        %2730 = vmatmul.bf16.gmra.mxu0 %v1803
        %v2731 = vpop.f32.mrf.mxu0
        %v2732 = vadd.f32 0.0, %v2731
        %v2733 = vpop.f32.mrf.mxu0
        %v2734 = vadd.f32 0.0, %v2733
        %2735 = vmatmul.bf16.gmra.mxu0 %v1806
        %v2736 = vpop.f32.mrf.mxu0
        %v2737 = vadd.f32 0.0, %v2736
        %v2738 = vpop.f32.mrf.mxu0
        %v2739 = vadd.f32 0.0, %v2738
        %2740 = vmatmul.bf16.gmra.mxu0 %v1809
        %v2741 = vpop.f32.mrf.mxu0
        %v2742 = vadd.f32 0.0, %v2741
        %v2743 = vpop.f32.mrf.mxu0
        %v2744 = vadd.f32 0.0, %v2743
        %2745 = vmatmul.bf16.gmra.mxu0 %v1812
        %v2746 = vpop.f32.mrf.mxu0
        %v2747 = vadd.f32 0.0, %v2746
        %v2748 = vpop.f32.mrf.mxu0
        %v2749 = vadd.f32 0.0, %v2748
        %2750 = vmatmul.bf16.gmra.mxu0 %v1815
        %v2751 = vpop.f32.mrf.mxu0
        %v2752 = vadd.f32 0.0, %v2751
        %v2753 = vpop.f32.mrf.mxu0
        %v2754 = vadd.f32 0.0, %v2753
        %2755 = vmatmul.bf16.gmra.mxu0 %v1818
        %v2756 = vpop.f32.mrf.mxu0
        %v2757 = vadd.f32 0.0, %v2756
        %v2758 = vpop.f32.mrf.mxu0
        %v2759 = vadd.f32 0.0, %v2758
        %2760 = vmatmul.bf16.gmra.mxu0 %v1821
        %v2761 = vpop.f32.mrf.mxu0
        %v2762 = vadd.f32 0.0, %v2761
        %v2763 = vpop.f32.mrf.mxu0
        %v2764 = vadd.f32 0.0, %v2763
        %2765 = vmatmul.bf16.gmra.mxu0 %v1824
        %v2766 = vpop.f32.mrf.mxu0
        %v2767 = vadd.f32 0.0, %v2766
        %v2768 = vpop.f32.mrf.mxu0
        %v2769 = vadd.f32 0.0, %v2768
        %2770 = vmatmul.bf16.gmra.mxu0 %v1827
        %v2771 = vpop.f32.mrf.mxu0
        %v2772 = vadd.f32 0.0, %v2771
        %v2773 = vpop.f32.mrf.mxu0
        %v2774 = vadd.f32 0.0, %v2773
        %2775 = vmatmul.bf16.gmra.mxu0 %v1830
        %v2776 = vpop.f32.mrf.mxu0
        %v2777 = vadd.f32 0.0, %v2776
        %v2778 = vpop.f32.mrf.mxu0
        %v2779 = vadd.f32 0.0, %v2778
        %2780 = vmatmul.bf16.gmra.mxu0 %v1833
        %v2781 = vpop.f32.mrf.mxu0
        %v2782 = vadd.f32 0.0, %v2781
        %v2783 = vpop.f32.mrf.mxu0
        %v2784 = vadd.f32 0.0, %v2783
        %2785 = vmatmul.bf16.gmra.mxu0 %v1836
        %v2786 = vpop.f32.mrf.mxu0
        %v2787 = vadd.f32 0.0, %v2786
        %v2788 = vpop.f32.mrf.mxu0
        %v2789 = vadd.f32 0.0, %v2788
        %2790 = vmatmul.bf16.gmra.mxu0 %v1839
        %v2791 = vpop.f32.mrf.mxu0
        %v2792 = vadd.f32 0.0, %v2791
        %v2793 = vpop.f32.mrf.mxu0
        %v2794 = vadd.f32 0.0, %v2793
        %2795 = vmatmul.bf16.gmra.mxu0 %v1842
        %v2796 = vpop.f32.mrf.mxu0
        %v2797 = vadd.f32 0.0, %v2796
        %v2798 = vpop.f32.mrf.mxu0
        %v2799 = vadd.f32 0.0, %v2798
        %2800 = vmatmul.bf16.gmra.mxu0 %v2281
        %v2801 = vpop.f32.mrf.mxu0
        %v2802 = vadd.f32 0.0, %v2801
        %v2803 = vpop.f32.mrf.mxu0
        %v2804 = vadd.f32 0.0, %v2803
        %2805 = vmatmul.bf16.gmra.mxu0 %v2720
        %v2806 = vpop.f32.mrf.mxu0
        %v2807 = vadd.f32 0.0, %v2806
        %v2808 = vpop.f32.mrf.mxu0
        %v2809 = vadd.f32 0.0, %v2808
        %2810 = vdwg.mxu0
        %v2811 = vadd.f32 %v2665, %v2732
        %v2812 = vadd.f32 %v2666, %v2734
        %v2813 = vadd.f32 %v2667, %v2737
        %v2814 = vadd.f32 %v2668, %v2739
        %v2815 = vadd.f32 %v2669, %v2742
        %v2816 = vadd.f32 %v2670, %v2744
        %v2817 = vadd.f32 %v2671, %v2747
        %v2818 = vadd.f32 %v2672, %v2749
        %v2819 = vadd.f32 %v2673, %v2752
        %v2820 = vadd.f32 %v2674, %v2754
        %v2821 = vadd.f32 %v2675, %v2757
        %v2822 = vadd.f32 %v2676, %v2759
        %v2823 = vadd.f32 %v2677, %v2762
        %v2824 = vadd.f32 %v2678, %v2764
        %v2825 = vadd.f32 %v2679, %v2767
        %v2826 = vadd.f32 %v2680, %v2769
        %v2827 = vadd.f32 %v2681, %v2772
        %v2828 = vadd.f32 %v2682, %v2774
        %v2829 = vadd.f32 %v2683, %v2777
        %v2830 = vadd.f32 %v2684, %v2779
        %v2831 = vadd.f32 %v2685, %v2782
        %v2832 = vadd.f32 %v2686, %v2784
        %v2833 = vadd.f32 %v2687, %v2787
        %v2834 = vadd.f32 %v2688, %v2789
        %v2835 = vadd.f32 %v2689, %v2792
        %v2836 = vadd.f32 %v2690, %v2794
        %v2837 = vadd.f32 %v2691, %v2797
        %v2838 = vadd.f32 %v2692, %v2799
        %v2839 = vadd.f32 %v2693, %v2802
        %v2840 = vadd.f32 %v2694, %v2804
        %v2841 = vadd.f32 %v2695, %v2807
        %v2842 = vadd.f32 %v2696, %v2809
        %v2843 = vld [vmem:[%s4] sm:$0x1]
        %v2845 = vperm.slane %v2843, 0
        %v2847 = vadd.f32 %v2811, %v2845
        %v2848 = vadd.f32 %v2812, %v2845
        %v2849 = vadd.f32 %v2813, %v2845
        %v2850 = vadd.f32 %v2814, %v2845
        %v2851 = vadd.f32 %v2815, %v2845
        %v2852 = vadd.f32 %v2816, %v2845
        %v2853 = vadd.f32 %v2817, %v2845
        %v2854 = vadd.f32 %v2818, %v2845
        %v2855 = vadd.f32 %v2819, %v2845
        %v2856 = vadd.f32 %v2820, %v2845
        %v2857 = vadd.f32 %v2821, %v2845
        %v2858 = vadd.f32 %v2822, %v2845
        %v2859 = vadd.f32 %v2823, %v2845
        %v2860 = vadd.f32 %v2824, %v2845
        %v2861 = vadd.f32 %v2825, %v2845
        %v2862 = vadd.f32 %v2826, %v2845
        %v2863 = vadd.f32 %v2827, %v2845
        %v2864 = vadd.f32 %v2828, %v2845
        %v2865 = vadd.f32 %v2829, %v2845
        %v2866 = vadd.f32 %v2830, %v2845
        %v2867 = vadd.f32 %v2831, %v2845
        %v2868 = vadd.f32 %v2832, %v2845
        %v2869 = vadd.f32 %v2833, %v2845
        %v2870 = vadd.f32 %v2834, %v2845
        %v2871 = vadd.f32 %v2835, %v2845
        %v2872 = vadd.f32 %v2836, %v2845
        %v2873 = vadd.f32 %v2837, %v2845
        %v2874 = vadd.f32 %v2838, %v2845
        %v2875 = vadd.f32 %v2839, %v2845
        %v2876 = vadd.f32 %v2840, %v2845
        %v2877 = vadd.f32 %v2841, %v2845
        %v2878 = vadd.f32 %v2842, %v2845
        %v2879 = vmax.f32 %v2847, 0.0
        %v2880 = vmax.f32 %v2848, 0.0
        %v2881 = vmax.f32 %v2849, 0.0
        %v2882 = vmax.f32 %v2850, 0.0
        %v2883 = vmax.f32 %v2851, 0.0
        %v2884 = vmax.f32 %v2852, 0.0
        %v2885 = vmax.f32 %v2853, 0.0
        %v2886 = vmax.f32 %v2854, 0.0
        %v2887 = vmax.f32 %v2855, 0.0
        %v2888 = vmax.f32 %v2856, 0.0
        %v2889 = vmax.f32 %v2857, 0.0
        %v2890 = vmax.f32 %v2858, 0.0
        %v2891 = vmax.f32 %v2859, 0.0
        %v2892 = vmax.f32 %v2860, 0.0
        %v2893 = vmax.f32 %v2861, 0.0
        %v2894 = vmax.f32 %v2862, 0.0
        %v2895 = vmax.f32 %v2863, 0.0
        %v2896 = vmax.f32 %v2864, 0.0
        %v2897 = vmax.f32 %v2865, 0.0
        %v2898 = vmax.f32 %v2866, 0.0
        %v2899 = vmax.f32 %v2867, 0.0
        %v2900 = vmax.f32 %v2868, 0.0
        %v2901 = vmax.f32 %v2869, 0.0
        %v2902 = vmax.f32 %v2870, 0.0
        %v2903 = vmax.f32 %v2871, 0.0
        %v2904 = vmax.f32 %v2872, 0.0
        %v2905 = vmax.f32 %v2873, 0.0
        %v2906 = vmax.f32 %v2874, 0.0
        %v2907 = vmax.f32 %v2875, 0.0
        %v2908 = vmax.f32 %v2876, 0.0
        %v2909 = vmax.f32 %v2877, 0.0
        %v2910 = vmax.f32 %v2878, 0.0
        %v2911 = vpack.c.bf16 %v2880, %v2879
        %v2912 = vpack.c.bf16 %v2882, %v2881
        %v2913 = vpack.c.bf16 %v2884, %v2883
        %v2914 = vpack.c.bf16 %v2886, %v2885
        %v2915 = vpack.c.bf16 %v2888, %v2887
        %v2916 = vpack.c.bf16 %v2890, %v2889
        %v2917 = vpack.c.bf16 %v2892, %v2891
        %v2918 = vpack.c.bf16 %v2894, %v2893
        %v2919 = vpack.c.bf16 %v2896, %v2895
        %v2920 = vpack.c.bf16 %v2898, %v2897
        %v2921 = vpack.c.bf16 %v2900, %v2899
        %v2922 = vpack.c.bf16 %v2902, %v2901
        %v2923 = vpack.c.bf16 %v2904, %v2903
        %v2924 = vpack.c.bf16 %v2906, %v2905
        %v2925 = vpack.c.bf16 %v2908, %v2907
        %v2926 = vpack.c.bf16 %v2910, %v2909
        %v2927 = vld [vmem:[#allocation10] sm:$0xf]
        %v2928 = vld [vmem:[#allocation10 + $0x4] sm:$0xf]
        %v2929 = vld [vmem:[#allocation10 + $0x8] sm:$0xf]
        %v2930 = vld [vmem:[#allocation10 + $0xc] sm:$0xf]
        %v2931 = vld [vmem:[%s6] sm:$0x1]
        %v2933 = vperm.slane %v2931, 0
        %v2939 = vunpack.c.l.b16 %v2927
        %v2940 = vunpack.c.l.b16 %v2928
        %v2941 = vunpack.c.l.b16 %v2929
        %v2942 = vunpack.c.l.b16 %v2930
        %v2943 = vpack.c.b16 %v2940, %v2939
        %v2944 = vpack.c.b16 %v2942, %v2941
        %v2948 = vsel %vm1427, %v2911, 0
        %v2951 = vsel %vm1427, %v2912, 0
        %v2954 = vsel %vm1427, %v2913, 0
        %v2957 = vsel %vm1427, %v2914, 0
        %v2960 = vsel %vm1427, %v2915, 0
        %v2963 = vsel %vm1427, %v2916, 0
        %v2966 = vsel %vm1427, %v2917, 0
        %v2969 = vsel %vm1427, %v2918, 0
        %v2972 = vsel %vm1427, %v2919, 0
        %v2975 = vsel %vm1427, %v2920, 0
        %v2978 = vsel %vm1427, %v2921, 0
        %v2981 = vsel %vm1427, %v2922, 0
        %v2984 = vsel %vm1427, %v2923, 0
        %v2987 = vsel %vm1427, %v2924, 0
        %v2990 = vsel %vm1427, %v2925, 0
        %v2993 = vsel %vm1427, %v2926, 0
        %2995 = vmatpush.bf16.msra.mxu0 0
        %2996 = vmatpush.bf16.msra.mxu0 0
        %2997 = vmatpush.bf16.msra.mxu0 0
        %2998 = vmatpush.bf16.msra.mxu0 0
        %2999 = vmatpush.bf16.msra.mxu0 0
        %3000 = vmatpush.bf16.msra.mxu0 0
        %3001 = vmatpush.bf16.msra.mxu0 %v2944
        %3002 = vmatpush.bf16.msra.mxu0 %v2943
        %3003 = vmatmul.bf16.gmra.mxu0 %v2948
        %v3004 = vpop.f32.mrf.mxu0
        %v3005 = vadd.f32 %v2933, %v3004
        %v3006 = vpop.f32.mrf.mxu0
        %v3007 = vadd.f32 %v2933, %v3006
        %3008 = vmatmul.bf16.gmra.mxu0 %v2951
        %v3009 = vpop.f32.mrf.mxu0
        %v3010 = vadd.f32 %v2933, %v3009
        %v3011 = vpop.f32.mrf.mxu0
        %v3012 = vadd.f32 %v2933, %v3011
        %3013 = vmatmul.bf16.gmra.mxu0 %v2954
        %v3014 = vpop.f32.mrf.mxu0
        %v3015 = vadd.f32 %v2933, %v3014
        %v3016 = vpop.f32.mrf.mxu0
        %v3017 = vadd.f32 %v2933, %v3016
        %3018 = vmatmul.bf16.gmra.mxu0 %v2957
        %v3019 = vpop.f32.mrf.mxu0
        %v3020 = vadd.f32 %v2933, %v3019
        %v3021 = vpop.f32.mrf.mxu0
        %v3022 = vadd.f32 %v2933, %v3021
        %3023 = vmatmul.bf16.gmra.mxu0 %v2960
        %v3024 = vpop.f32.mrf.mxu0
        %v3025 = vadd.f32 %v2933, %v3024
        %v3026 = vpop.f32.mrf.mxu0
        %v3027 = vadd.f32 %v2933, %v3026
        %3028 = vmatmul.bf16.gmra.mxu0 %v2963
        %v3029 = vpop.f32.mrf.mxu0
        %v3030 = vadd.f32 %v2933, %v3029
        %v3031 = vpop.f32.mrf.mxu0
        %v3032 = vadd.f32 %v2933, %v3031
        %3033 = vmatmul.bf16.gmra.mxu0 %v2966
        %v3034 = vpop.f32.mrf.mxu0
        %v3035 = vadd.f32 %v2933, %v3034
        %v3036 = vpop.f32.mrf.mxu0
        %v3037 = vadd.f32 %v2933, %v3036
        %3038 = vmatmul.bf16.gmra.mxu0 %v2969
        %v3039 = vpop.f32.mrf.mxu0
        %v3040 = vadd.f32 %v2933, %v3039
        %v3041 = vpop.f32.mrf.mxu0
        %v3042 = vadd.f32 %v2933, %v3041
        %3043 = vmatmul.bf16.gmra.mxu0 %v2972
        %v3044 = vpop.f32.mrf.mxu0
        %v3045 = vadd.f32 %v2933, %v3044
        %v3046 = vpop.f32.mrf.mxu0
        %v3047 = vadd.f32 %v2933, %v3046
        %3048 = vmatmul.bf16.gmra.mxu0 %v2975
        %v3049 = vpop.f32.mrf.mxu0
        %v3050 = vadd.f32 %v2933, %v3049
        %v3051 = vpop.f32.mrf.mxu0
        %v3052 = vadd.f32 %v2933, %v3051
        %3053 = vmatmul.bf16.gmra.mxu0 %v2978
        %v3054 = vpop.f32.mrf.mxu0
        %v3055 = vadd.f32 %v2933, %v3054
        %v3056 = vpop.f32.mrf.mxu0
        %v3057 = vadd.f32 %v2933, %v3056
        %3058 = vmatmul.bf16.gmra.mxu0 %v2981
        %v3059 = vpop.f32.mrf.mxu0
        %v3060 = vadd.f32 %v2933, %v3059
        %v3061 = vpop.f32.mrf.mxu0
        %v3062 = vadd.f32 %v2933, %v3061
        %3063 = vmatmul.bf16.gmra.mxu0 %v2984
        %v3064 = vpop.f32.mrf.mxu0
        %v3065 = vadd.f32 %v2933, %v3064
        %v3066 = vpop.f32.mrf.mxu0
        %v3067 = vadd.f32 %v2933, %v3066
        %3068 = vmatmul.bf16.gmra.mxu0 %v2987
        %v3069 = vpop.f32.mrf.mxu0
        %v3070 = vadd.f32 %v2933, %v3069
        %v3071 = vpop.f32.mrf.mxu0
        %v3072 = vadd.f32 %v2933, %v3071
        %3073 = vmatmul.bf16.gmra.mxu0 %v2990
        %v3074 = vpop.f32.mrf.mxu0
        %v3075 = vadd.f32 %v2933, %v3074
        %v3076 = vpop.f32.mrf.mxu0
        %v3077 = vadd.f32 %v2933, %v3076
        %3078 = vmatmul.bf16.gmra.mxu0 %v2993
        %v3079 = vpop.f32.mrf.mxu0
        %v3080 = vadd.f32 %v2933, %v3079
        %v3081 = vpop.f32.mrf.mxu0
        %v3082 = vadd.f32 %v2933, %v3081
        %3083 = vdwg.mxu0
        %v3084 = vunpack.c.l.bf16 %v394
        %v3085 = vunpack.c.l.bf16 %v395
        %v3086 = vunpack.c.l.bf16 %v396
        %v3087 = vunpack.c.l.bf16 %v397
        %v3088 = vunpack.c.l.bf16 %v398
        %v3089 = vunpack.c.l.bf16 %v399
        %v3090 = vunpack.c.l.bf16 %v400
        %v3091 = vunpack.c.l.bf16 %v401
        %v3092 = vunpack.c.l.bf16 %v402
        %v3093 = vunpack.c.l.bf16 %v403
        %v3094 = vunpack.c.l.bf16 %v404
        %v3095 = vunpack.c.l.bf16 %v405
        %v3096 = vunpack.c.l.bf16 %v406
        %v3097 = vunpack.c.l.bf16 %v407
        %v3098 = vunpack.c.l.bf16 %v408
        %v3099 = vunpack.c.l.bf16 %v409
        %v3100 = vunpack.c.l.bf16 %v410
        %v3101 = vunpack.c.l.bf16 %v411
        %v3102 = vunpack.c.l.bf16 %v412
        %v3103 = vunpack.c.l.bf16 %v413
        %v3104 = vunpack.c.l.bf16 %v414
        %v3105 = vunpack.c.l.bf16 %v415
        %v3106 = vunpack.c.l.bf16 %v416
        %v3107 = vunpack.c.l.bf16 %v417
        %v3108 = vunpack.c.l.bf16 %v418
        %v3109 = vunpack.c.l.bf16 %v419
        %v3110 = vunpack.c.l.bf16 %v420
        %v3111 = vunpack.c.l.bf16 %v421
        %v3112 = vunpack.c.l.bf16 %v422
        %v3113 = vunpack.c.l.bf16 %v423
        %v3114 = vunpack.c.l.bf16 %v424
        %v3115 = vunpack.c.l.bf16 %v425
        %v3116 = vadd.f32 %v3005, %v3084
        %v3117 = vadd.f32 %v3007, %v3085
        %v3118 = vadd.f32 %v3010, %v3086
        %v3119 = vadd.f32 %v3012, %v3087
        %v3120 = vadd.f32 %v3015, %v3088
        %v3121 = vadd.f32 %v3017, %v3089
        %v3122 = vadd.f32 %v3020, %v3090
        %v3123 = vadd.f32 %v3022, %v3091
        %v3124 = vadd.f32 %v3025, %v3092
        %v3125 = vadd.f32 %v3027, %v3093
        %v3126 = vadd.f32 %v3030, %v3094
        %v3127 = vadd.f32 %v3032, %v3095
        %v3128 = vadd.f32 %v3035, %v3096
        %v3129 = vadd.f32 %v3037, %v3097
        %v3130 = vadd.f32 %v3040, %v3098
        %v3131 = vadd.f32 %v3042, %v3099
        %v3132 = vadd.f32 %v3045, %v3100
        %v3133 = vadd.f32 %v3047, %v3101
        %v3134 = vadd.f32 %v3050, %v3102
        %v3135 = vadd.f32 %v3052, %v3103
        %v3136 = vadd.f32 %v3055, %v3104
        %v3137 = vadd.f32 %v3057, %v3105
        %v3138 = vadd.f32 %v3060, %v3106
        %v3139 = vadd.f32 %v3062, %v3107
        %v3140 = vadd.f32 %v3065, %v3108
        %v3141 = vadd.f32 %v3067, %v3109
        %v3142 = vadd.f32 %v3070, %v3110
        %v3143 = vadd.f32 %v3072, %v3111
        %v3144 = vadd.f32 %v3075, %v3112
        %v3145 = vadd.f32 %v3077, %v3113
        %v3146 = vadd.f32 %v3080, %v3114
        %v3147 = vadd.f32 %v3082, %v3115
        %v3148 = vmax.f32 %v3116, 0.0
        %v3149 = vmax.f32 %v3117, 0.0
        %v3150 = vmax.f32 %v3118, 0.0
        %v3151 = vmax.f32 %v3119, 0.0
        %v3152 = vmax.f32 %v3120, 0.0
        %v3153 = vmax.f32 %v3121, 0.0
        %v3154 = vmax.f32 %v3122, 0.0
        %v3155 = vmax.f32 %v3123, 0.0
        %v3156 = vmax.f32 %v3124, 0.0
        %v3157 = vmax.f32 %v3125, 0.0
        %v3158 = vmax.f32 %v3126, 0.0
        %v3159 = vmax.f32 %v3127, 0.0
        %v3160 = vmax.f32 %v3128, 0.0
        %v3161 = vmax.f32 %v3129, 0.0
        %v3162 = vmax.f32 %v3130, 0.0
        %v3163 = vmax.f32 %v3131, 0.0
        %v3164 = vmax.f32 %v3132, 0.0
        %v3165 = vmax.f32 %v3133, 0.0
        %v3166 = vmax.f32 %v3134, 0.0
        %v3167 = vmax.f32 %v3135, 0.0
        %v3168 = vmax.f32 %v3136, 0.0
        %v3169 = vmax.f32 %v3137, 0.0
        %v3170 = vmax.f32 %v3138, 0.0
        %v3171 = vmax.f32 %v3139, 0.0
        %v3172 = vmax.f32 %v3140, 0.0
        %v3173 = vmax.f32 %v3141, 0.0
        %v3174 = vmax.f32 %v3142, 0.0
        %v3175 = vmax.f32 %v3143, 0.0
        %v3176 = vmax.f32 %v3144, 0.0
        %v3177 = vmax.f32 %v3145, 0.0
        %v3178 = vmax.f32 %v3146, 0.0
        %v3179 = vmax.f32 %v3147, 0.0
        %v3180 = vpack.c.bf16 %v3148, %v3148
        %v3181 = vpack.c.bf16 %v3149, %v3149
        %v3182 = vpack.c.bf16 %v3150, %v3150
        %v3183 = vpack.c.bf16 %v3151, %v3151
        %v3184 = vpack.c.bf16 %v3152, %v3152
        %v3185 = vpack.c.bf16 %v3153, %v3153
        %v3186 = vpack.c.bf16 %v3154, %v3154
        %v3187 = vpack.c.bf16 %v3155, %v3155
        %v3188 = vpack.c.bf16 %v3156, %v3156
        %v3189 = vpack.c.bf16 %v3157, %v3157
        %v3190 = vpack.c.bf16 %v3158, %v3158
        %v3191 = vpack.c.bf16 %v3159, %v3159
        %v3192 = vpack.c.bf16 %v3160, %v3160
        %v3193 = vpack.c.bf16 %v3161, %v3161
        %v3194 = vpack.c.bf16 %v3162, %v3162
        %v3195 = vpack.c.bf16 %v3163, %v3163
        %v3196 = vpack.c.bf16 %v3164, %v3164
        %v3197 = vpack.c.bf16 %v3165, %v3165
        %v3198 = vpack.c.bf16 %v3166, %v3166
        %v3199 = vpack.c.bf16 %v3167, %v3167
        %v3200 = vpack.c.bf16 %v3168, %v3168
        %v3201 = vpack.c.bf16 %v3169, %v3169
        %v3202 = vpack.c.bf16 %v3170, %v3170
        %v3203 = vpack.c.bf16 %v3171, %v3171
        %v3204 = vpack.c.bf16 %v3172, %v3172
        %v3205 = vpack.c.bf16 %v3173, %v3173
        %v3206 = vpack.c.bf16 %v3174, %v3174
        %v3207 = vpack.c.bf16 %v3175, %v3175
        %v3208 = vpack.c.bf16 %v3176, %v3176
        %v3209 = vpack.c.bf16 %v3177, %v3177
        %v3210 = vpack.c.bf16 %v3178, %v3178
        %v3211 = vpack.c.bf16 %v3179, %v3179
        %3212 = vst [vmem:[%s376] sm:$0xf] %v3180
        %3213 = vst [vmem:[%s376 + $0x4] sm:$0xf] %v3181
        %3214 = vst [vmem:[%s376 + $0x8] sm:$0xf] %v3182
        %3215 = vst [vmem:[%s376 + $0xc] sm:$0xf] %v3183
        %3216 = vst [vmem:[%s376 + $0x10] sm:$0xf] %v3184
        %3217 = vst [vmem:[%s376 + $0x14] sm:$0xf] %v3185
        %3218 = vst [vmem:[%s376 + $0x18] sm:$0xf] %v3186
        %3219 = vst [vmem:[%s376 + $0x1c] sm:$0xf] %v3187
        %3220 = vst [vmem:[%s376 + $0x20] sm:$0xf] %v3188
        %3221 = vst [vmem:[%s376 + $0x24] sm:$0xf] %v3189
        %3222 = vst [vmem:[%s376 + $0x28] sm:$0xf] %v3190
        %3223 = vst [vmem:[%s376 + $0x2c] sm:$0xf] %v3191
        %3224 = vst [vmem:[%s376 + $0x30] sm:$0xf] %v3192
        %3225 = vst [vmem:[%s376 + $0x34] sm:$0xf] %v3193
        %3226 = vst [vmem:[%s376 + $0x38] sm:$0xf] %v3194
        %3227 = vst [vmem:[%s376 + $0x3c] sm:$0xf] %v3195
        %3228 = vst [vmem:[%s376 + $0x40] sm:$0xf] %v3196
        %3229 = vst [vmem:[%s376 + $0x44] sm:$0xf] %v3197
        %3230 = vst [vmem:[%s376 + $0x48] sm:$0xf] %v3198
        %3231 = vst [vmem:[%s376 + $0x4c] sm:$0xf] %v3199
        %3232 = vst [vmem:[%s376 + $0x50] sm:$0xf] %v3200
        %3233 = vst [vmem:[%s376 + $0x54] sm:$0xf] %v3201
        %3234 = vst [vmem:[%s376 + $0x58] sm:$0xf] %v3202
        %3235 = vst [vmem:[%s376 + $0x5c] sm:$0xf] %v3203
        %3236 = vst [vmem:[%s376 + $0x60] sm:$0xf] %v3204
        %3237 = vst [vmem:[%s376 + $0x64] sm:$0xf] %v3205
        %3238 = vst [vmem:[%s376 + $0x68] sm:$0xf] %v3206
        %3239 = vst [vmem:[%s376 + $0x6c] sm:$0xf] %v3207
        %3240 = vst [vmem:[%s376 + $0x70] sm:$0xf] %v3208
        %3241 = vst [vmem:[%s376 + $0x74] sm:$0xf] %v3209
        %3242 = vst [vmem:[%s376 + $0x78] sm:$0xf] %v3210
        %3243 = vst [vmem:[%s376 + $0x7c] sm:$0xf] %v3211
        %s3244 = sand.u32 %s200, 1
        %s3245 = scalar_lea.sflag [#allocation4], %s3244
        %s3246 = sand.u32 %s200, 1
        %s3247 = smul.addr %s3246, 128
        %s3248 = scalar_lea.vmem [#allocation11], %s3247
        // Predicated region
        $region69: #{bottleneck_forward_nhwc.1} parent=47 // pred_check
          %p3249 = pneg %p210
        $region70: #{bottleneck_forward_nhwc.1} parent=47 // pred_check_branch
          %3251 = sbr.rel (%p3249) target = $region72
        $region71: #{bottleneck_forward_nhwc.1} parent=47 // pred_region
          %s3252 = smul.u32 16, %s31
          %3254 = vsyncadd %s3245, 0
          %s3255 = smul.addr %s3252, 2
          %s3256 = smul.addr %s30, 32
          %s3257 = sadd.s32 %s3255, %s3256
          %s3258 = smul.addr %s3257, 4
          %s3259 = scalar_lea.hbm %s7, %s3258
          %s3260 = sshll.u32 %s3248, 4
          %s3261 = int_to_ptr.vmem [resolvable:$true] %s3260
          %s3262 = sshll.u32 %s3259, 4
          %s3263 = int_to_ptr.hbm [resolvable:$true] %s3262
          %3268 = dma.vmem_to_hbm [thread:$0]  %s3261, 2048, %s3263, %s3245, 64, 64, 4
        $region72: #{bottleneck_forward_nhwc.1} parent=47 // pred_fallthru
          _
      $region48: #{bottleneck_forward_nhwc.1} parent=5 // pred_fallthru
        _
      %p3269 = scmp.le.s32.totalorder 2, %s21
      // Predicated region
      $region73: #{bottleneck_forward_nhwc.1} parent=5 // pred_check
        %p3270 = pneg %p3269
      $region74: #{bottleneck_forward_nhwc.1} parent=5 // pred_check_branch
        %3272 = sbr.rel (%p3270) target = $region76
      $region75: #{bottleneck_forward_nhwc.1} parent=5 // pred_region
        %s3273 = ssub.s32 %s21, 2
        // Predicated region
        $region77: #{bottleneck_forward_nhwc.1} parent=75 // pred_check
          %p3274 = pneg %p216
        $region78: #{bottleneck_forward_nhwc.1} parent=75 // pred_check_branch
          %3276 = sbr.rel (%p3274) target = $region80
        $region79: #{bottleneck_forward_nhwc.1} parent=75 // pred_region
          %s3277 = sand.u32 %s201, 1
          %s3278 = scalar_lea.sflag [#allocation4], %s3277
          %s3279 = sand.u32 %s201, 1
          %s3280 = smul.addr %s3279, 128
          %s3281 = scalar_lea.vmem [#allocation11], %s3280
          %3283 = dma.done %s3278, 2048
        $region80: #{bottleneck_forward_nhwc.1} parent=75 // pred_fallthru
          _
      $region76: #{bottleneck_forward_nhwc.1} parent=5 // pred_fallthru
        _
    $region6: #{bottleneck_forward_nhwc.1} parent=1 // loop_footer
      %s25 = sadd.s32 1, %s21
    $region7: #{bottleneck_forward_nhwc.1} parent=1 // loop_footer_branch
      %20 = sbr.rel target = $region3
    $region8: #{bottleneck_forward_nhwc.1} parent=1 // loop_exit
      _
    %3284 = vsyncpa [#allocation3], 1
    %s3285 = scalar_lea.sflag [#allocation3], 1
    %3286 = vsyncpa %s3285, 1
    %3287 = vsyncpa [#allocation6], 1
    %3288 = vsyncpa [#allocation9], 1
    %3289 = vsyncpa [#allocation4], 1
    %s3290 = scalar_lea.sflag [#allocation4], 1
    %3291 = vsyncpa %s3290, 1

</llo_original>
